<compile_context>
chip_gen: v6e
topology: v6e:2x2x1
jax: 0.10.0
libtpu: 0.0.40
codegen_flags: <defaults>
</compile_context>

<pallas_src>
import functools

import jax
import jax.numpy as jnp
from jax.experimental import pallas as pl
from jax.experimental.pallas import tpu as pltpu

LN_EPS = 1e-12            # custom LayerNorm in the module uses eps=1e-12
NEG_INF = -1e30           # additive key-padding / vocab-padding bias
_VMEM_LIMIT = 48 * 1024 * 1024   # > 32MiB default scoped, < v7x 64MiB physical
_SQRT_2_OVER_PI = 0.7978845608028654


# --------------------------- small helpers -----------------------------------

def _round_up(x, m):
    return ((x + m - 1) // m) * m


def _pick_tile_m(m):
    # 256-row tiles (multiple of 128, good for v5e/v6e/v7x), capped at problem size.
    return min(256, _round_up(m, 8))


def _pick_tile_v(vp):
    for t in (512, 256, 128):
        if vp % t == 0:
            return t
    return vp


def _pad_rows(x, m_pad):
    m = x.shape[0]
    if m == m_pad:
        return x
    return jnp.pad(x, ((0, m_pad - m), (0, 0)))


def _cparams(*sem):
    return pltpu.CompilerParams(dimension_semantics=sem,
                                vmem_limit_bytes=_VMEM_LIMIT)


def _gelu(x):
    # TODO(synk): exact erf-based BERT GELU is not guaranteed to lower inside Mosaic
    # kernels; the standard tanh approximation (|err| ~< 1e-3) is used in-kernel.
    return 0.5 * x * (1.0 + jnp.tanh(_SQRT_2_OVER_PI * (x + 0.044715 * x * x * x)))


def _layernorm(y, g, b):
    u = jnp.mean(y, axis=-1, keepdims=True)
    var = jnp.mean((y - u) ** 2, axis=-1, keepdims=True)
    return g * ((y - u) * jax.lax.rsqrt(var + LN_EPS)) + b


def _mm(a_f32, w_bf16):
    return jax.lax.dot_general(a_f32.astype(jnp.bfloat16), w_bf16,
                               (((1,), (0,)), ((), ())),
                               preferred_element_type=jnp.float32)


# --------------------------- generic linear kernel (heads) --------------------

def _linear_kernel(*refs, act, ln, has_res):
    # y = act(x @ w + b) [+ residual] ; optionally LayerNorm(y)
    x_ref, w_ref, b_ref = refs[0], refs[1], refs[2]
    i = 3
    if has_res:
        res_ref = refs[i]; i += 1
    if ln:
        g_ref, beta_ref = refs[i], refs[i + 1]; i += 2
    o_ref = refs[i]

    y = _mm(x_ref[...], w_ref[...]) + b_ref[...]
    if act == "gelu":
        y = _gelu(y)
    elif act == "tanh":
        y = jnp.tanh(y)
    if has_res:
        y = y + res_ref[...]
    if ln:
        y = _layernorm(y, g_ref[...], beta_ref[...])
    o_ref[...] = y.astype(o_ref.dtype)


def _pallas_linear_impl(x, w_t, b2, *, act="none", residual=None, ln_params=None):
    """x: (M, K) f32, w_t: (K, N) bf16 (pre-transposed), b2: (1, N) f32."""
    M, K = x.shape
    N = w_t.shape[1]
    tile_m = _pick_tile_m(M)
    m_pad = _round_up(M, tile_m)

    args = [_pad_rows(x, m_pad), w_t, b2]
    in_specs = [pl.BlockSpec((tile_m, K), lambda i: (i, 0)),
                pl.BlockSpec((K, N), lambda i: (0, 0)),
                pl.BlockSpec((1, N), lambda i: (0, 0))]
    has_res = residual is not None
    if has_res:
        args.append(_pad_rows(residual, m_pad))
        in_specs.append(pl.BlockSpec((tile_m, N), lambda i: (i, 0)))
    ln = ln_params is not None
    if ln:
        g2, bb2 = ln_params
        args += [g2, bb2]
        in_specs += [pl.BlockSpec((1, N), lambda i: (0, 0)),
                     pl.BlockSpec((1, N), lambda i: (0, 0))]

    out = pl.pallas_call(
        functools.partial(_linear_kernel, act=act, ln=ln, has_res=has_res),
        out_shape=jax.ShapeDtypeStruct((m_pad, N), jnp.float32),
        grid=(m_pad // tile_m,),
        in_specs=in_specs,
        out_specs=pl.BlockSpec((tile_m, N), lambda i: (i, 0)),
        compiler_params=_cparams("parallel"),
    )(*args)
    return out if m_pad == M else out[:M]


def pallas_linear(x, w_t, b2, act="none"):
    return _pallas_linear_impl(x, w_t, b2, act=act)


def pallas_linear_ln(x, w_t, b2, gamma2, beta2, act="none", residual=None):
    """LayerNorm( [residual +] act(x @ w + b) )."""
    return _pallas_linear_impl(x, w_t, b2, act=act, residual=residual,
                               ln_params=(gamma2, beta2))


# --------------------------- embedding LayerNorm ------------------------------

def _embed_ln_kernel(a_ref, b_ref, c_ref, g_ref, beta_ref, o_ref):
    x = a_ref[...] + b_ref[...] + c_ref[...]
    o_ref[...] = _layernorm(x, g_ref[...], beta_ref[...]).astype(o_ref.dtype)


def pallas_embed_layernorm(a, b, c, gamma2, beta2):
    """LayerNorm(a + b + c) over the last axis; a/b/c: (M, D) f32."""
    M, D = a.shape
    tile_m = _pick_tile_m(M)
    m_pad = _round_up(M, tile_m)
    out = pl.pallas_call(
        _embed_ln_kernel,
        out_shape=jax.ShapeDtypeStruct((m_pad, D), jnp.float32),
        grid=(m_pad // tile_m,),
        in_specs=[pl.BlockSpec((tile_m, D), lambda i: (i, 0))] * 3
                 + [pl.BlockSpec((1, D), lambda i: (0, 0))] * 2,
        out_specs=pl.BlockSpec((tile_m, D), lambda i: (i, 0)),
        compiler_params=_cparams("parallel"),
    )(_pad_rows(a, m_pad), _pad_rows(b, m_pad), _pad_rows(c, m_pad), gamma2, beta2)
    return out if m_pad == M else out[:M]


# --------------------------- fused attention sub-block ------------------------

def _attn_block_kernel(x_ref, w_in_ref, b_in_ref, w_out_ref, b_out_ref,
                       g_ref, beta_ref, bias_ref, o_ref,
                       *, num_heads, head_dim, scaling):
    # One batch element per grid step; in_proj + all-heads MHA + out_proj +
    # residual + LayerNorm, entirely in VMEM (no qkv/ctx HBM round-trip).
    x = x_ref[0]                                   # (S, D)  f32 residual
    bias = bias_ref[0]                             # (1, S)  additive key-padding bias
    qkv = _mm(x, w_in_ref[...]) + b_in_ref[...]    # (S, 3D) f32
    D = num_heads * head_dim
    ctxs = []
    for h in range(num_heads):                     # static unroll over heads
        lo = h * head_dim
        q = (qkv[:, lo:lo + head_dim] * scaling).astype(jnp.bfloat16)
        k = qkv[:, D + lo:D + lo + head_dim].astype(jnp.bfloat16)
        v = qkv[:, 2 * D + lo:2 * D + lo + head_dim].astype(jnp.bfloat16)
        s = jax.lax.dot_general(q, k, (((1,), (1,)), ((), ())),
                                preferred_element_type=jnp.float32) + bias
        m = jnp.max(s, axis=-1, keepdims=True)
        p = jnp.exp(s - m)
        p = p * pl.reciprocal(jnp.sum(p, axis=-1, keepdims=True), approx=True)
        ctxs.append(jax.lax.dot_general(p.astype(jnp.bfloat16), v,
                                        (((1,), (0,)), ((), ())),
                                        preferred_element_type=jnp.float32))
    ctx = jnp.concatenate(ctxs, axis=-1)           # (S, D)
    y = _mm(ctx, w_out_ref[...]) + b_out_ref[...]
    y = y + x                                      # residual
    o_ref[0] = _layernorm(y, g_ref[...], beta_ref[...]).astype(o_ref.dtype)


def pallas_attention_block(x3, w_in, b_in, w_out, b_out, ln_g, ln_b,
                           key_pad_bias, num_heads):
    """x3: (B, S, D) f32; key_pad_bias: (B, 1, S) f32 -> (B, S, D) f32."""
    B, S, D = x3.shape
    Hd = D // num_heads
    return pl.pallas_call(
        functools.partial(_attn_block_kernel, num_heads=num_heads, head_dim=Hd,
                          scaling=float(Hd) ** -0.5),
        out_shape=jax.ShapeDtypeStruct((B, S, D), jnp.float32),
        grid=(B,),
        in_specs=[pl.BlockSpec((1, S, D), lambda b: (b, 0, 0)),
                  pl.BlockSpec((D, 3 * D), lambda b: (0, 0)),
                  pl.BlockSpec((1, 3 * D), lambda b: (0, 0)),
                  pl.BlockSpec((D, D), lambda b: (0, 0)),
                  pl.BlockSpec((1, D), lambda b: (0, 0)),
                  pl.BlockSpec((1, D), lambda b: (0, 0)),
                  pl.BlockSpec((1, D), lambda b: (0, 0)),
                  pl.BlockSpec((1, 1, S), lambda b: (b, 0, 0))],
        out_specs=pl.BlockSpec((1, S, D), lambda b: (b, 0, 0)),
        compiler_params=_cparams("parallel"),
    )(x3, w_in, b_in, w_out, b_out, ln_g, ln_b, key_pad_bias)


# --------------------------- fused FFN sub-block -------------------------------

def _ffn_kernel(x_ref, w1_ref, b1_ref, w2_ref, b2_ref, g_ref, beta_ref, o_ref):
    # fc1 -> GELU -> fc2 -> +residual -> LayerNorm; (M, FF) never leaves VMEM.
    x = x_ref[...]
    h = _gelu(_mm(x, w1_ref[...]) + b1_ref[...])
    y = _mm(h, w2_ref[...]) + b2_ref[...] + x
    o_ref[...] = _layernorm(y, g_ref[...], beta_ref[...]).astype(o_ref.dtype)


def pallas_ffn_block(x, w1, b1, w2, b2, g2, beta2):
    """x: (M, D) f32; w1: (D, FF) bf16; w2: (FF, D) bf16."""
    M, D = x.shape
    FF = w1.shape[1]
    tile_m = _pick_tile_m(M)
    m_pad = _round_up(M, tile_m)
    out = pl.pallas_call(
        _ffn_kernel,
        out_shape=jax.ShapeDtypeStruct((m_pad, D), jnp.float32),
        grid=(m_pad // tile_m,),
        in_specs=[pl.BlockSpec((tile_m, D), lambda i: (i, 0)),
                  pl.BlockSpec((D, FF), lambda i: (0, 0)),
                  pl.BlockSpec((1, FF), lambda i: (0, 0)),
                  pl.BlockSpec((FF, D), lambda i: (0, 0)),
                  pl.BlockSpec((1, D), lambda i: (0, 0)),
                  pl.BlockSpec((1, D), lambda i: (0, 0)),
                  pl.BlockSpec((1, D), lambda i: (0, 0))],
        out_specs=pl.BlockSpec((tile_m, D), lambda i: (i, 0)),
        compiler_params=_cparams("parallel"),
    )(_pad_rows(x, m_pad), w1, b1, w2, b2, g2, beta2)
    return out if m_pad == M else out[:M]


# --------------------------- tied-embedding LM head ----------------------------

def _lm_head_kernel(y_ref, w_ref, b_ref, gold_ref, pred_ref, goldlp_ref,
                    m_scr, s_scr, bi_scr, g_scr, *, tile_v):
    # Vocab-tiled tied-embedding head with online logsumexp + fused argmax and
    # gold-logit gather.  The full (M, V) log-prob tensor is never materialized.
    j = pl.program_id(1)

    @pl.when(j == 0)
    def _():
        m_scr[...] = jnp.full(m_scr.shape, -jnp.inf, jnp.float32)
        s_scr[...] = jnp.zeros(s_scr.shape, jnp.float32)
        bi_scr[...] = jnp.zeros(bi_scr.shape, jnp.float32)
        g_scr[...] = jnp.zeros(g_scr.shape, jnp.float32)

    logits = _mm(y_ref[...], w_ref[...]) + b_ref[...]

    col = jax.lax.broadcasted_iota(jnp.int32, logits.shape, 1) + j * tile_v
    colf = col.astype(jnp.float32)

    # gold-token logit (exactly one matching column across all vocab tiles)
    hit = col == gold_ref[...]
    g_scr[...] += jnp.sum(jnp.where(hit, logits, 0.0), axis=-1, keepdims=True)

    # tile max & first-argmax, merged with the running state
    row_max = jnp.max(logits, axis=-1, keepdims=True)
    idx_tile = jnp.min(jnp.where(logits >= row_max, colf, 1e9),
                       axis=-1, keepdims=True)
    m_old = m_scr[...]
    bi_scr[...] = jnp.where(row_max > m_old, idx_tile, bi_scr[...])
    m_new = jnp.maximum(m_old, row_max)
    s_scr[...] = (s_scr[...] * jnp.exp(m_old - m_new)
                  + jnp.sum(jnp.exp(logits - m_new), axis=-1, keepdims=True))
    m_scr[...] = m_new

    @pl.when(j == pl.num_programs(1) - 1)
    def _():
        lse = jnp.log(s_scr[...]) + m_scr[...]
        pred_ref[...] = bi_scr[...].astype(jnp.int32)
        goldlp_ref[...] = g_scr[...] - lse


def pallas_lm_head(y, w_t, b2, gold):
    """y: (M, D) f32, w_t: (D, Vp) bf16, b2: (1, Vp) f32, gold: (M,) int32.
    Returns pred (M,) int32 and gold log-prob (M,) f32."""
    M, D = y.shape
    Vp = w_t.shape[1]
    tile_m = _pick_tile_m(M)
    m_pad = _round_up(M, tile_m)
    tile_v = _pick_tile_v(Vp)

    yp = _pad_rows(y, m_pad)
    goldp = _pad_rows(gold.reshape(M, 1), m_pad)

    pred, gold_lp = pl.pallas_call(
        functools.partial(_lm_head_kernel, tile_v=tile_v),
        out_shape=(jax.ShapeDtypeStruct((m_pad, 1), jnp.int32),
                   jax.ShapeDtypeStruct((m_pad, 1), jnp.float32)),
        grid=(m_pad // tile_m, Vp // tile_v),
        in_specs=[
            pl.BlockSpec((tile_m, D), lambda i, j: (i, 0)),
            pl.BlockSpec((D, tile_v), lambda i, j: (0, j)),
            pl.BlockSpec((1, tile_v), lambda i, j: (0, j)),
            pl.BlockSpec((tile_m, 1), lambda i, j: (i, 0)),
        ],
        out_specs=(pl.BlockSpec((tile_m, 1), lambda i, j: (i, 0)),
                   pl.BlockSpec((tile_m, 1), lambda i, j: (i, 0))),
        scratch_shapes=[pltpu.VMEM((tile_m, 1), jnp.float32),   # running max
                        pltpu.VMEM((tile_m, 1), jnp.float32),   # running sum
                        pltpu.VMEM((tile_m, 1), jnp.float32),   # best index
                        pltpu.VMEM((tile_m, 1), jnp.float32)],  # gold logit
        compiler_params=_cparams("parallel", "arbitrary"),
    )(yp, w_t, b2, goldp)
    return pred[:M, 0], gold_lp[:M, 0]


# --------------------------- model glue --------------------------------------

def prepare_params(params):
    """One-time host-side prep: transpose weights to (K, N) bf16, reshape biases /
    LN params to (1, N) f32, pad + transpose the tied LM-head weight."""
    V, D = params["tok_embed"].shape
    Vp = _round_up(V, 128)

    def lin(w, b):   # torch (out, in) -> (in, out) bf16, (1, out) f32
        return w.T.astype(jnp.bfloat16), b.reshape(1, -1).astype(jnp.float32)

    dp = {
        "tok_embed": params["tok_embed"],
        "seg_embed": params["seg_embed"],
        "pos_embed": params["pos_embed"],
        "emb_ln_g": params["emb_ln_g"].reshape(1, -1),
        "emb_ln_b": params["emb_ln_b"].reshape(1, -1),
        "one_more_ln_g": params["one_more_ln_g"].reshape(1, -1),
        "one_more_ln_b": params["one_more_ln_b"].reshape(1, -1),
    }
    dp["one_more_wt"], dp["one_more_b"] = lin(params["one_more_w"], params["one_more_b"])
    dp["one_more_nxt_wt"], dp["one_more_nxt_b"] = lin(params["one_more_nxt_w"],
                                                      params["one_more_nxt_b"])
    dp["nxt_wt"], dp["nxt_b"] = lin(params["nxt_w"], params["nxt_b"])

    # tied LM head: pad vocab to a lane multiple; padded columns get -1e30 bias
    w_pad = jnp.pad(params["tok_embed"], ((0, Vp - V), (0, 0)))
    dp["lm_wt"] = w_pad.T.astype(jnp.bfloat16)                          # (D, Vp)
    dp["lm_b"] = jnp.pad(params["out_proj_bias"], (0, Vp - V),
                         constant_values=NEG_INF).reshape(1, Vp).astype(jnp.float32)

    dp["layers"] = []
    for lp in params["layers"]:
        d = {}
        d["in_proj_wt"], d["in_proj_b"] = lin(lp["in_proj_w"], lp["in_proj_b"])
        d["out_proj_wt"], d["out_proj_b"] = lin(lp["out_proj_w"], lp["out_proj_b"])
        d["fc1_wt"], d["fc1_b"] = lin(lp["fc1_w"], lp["fc1_b"])
        d["fc2_wt"], d["fc2_b"] = lin(lp["fc2_w"], lp["fc2_b"])
        for k in ("attn_ln_g", "attn_ln_b", "ff_ln_g", "ff_ln_b"):
            d[k] = lp[k].reshape(1, -1)
        dp["layers"].append(d)
    return dp


def transformer_layer(x, lp, key_pad_bias, B, S, num_heads):
    """Post-norm transformer layer identical to the torch TransformerLayer (eval).
    Two fused Pallas kernels: attention sub-block + FFN sub-block."""
    M, D = x.shape
    x1 = pallas_attention_block(x.reshape(B, S, D),
                                lp["in_proj_wt"], lp["in_proj_b"],
                                lp["out_proj_wt"], lp["out_proj_b"],
                                lp["attn_ln_g"], lp["attn_ln_b"],
                                key_pad_bias, num_heads).reshape(M, D)
    x2 = pallas_ffn_block(x1, lp["fc1_wt"], lp["fc1_b"],
                          lp["fc2_wt"], lp["fc2_b"],
                          lp["ff_ln_g"], lp["ff_ln_b"])
    return x2


def bertlm_forward(dp, truth, seg, msk, nxt_snt_flag, *, num_heads, padding_id):
    """Mirrors BERTLM.forward (eval mode)."""
    S, B = truth.shape
    D = dp["tok_embed"].shape[1]
    M = B * S

    # batch-major token ordering (row = b*S + s): lane-dense and transpose-free
    truth_bs = truth.T
    seg_bs = seg.T
    msk_bs = msk.T

    # x = seg_embed(seg) + tok_embed(inp) + pos_embed(inp); gathers stay in XLA
    tok_e = jnp.take(dp["tok_embed"], truth_bs, axis=0)                  # (B, S, D)
    seg_e = jnp.take(dp["seg_embed"], seg_bs, axis=0)
    pos_e = jnp.broadcast_to(dp["pos_embed"][:S][None], (B, S, D))

    x = pallas_embed_layernorm(seg_e.reshape(M, D), tok_e.reshape(M, D),
                               pos_e.reshape(M, D), dp["emb_ln_g"], dp["emb_ln_b"])
    # dropout: identity in eval mode

    key_pad_bias = jnp.where((truth_bs == padding_id)[:, None, :],
                             NEG_INF, 0.0).astype(jnp.float32)           # (B, 1, S)

    for lp in dp["layers"]:
        x = transformer_layer(x, lp, key_pad_bias, B, S, num_heads)

    # masked LM head (masked_select -> mask-weighted reductions, same scalars)
    mask_f = msk_bs.reshape(M).astype(jnp.float32)
    gold = truth_bs.reshape(M).astype(jnp.int32)
    y = pallas_linear_ln(x, dp["one_more_wt"], dp["one_more_b"],
                         dp["one_more_ln_g"], dp["one_more_ln_b"], act="gelu")
    pred, gold_lp = pallas_lm_head(y, dp["lm_wt"], dp["lm_b"], gold)
    tot_tokens = jnp.sum(mask_f)
    loss = jnp.sum(mask_f * (-gold_lp)) / tot_tokens
    acc = jnp.sum(mask_f * (pred == gold).astype(jnp.float32))

    # next-sentence head on the s == 0 token of each batch element
    x0 = x.reshape(B, S, D)[:, 0, :]
    z = pallas_linear(x0, dp["one_more_nxt_wt"], dp["one_more_nxt_b"], act="tanh")
    nxt_logit = pallas_linear(z, dp["nxt_wt"], dp["nxt_b"])[:, 0]        # (B,)
    t = nxt_snt_flag.astype(jnp.float32)
    # BCE(sigmoid(logit), t) written with log-sigmoid for numerical stability
    nxt_snt_loss = jnp.mean(-(t * jax.nn.log_sigmoid(nxt_logit)
                              + (1.0 - t) * jax.nn.log_sigmoid(-nxt_logit)))
    p_nxt = jax.nn.sigmoid(nxt_logit)
    nxt_snt_acc = jnp.sum(((p_nxt > 0.5) == nxt_snt_flag).astype(jnp.float32))

    tot_loss = loss + nxt_snt_loss
    return (pred, gold, mask_f), tot_loss, acc, tot_tokens, nxt_snt_acc, B


# --------------------------- main ---------------------------------------------

if __name__ == "__main__":
    S, B, D, FF, H, L, V = 8, 2, 32, 64, 4, 2, 50
    PAD = 0

    key = jax.random.PRNGKey(0)
    keys = iter(jax.random.split(key, 64))

    def nrm(shape, std=0.02):
        return std * jax.random.normal(next(keys), shape, dtype=jnp.float32)

    params = {
        "tok_embed": nrm((V, D)).at[PAD].set(0.0),     # padding row zeroed
        "seg_embed": nrm((2, D)),
        "pos_embed": nrm((64, D)),
        "out_proj_bias": jnp.zeros((V,), jnp.float32),
        "emb_ln_g": jnp.ones((D,), jnp.float32),
        "emb_ln_b": jnp.zeros((D,), jnp.float32),
        "one_more_w": nrm((D, D)),
        "one_more_b": jnp.zeros((D,), jnp.float32),
        "one_more_ln_g": jnp.ones((D,), jnp.float32),
        "one_more_ln_b": jnp.zeros((D,), jnp.float32),
        "one_more_nxt_w": nrm((D, D)),
        "one_more_nxt_b": jnp.zeros((D,), jnp.float32),
        "nxt_w": nrm((1, D)),
        "nxt_b": jnp.zeros((1,), jnp.float32),
        "layers": [],
    }
    for _ in range(L):
        params["layers"].append({
            "in_proj_w": nrm((3 * D, D)),
            "in_proj_b": jnp.zeros((3 * D,), jnp.float32),
            "out_proj_w": nrm((D, D)),
            "out_proj_b": jnp.zeros((D,), jnp.float32),
            "fc1_w": nrm((FF, D)),
            "fc1_b": jnp.zeros((FF,), jnp.float32),
            "fc2_w": nrm((D, FF)),
            "fc2_b": jnp.zeros((D,), jnp.float32),
            "attn_ln_g": jnp.ones((D,), jnp.float32),
            "attn_ln_b": jnp.zeros((D,), jnp.float32),
            "ff_ln_g": jnp.ones((D,), jnp.float32),
            "ff_ln_b": jnp.zeros((D,), jnp.float32),
        })

    # inputs: (seq_len, batch) token ids with padding at sequence tails
    truth = jax.random.randint(next(keys), (S, B), 1, V, dtype=jnp.int32)
    truth = truth.at[S - 2:, 0].set(PAD)
    truth = truth.at[S - 1:, 1].set(PAD)
    seg = jnp.zeros((S, B), jnp.int32).at[S // 2:, :].set(1)
    msk = jax.random.uniform(next(keys), (S, B)) < 0.5
    msk = msk.at[0, :].set(True)
    msk = msk & (truth != PAD)                      # MLM mask (fine_tune in the module)
    nxt_snt_flag = jnp.array([True, False])         # gamma in the module

    dp = prepare_params(params)                     # one-time weight prep (bf16, (K,N))
    fwd = jax.jit(functools.partial(bertlm_forward, num_heads=H, padding_id=PAD))
    outs = fwd(dp, truth, seg, msk, nxt_snt_flag)
    (pred, gold, mask_f), tot_loss, acc, tot_tokens, nxt_acc, bsz = outs
    jax.block_until_ready(tot_loss)

    assert bool(jnp.isfinite(tot_loss)), "non-finite loss"
    print("KERNEL_OK")
</pallas_src>

<mosaic_0001>
module attributes {stable_mosaic.version = 11 : i64} {
  func.func @_linear_kernel(%arg0: i32, %arg1: memref<16x32xf32, #tpu.memory_space<vmem>>, %arg2: memref<32x32xbf16, #tpu.memory_space<vmem>>, %arg3: memref<1x32xf32, #tpu.memory_space<vmem>>, %arg4: memref<1x32xf32, #tpu.memory_space<vmem>>, %arg5: memref<1x32xf32, #tpu.memory_space<vmem>>, %arg6: memref<16x32xf32, #tpu.memory_space<vmem>>) attributes {dimension_semantics = [#tpu.dimension_semantics<parallel>], iteration_bounds = array<i64: 1>, scalar_prefetch = 0 : i64, scratch_operands = 0 : i64, tpu.core_type = #tpu.core_type<tc>, window_params = [{transform_indices = @transform_0, window_bounds = array<i64: 16, 32>}, {pipeline_mode = #tpu.pipeline_mode<synchronous>, transform_indices = @transform_1, window_bounds = array<i64: 32, 32>}, {pipeline_mode = #tpu.pipeline_mode<synchronous>, transform_indices = @transform_2, window_bounds = array<i64: 1, 32>}, {pipeline_mode = #tpu.pipeline_mode<synchronous>, transform_indices = @transform_3, window_bounds = array<i64: 1, 32>}, {pipeline_mode = #tpu.pipeline_mode<synchronous>, transform_indices = @transform_4, window_bounds = array<i64: 1, 32>}, {transform_indices = @transform_5, window_bounds = array<i64: 16, 32>}]} {
    %c0 = arith.constant 0 : index
    %c0_0 = arith.constant 0 : index
    %0 = vector.load %arg1[%c0, %c0_0] : memref<16x32xf32, #tpu.memory_space<vmem>>, vector<16x32xf32>
    %c0_1 = arith.constant 0 : index
    %c0_2 = arith.constant 0 : index
    %1 = vector.load %arg2[%c0_1, %c0_2] : memref<32x32xbf16, #tpu.memory_space<vmem>>, vector<32x32xbf16>
    %2 = arith.truncf %0 : vector<16x32xf32> to vector<16x32xbf16>
    %cst = arith.constant dense<0.000000e+00> : vector<16x32xf32>
    %3 = tpu.matmul %2, %1, %cst {dimension_numbers = #tpu.dot_dimension_numbers<[1], [0], [0], [1], [0, 0, 1, 1], [], []>} : vector<16x32xbf16>, vector<32x32xbf16>, vector<16x32xf32> -> vector<16x32xf32>
    %c0_3 = arith.constant 0 : index
    %c0_4 = arith.constant 0 : index
    %4 = vector.load %arg3[%c0_3, %c0_4] : memref<1x32xf32, #tpu.memory_space<vmem>>, vector<1x32xf32>
    %5 = vector.broadcast %4 : vector<1x32xf32> to vector<16x32xf32>
    %6 = arith.addf %3, %5 : vector<16x32xf32>
    %cst_5 = arith.constant 5.000000e-01 : f32
    %7 = vector.broadcast %cst_5 : f32 to vector<16x32xf32>
    %8 = arith.mulf %7, %6 : vector<16x32xf32>
    %cst_6 = arith.constant 4.471500e-02 : f32
    %9 = vector.broadcast %cst_6 : f32 to vector<16x32xf32>
    %10 = arith.mulf %9, %6 : vector<16x32xf32>
    %11 = arith.mulf %10, %6 : vector<16x32xf32>
    %12 = arith.mulf %11, %6 : vector<16x32xf32>
    %13 = arith.addf %6, %12 : vector<16x32xf32>
    %cst_7 = arith.constant 0.797884583 : f32
    %14 = vector.broadcast %cst_7 : f32 to vector<16x32xf32>
    %15 = arith.mulf %14, %13 : vector<16x32xf32>
    %16 = math.tanh %15 : vector<16x32xf32>
    %cst_8 = arith.constant 1.000000e+00 : f32
    %17 = vector.broadcast %cst_8 : f32 to vector<16x32xf32>
    %18 = arith.addf %17, %16 : vector<16x32xf32>
    %19 = arith.mulf %8, %18 : vector<16x32xf32>
    %c0_9 = arith.constant 0 : index
    %c0_10 = arith.constant 0 : index
    %20 = vector.load %arg4[%c0_9, %c0_10] : memref<1x32xf32, #tpu.memory_space<vmem>>, vector<1x32xf32>
    %c0_11 = arith.constant 0 : index
    %c0_12 = arith.constant 0 : index
    %21 = vector.load %arg5[%c0_11, %c0_12] : memref<1x32xf32, #tpu.memory_space<vmem>>, vector<1x32xf32>
    %cst_13 = arith.constant dense<0.000000e+00> : vector<16xf32>
    %22 = vector.multi_reduction <add>, %19, %cst_13 [1] : vector<16x32xf32> to vector<16xf32>
    %23 = vector.shape_cast %22 : vector<16xf32> to vector<16x1xf32>
    %cst_14 = arith.constant 3.200000e+01 : f32
    %24 = vector.broadcast %cst_14 : f32 to vector<16x1xf32>
    %25 = arith.divf %23, %24 : vector<16x1xf32>
    %26 = vector.broadcast %25 : vector<16x1xf32> to vector<16x32xf32>
    %27 = arith.subf %19, %26 : vector<16x32xf32>
    %28 = arith.mulf %27, %27 : vector<16x32xf32>
    %cst_15 = arith.constant dense<0.000000e+00> : vector<16xf32>
    %29 = vector.multi_reduction <add>, %28, %cst_15 [1] : vector<16x32xf32> to vector<16xf32>
    %30 = vector.shape_cast %29 : vector<16xf32> to vector<16x1xf32>
    %cst_16 = arith.constant 3.200000e+01 : f32
    %31 = vector.broadcast %cst_16 : f32 to vector<16x1xf32>
    %32 = arith.divf %30, %31 : vector<16x1xf32>
    %33 = vector.broadcast %25 : vector<16x1xf32> to vector<16x32xf32>
    %34 = arith.subf %19, %33 : vector<16x32xf32>
    %cst_17 = arith.constant 9.99999996E-13 : f32
    %35 = vector.broadcast %cst_17 : f32 to vector<16x1xf32>
    %36 = arith.addf %32, %35 : vector<16x1xf32>
    %37 = math.rsqrt %36 : vector<16x1xf32>
    %38 = vector.broadcast %37 : vector<16x1xf32> to vector<16x32xf32>
    %39 = arith.mulf %34, %38 : vector<16x32xf32>
    %40 = vector.broadcast %20 : vector<1x32xf32> to vector<16x32xf32>
    %41 = arith.mulf %40, %39 : vector<16x32xf32>
    %42 = vector.broadcast %21 : vector<1x32xf32> to vector<16x32xf32>
    %43 = arith.addf %41, %42 : vector<16x32xf32>
    %c0_18 = arith.constant 0 : index
    %c0_19 = arith.constant 0 : index
    %44 = vector.load %arg6[%c0_18, %c0_19] : memref<16x32xf32, #tpu.memory_space<vmem>>, vector<16x32xf32>
    tpu.vector_store %arg6[%c0_18, %c0_19], %43 {strides = array<i32>} : memref<16x32xf32, #tpu.memory_space<vmem>>, vector<16x32xf32>,
    return
  }
  func.func @transform_0(%arg0: i32) -> (i32, i32) {
    %c0_i32 = arith.constant 0 : i32
    %c0_i32_0 = arith.constant 0 : i32
    return %arg0, %c0_i32 : i32, i32
  }
  func.func @transform_1(%arg0: i32) -> (i32, i32) {
    %c0_i32 = arith.constant 0 : i32
    %c0_i32_0 = arith.constant 0 : i32
    %c0_i32_1 = arith.constant 0 : i32
    return %c0_i32, %c0_i32_0 : i32, i32
  }
  func.func @transform_2(%arg0: i32) -> (i32, i32) {
    %c0_i32 = arith.constant 0 : i32
    %c0_i32_0 = arith.constant 0 : i32
    %c0_i32_1 = arith.constant 0 : i32
    return %c0_i32, %c0_i32_0 : i32, i32
  }
  func.func @transform_3(%arg0: i32) -> (i32, i32) {
    %c0_i32 = arith.constant 0 : i32
    %c0_i32_0 = arith.constant 0 : i32
    %c0_i32_1 = arith.constant 0 : i32
    return %c0_i32, %c0_i32_0 : i32, i32
  }
  func.func @transform_4(%arg0: i32) -> (i32, i32) {
    %c0_i32 = arith.constant 0 : i32
    %c0_i32_0 = arith.constant 0 : i32
    %c0_i32_1 = arith.constant 0 : i32
    return %c0_i32, %c0_i32_0 : i32, i32
  }
  func.func @transform_5(%arg0: i32) -> (i32, i32) {
    %c0_i32 = arith.constant 0 : i32
    %c0_i32_0 = arith.constant 0 : i32
    return %arg0, %c0_i32 : i32, i32
  }
}

module attributes {stable_mosaic.version = 11 : i64} {
  func.func @_embed_ln_kernel(%arg0: i32, %arg1: memref<16x32xf32, #tpu.memory_space<vmem>>, %arg2: memref<16x32xf32, #tpu.memory_space<vmem>>, %arg3: memref<16x32xf32, #tpu.memory_space<vmem>>, %arg4: memref<1x32xf32, #tpu.memory_space<vmem>>, %arg5: memref<1x32xf32, #tpu.memory_space<vmem>>, %arg6: memref<16x32xf32, #tpu.memory_space<vmem>>) attributes {dimension_semantics = [#tpu.dimension_semantics<parallel>], iteration_bounds = array<i64: 1>, scalar_prefetch = 0 : i64, scratch_operands = 0 : i64, tpu.core_type = #tpu.core_type<tc>, window_params = [{transform_indices = @transform_0, window_bounds = array<i64: 16, 32>}, {transform_indices = @transform_1, window_bounds = array<i64: 16, 32>}, {transform_indices = @transform_2, window_bounds = array<i64: 16, 32>}, {pipeline_mode = #tpu.pipeline_mode<synchronous>, transform_indices = @transform_3, window_bounds = array<i64: 1, 32>}, {pipeline_mode = #tpu.pipeline_mode<synchronous>, transform_indices = @transform_4, window_bounds = array<i64: 1, 32>}, {transform_indices = @transform_5, window_bounds = array<i64: 16, 32>}]} {
    %c0 = arith.constant 0 : index
    %c0_0 = arith.constant 0 : index
    %0 = vector.load %arg1[%c0, %c0_0] : memref<16x32xf32, #tpu.memory_space<vmem>>, vector<16x32xf32>
    %c0_1 = arith.constant 0 : index
    %c0_2 = arith.constant 0 : index
    %1 = vector.load %arg2[%c0_1, %c0_2] : memref<16x32xf32, #tpu.memory_space<vmem>>, vector<16x32xf32>
    %2 = arith.addf %0, %1 : vector<16x32xf32>
    %c0_3 = arith.constant 0 : index
    %c0_4 = arith.constant 0 : index
    %3 = vector.load %arg3[%c0_3, %c0_4] : memref<16x32xf32, #tpu.memory_space<vmem>>, vector<16x32xf32>
    %4 = arith.addf %2, %3 : vector<16x32xf32>
    %c0_5 = arith.constant 0 : index
    %c0_6 = arith.constant 0 : index
    %5 = vector.load %arg4[%c0_5, %c0_6] : memref<1x32xf32, #tpu.memory_space<vmem>>, vector<1x32xf32>
    %c0_7 = arith.constant 0 : index
    %c0_8 = arith.constant 0 : index
    %6 = vector.load %arg5[%c0_7, %c0_8] : memref<1x32xf32, #tpu.memory_space<vmem>>, vector<1x32xf32>
    %cst = arith.constant dense<0.000000e+00> : vector<16xf32>
    %7 = vector.multi_reduction <add>, %4, %cst [1] : vector<16x32xf32> to vector<16xf32>
    %8 = vector.shape_cast %7 : vector<16xf32> to vector<16x1xf32>
    %cst_9 = arith.constant 3.200000e+01 : f32
    %9 = vector.broadcast %cst_9 : f32 to vector<16x1xf32>
    %10 = arith.divf %8, %9 : vector<16x1xf32>
    %11 = vector.broadcast %10 : vector<16x1xf32> to vector<16x32xf32>
    %12 = arith.subf %4, %11 : vector<16x32xf32>
    %13 = arith.mulf %12, %12 : vector<16x32xf32>
    %cst_10 = arith.constant dense<0.000000e+00> : vector<16xf32>
    %14 = vector.multi_reduction <add>, %13, %cst_10 [1] : vector<16x32xf32> to vector<16xf32>
    %15 = vector.shape_cast %14 : vector<16xf32> to vector<16x1xf32>
    %cst_11 = arith.constant 3.200000e+01 : f32
    %16 = vector.broadcast %cst_11 : f32 to vector<16x1xf32>
    %17 = arith.divf %15, %16 : vector<16x1xf32>
    %18 = vector.broadcast %10 : vector<16x1xf32> to vector<16x32xf32>
    %19 = arith.subf %4, %18 : vector<16x32xf32>
    %cst_12 = arith.constant 9.99999996E-13 : f32
    %20 = vector.broadcast %cst_12 : f32 to vector<16x1xf32>
    %21 = arith.addf %17, %20 : vector<16x1xf32>
    %22 = math.rsqrt %21 : vector<16x1xf32>
    %23 = vector.broadcast %22 : vector<16x1xf32> to vector<16x32xf32>
    %24 = arith.mulf %19, %23 : vector<16x32xf32>
    %25 = vector.broadcast %5 : vector<1x32xf32> to vector<16x32xf32>
    %26 = arith.mulf %25, %24 : vector<16x32xf32>
    %27 = vector.broadcast %6 : vector<1x32xf32> to vector<16x32xf32>
    %28 = arith.addf %26, %27 : vector<16x32xf32>
    %c0_13 = arith.constant 0 : index
    %c0_14 = arith.constant 0 : index
    %29 = vector.load %arg6[%c0_13, %c0_14] : memref<16x32xf32, #tpu.memory_space<vmem>>, vector<16x32xf32>
    tpu.vector_store %arg6[%c0_13, %c0_14], %28 {strides = array<i32>} : memref<16x32xf32, #tpu.memory_space<vmem>>, vector<16x32xf32>,
    return
  }
  func.func @transform_0(%arg0: i32) -> (i32, i32) {
    %c0_i32 = arith.constant 0 : i32
    %c0_i32_0 = arith.constant 0 : i32
    return %arg0, %c0_i32 : i32, i32
  }
  func.func @transform_1(%arg0: i32) -> (i32, i32) {
    %c0_i32 = arith.constant 0 : i32
    %c0_i32_0 = arith.constant 0 : i32
    return %arg0, %c0_i32 : i32, i32
  }
  func.func @transform_2(%arg0: i32) -> (i32, i32) {
    %c0_i32 = arith.constant 0 : i32
    %c0_i32_0 = arith.constant 0 : i32
    return %arg0, %c0_i32 : i32, i32
  }
  func.func @transform_3(%arg0: i32) -> (i32, i32) {
    %c0_i32 = arith.constant 0 : i32
    %c0_i32_0 = arith.constant 0 : i32
    %c0_i32_1 = arith.constant 0 : i32
    return %c0_i32, %c0_i32_0 : i32, i32
  }
  func.func @transform_4(%arg0: i32) -> (i32, i32) {
    %c0_i32 = arith.constant 0 : i32
    %c0_i32_0 = arith.constant 0 : i32
    %c0_i32_1 = arith.constant 0 : i32
    return %c0_i32, %c0_i32_0 : i32, i32
  }
  func.func @transform_5(%arg0: i32) -> (i32, i32) {
    %c0_i32 = arith.constant 0 : i32
    %c0_i32_0 = arith.constant 0 : i32
    return %arg0, %c0_i32 : i32, i32
  }
}

module attributes {stable_mosaic.version = 11 : i64} {
  func.func @_ffn_kernel(%arg0: i32, %arg1: memref<16x32xf32, #tpu.memory_space<vmem>>, %arg2: memref<32x64xbf16, #tpu.memory_space<vmem>>, %arg3: memref<1x64xf32, #tpu.memory_space<vmem>>, %arg4: memref<64x32xbf16, #tpu.memory_space<vmem>>, %arg5: memref<1x32xf32, #tpu.memory_space<vmem>>, %arg6: memref<1x32xf32, #tpu.memory_space<vmem>>, %arg7: memref<1x32xf32, #tpu.memory_space<vmem>>, %arg8: memref<16x32xf32, #tpu.memory_space<vmem>>) attributes {dimension_semantics = [#tpu.dimension_semantics<parallel>], iteration_bounds = array<i64: 1>, scalar_prefetch = 0 : i64, scratch_operands = 0 : i64, tpu.core_type = #tpu.core_type<tc>, window_params = [{transform_indices = @transform_0, window_bounds = array<i64: 16, 32>}, {pipeline_mode = #tpu.pipeline_mode<synchronous>, transform_indices = @transform_1, window_bounds = array<i64: 32, 64>}, {pipeline_mode = #tpu.pipeline_mode<synchronous>, transform_indices = @transform_2, window_bounds = array<i64: 1, 64>}, {pipeline_mode = #tpu.pipeline_mode<synchronous>, transform_indices = @transform_3, window_bounds = array<i64: 64, 32>}, {pipeline_mode = #tpu.pipeline_mode<synchronous>, transform_indices = @transform_4, window_bounds = array<i64: 1, 32>}, {pipeline_mode = #tpu.pipeline_mode<synchronous>, transform_indices = @transform_5, window_bounds = array<i64: 1, 32>}, {pipeline_mode = #tpu.pipeline_mode<synchronous>, transform_indices = @transform_6, window_bounds = array<i64: 1, 32>}, {transform_indices = @transform_7, window_bounds = array<i64: 16, 32>}]} {
    %c0 = arith.constant 0 : index
    %c0_0 = arith.constant 0 : index
    %0 = vector.load %arg1[%c0, %c0_0] : memref<16x32xf32, #tpu.memory_space<vmem>>, vector<16x32xf32>
    %c0_1 = arith.constant 0 : index
    %c0_2 = arith.constant 0 : index
    %1 = vector.load %arg2[%c0_1, %c0_2] : memref<32x64xbf16, #tpu.memory_space<vmem>>, vector<32x64xbf16>
    %2 = arith.truncf %0 : vector<16x32xf32> to vector<16x32xbf16>
    %cst = arith.constant dense<0.000000e+00> : vector<16x64xf32>
    %3 = tpu.matmul %2, %1, %cst {dimension_numbers = #tpu.dot_dimension_numbers<[1], [0], [0], [1], [0, 0, 1, 1], [], []>} : vector<16x32xbf16>, vector<32x64xbf16>, vector<16x64xf32> -> vector<16x64xf32>
    %c0_3 = arith.constant 0 : index
    %c0_4 = arith.constant 0 : index
    %4 = vector.load %arg3[%c0_3, %c0_4] : memref<1x64xf32, #tpu.memory_space<vmem>>, vector<1x64xf32>
    %5 = vector.broadcast %4 : vector<1x64xf32> to vector<16x64xf32>
    %6 = arith.addf %3, %5 : vector<16x64xf32>
    %cst_5 = arith.constant 5.000000e-01 : f32
    %7 = vector.broadcast %cst_5 : f32 to vector<16x64xf32>
    %8 = arith.mulf %7, %6 : vector<16x64xf32>
    %cst_6 = arith.constant 4.471500e-02 : f32
    %9 = vector.broadcast %cst_6 : f32 to vector<16x64xf32>
    %10 = arith.mulf %9, %6 : vector<16x64xf32>
    %11 = arith.mulf %10, %6 : vector<16x64xf32>
    %12 = arith.mulf %11, %6 : vector<16x64xf32>
    %13 = arith.addf %6, %12 : vector<16x64xf32>
    %cst_7 = arith.constant 0.797884583 : f32
    %14 = vector.broadcast %cst_7 : f32 to vector<16x64xf32>
    %15 = arith.mulf %14, %13 : vector<16x64xf32>
    %16 = math.tanh %15 : vector<16x64xf32>
    %cst_8 = arith.constant 1.000000e+00 : f32
    %17 = vector.broadcast %cst_8 : f32 to vector<16x64xf32>
    %18 = arith.addf %17, %16 : vector<16x64xf32>
    %19 = arith.mulf %8, %18 : vector<16x64xf32>
    %c0_9 = arith.constant 0 : index
    %c0_10 = arith.constant 0 : index
    %20 = vector.load %arg4[%c0_9, %c0_10] : memref<64x32xbf16, #tpu.memory_space<vmem>>, vector<64x32xbf16>
    %21 = arith.truncf %19 : vector<16x64xf32> to vector<16x64xbf16>
    %cst_11 = arith.constant dense<0.000000e+00> : vector<16x32xf32>
    %22 = tpu.matmul %21, %20, %cst_11 {dimension_numbers = #tpu.dot_dimension_numbers<[1], [0], [0], [1], [0, 0, 1, 1], [], []>} : vector<16x64xbf16>, vector<64x32xbf16>, vector<16x32xf32> -> vector<16x32xf32>
    %c0_12 = arith.constant 0 : index
    %c0_13 = arith.constant 0 : index
    %23 = vector.load %arg5[%c0_12, %c0_13] : memref<1x32xf32, #tpu.memory_space<vmem>>, vector<1x32xf32>
    %24 = vector.broadcast %23 : vector<1x32xf32> to vector<16x32xf32>
    %25 = arith.addf %22, %24 : vector<16x32xf32>
    %26 = arith.addf %25, %0 : vector<16x32xf32>
    %c0_14 = arith.constant 0 : index
    %c0_15 = arith.constant 0 : index
    %27 = vector.load %arg6[%c0_14, %c0_15] : memref<1x32xf32, #tpu.memory_space<vmem>>, vector<1x32xf32>
    %c0_16 = arith.constant 0 : index
    %c0_17 = arith.constant 0 : index
    %28 = vector.load %arg7[%c0_16, %c0_17] : memref<1x32xf32, #tpu.memory_space<vmem>>, vector<1x32xf32>
    %cst_18 = arith.constant dense<0.000000e+00> : vector<16xf32>
    %29 = vector.multi_reduction <add>, %26, %cst_18 [1] : vector<16x32xf32> to vector<16xf32>
    %30 = vector.shape_cast %29 : vector<16xf32> to vector<16x1xf32>
    %cst_19 = arith.constant 3.200000e+01 : f32
    %31 = vector.broadcast %cst_19 : f32 to vector<16x1xf32>
    %32 = arith.divf %30, %31 : vector<16x1xf32>
    %33 = vector.broadcast %32 : vector<16x1xf32> to vector<16x32xf32>
    %34 = arith.subf %26, %33 : vector<16x32xf32>
    %35 = arith.mulf %34, %34 : vector<16x32xf32>
    %cst_20 = arith.constant dense<0.000000e+00> : vector<16xf32>
    %36 = vector.multi_reduction <add>, %35, %cst_20 [1] : vector<16x32xf32> to vector<16xf32>
    %37 = vector.shape_cast %36 : vector<16xf32> to vector<16x1xf32>
    %cst_21 = arith.constant 3.200000e+01 : f32
    %38 = vector.broadcast %cst_21 : f32 to vector<16x1xf32>
    %39 = arith.divf %37, %38 : vector<16x1xf32>
    %40 = vector.broadcast %32 : vector<16x1xf32> to vector<16x32xf32>
    %41 = arith.subf %26, %40 : vector<16x32xf32>
    %cst_22 = arith.constant 9.99999996E-13 : f32
    %42 = vector.broadcast %cst_22 : f32 to vector<16x1xf32>
    %43 = arith.addf %39, %42 : vector<16x1xf32>
    %44 = math.rsqrt %43 : vector<16x1xf32>
    %45 = vector.broadcast %44 : vector<16x1xf32> to vector<16x32xf32>
    %46 = arith.mulf %41, %45 : vector<16x32xf32>
    %47 = vector.broadcast %27 : vector<1x32xf32> to vector<16x32xf32>
    %48 = arith.mulf %47, %46 : vector<16x32xf32>
    %49 = vector.broadcast %28 : vector<1x32xf32> to vector<16x32xf32>
    %50 = arith.addf %48, %49 : vector<16x32xf32>
    %c0_23 = arith.constant 0 : index
    %c0_24 = arith.constant 0 : index
    %51 = vector.load %arg8[%c0_23, %c0_24] : memref<16x32xf32, #tpu.memory_space<vmem>>, vector<16x32xf32>
    tpu.vector_store %arg8[%c0_23, %c0_24], %50 {strides = array<i32>} : memref<16x32xf32, #tpu.memory_space<vmem>>, vector<16x32xf32>,
    return
  }
  func.func @transform_0(%arg0: i32) -> (i32, i32) {
    %c0_i32 = arith.constant 0 : i32
    %c0_i32_0 = arith.constant 0 : i32
    return %arg0, %c0_i32 : i32, i32
  }
  func.func @transform_1(%arg0: i32) -> (i32, i32) {
    %c0_i32 = arith.constant 0 : i32
    %c0_i32_0 = arith.constant 0 : i32
    %c0_i32_1 = arith.constant 0 : i32
    return %c0_i32, %c0_i32_0 : i32, i32
  }
  func.func @transform_2(%arg0: i32) -> (i32, i32) {
    %c0_i32 = arith.constant 0 : i32
    %c0_i32_0 = arith.constant 0 : i32
    %c0_i32_1 = arith.constant 0 : i32
    return %c0_i32, %c0_i32_0 : i32, i32
  }
  func.func @transform_3(%arg0: i32) -> (i32, i32) {
    %c0_i32 = arith.constant 0 : i32
    %c0_i32_0 = arith.constant 0 : i32
    %c0_i32_1 = arith.constant 0 : i32
    return %c0_i32, %c0_i32_0 : i32, i32
  }
  func.func @transform_4(%arg0: i32) -> (i32, i32) {
    %c0_i32 = arith.constant 0 : i32
    %c0_i32_0 = arith.constant 0 : i32
    %c0_i32_1 = arith.constant 0 : i32
    return %c0_i32, %c0_i32_0 : i32, i32
  }
  func.func @transform_5(%arg0: i32) -> (i32, i32) {
    %c0_i32 = arith.constant 0 : i32
    %c0_i32_0 = arith.constant 0 : i32
    %c0_i32_1 = arith.constant 0 : i32
    return %c0_i32, %c0_i32_0 : i32, i32
  }
  func.func @transform_6(%arg0: i32) -> (i32, i32) {
    %c0_i32 = arith.constant 0 : i32
    %c0_i32_0 = arith.constant 0 : i32
    %c0_i32_1 = arith.constant 0 : i32
    return %c0_i32, %c0_i32_0 : i32, i32
  }
  func.func @transform_7(%arg0: i32) -> (i32, i32) {
    %c0_i32 = arith.constant 0 : i32
    %c0_i32_0 = arith.constant 0 : i32
    return %arg0, %c0_i32 : i32, i32
  }
}

module attributes {stable_mosaic.version = 11 : i64} {
  func.func @_attn_block_kernel(%arg0: i32, %arg1: memref<1x8x32xf32, #tpu.memory_space<vmem>>, %arg2: memref<32x96xbf16, #tpu.memory_space<vmem>>, %arg3: memref<1x96xf32, #tpu.memory_space<vmem>>, %arg4: memref<32x32xbf16, #tpu.memory_space<vmem>>, %arg5: memref<1x32xf32, #tpu.memory_space<vmem>>, %arg6: memref<1x32xf32, #tpu.memory_space<vmem>>, %arg7: memref<1x32xf32, #tpu.memory_space<vmem>>, %arg8: memref<1x1x8xf32, #tpu.memory_space<vmem>>, %arg9: memref<1x8x32xf32, #tpu.memory_space<vmem>>) attributes {dimension_semantics = [#tpu.dimension_semantics<parallel>], iteration_bounds = array<i64: 2>, scalar_prefetch = 0 : i64, scratch_operands = 0 : i64, tpu.core_type = #tpu.core_type<tc>, window_params = [{transform_indices = @transform_0, window_bounds = array<i64: 1, 8, 32>}, {pipeline_mode = #tpu.pipeline_mode<synchronous>, transform_indices = @transform_1, window_bounds = array<i64: 32, 96>}, {pipeline_mode = #tpu.pipeline_mode<synchronous>, transform_indices = @transform_2, window_bounds = array<i64: 1, 96>}, {pipeline_mode = #tpu.pipeline_mode<synchronous>, transform_indices = @transform_3, window_bounds = array<i64: 32, 32>}, {pipeline_mode = #tpu.pipeline_mode<synchronous>, transform_indices = @transform_4, window_bounds = array<i64: 1, 32>}, {pipeline_mode = #tpu.pipeline_mode<synchronous>, transform_indices = @transform_5, window_bounds = array<i64: 1, 32>}, {pipeline_mode = #tpu.pipeline_mode<synchronous>, transform_indices = @transform_6, window_bounds = array<i64: 1, 32>}, {transform_indices = @transform_7, window_bounds = array<i64: 1, 1, 8>}, {transform_indices = @transform_8, window_bounds = array<i64: 1, 8, 32>}]} {
    %c0 = arith.constant 0 : index
    %c0_0 = arith.constant 0 : index
    %c0_1 = arith.constant 0 : index
    %0 = vector.load %arg1[%c0, %c0_0, %c0_1] : memref<1x8x32xf32, #tpu.memory_space<vmem>>, vector<1x8x32xf32>
    %1 = vector.shape_cast %0 : vector<1x8x32xf32> to vector<8x32xf32>
    %c0_2 = arith.constant 0 : index
    %c0_3 = arith.constant 0 : index
    %c0_4 = arith.constant 0 : index
    %2 = vector.load %arg8[%c0_2, %c0_3, %c0_4] : memref<1x1x8xf32, #tpu.memory_space<vmem>>, vector<1x1x8xf32>
    %3 = vector.shape_cast %2 : vector<1x1x8xf32> to vector<1x8xf32>
    %c0_5 = arith.constant 0 : index
    %c0_6 = arith.constant 0 : index
    %4 = vector.load %arg2[%c0_5, %c0_6] : memref<32x96xbf16, #tpu.memory_space<vmem>>, vector<32x96xbf16>
    %5 = arith.truncf %1 : vector<8x32xf32> to vector<8x32xbf16>
    %cst = arith.constant dense<0.000000e+00> : vector<8x96xf32>
    %6 = tpu.matmul %5, %4, %cst {dimension_numbers = #tpu.dot_dimension_numbers<[1], [0], [0], [1], [0, 0, 1, 1], [], []>} : vector<8x32xbf16>, vector<32x96xbf16>, vector<8x96xf32> -> vector<8x96xf32>
    %c0_7 = arith.constant 0 : index
    %c0_8 = arith.constant 0 : index
    %7 = vector.load %arg3[%c0_7, %c0_8] : memref<1x96xf32, #tpu.memory_space<vmem>>, vector<1x96xf32>
    %8 = vector.broadcast %7 : vector<1x96xf32> to vector<8x96xf32>
    %9 = arith.addf %6, %8 : vector<8x96xf32>
    %10 = vector.extract_strided_slice %9 {offsets = [0, 0], sizes = [8, 8], strides = [1, 1]} : vector<8x96xf32> to vector<8x8xf32>
    %cst_9 = arith.constant 0.353553385 : f32
    %11 = vector.broadcast %cst_9 : f32 to vector<8x8xf32>
    %12 = arith.mulf %10, %11 : vector<8x8xf32>
    %13 = arith.truncf %12 : vector<8x8xf32> to vector<8x8xbf16>
    %14 = vector.extract_strided_slice %9 {offsets = [0, 32], sizes = [8, 8], strides = [1, 1]} : vector<8x96xf32> to vector<8x8xf32>
    %15 = arith.truncf %14 : vector<8x8xf32> to vector<8x8xbf16>
    %16 = vector.extract_strided_slice %9 {offsets = [0, 64], sizes = [8, 8], strides = [1, 1]} : vector<8x96xf32> to vector<8x8xf32>
    %17 = arith.truncf %16 : vector<8x8xf32> to vector<8x8xbf16>
    %cst_10 = arith.constant dense<0.000000e+00> : vector<8x8xf32>
    %18 = tpu.matmul %13, %15, %cst_10 {dimension_numbers = #tpu.dot_dimension_numbers<[1], [1], [0], [0], [0, 0, 1, 0], [], []>} : vector<8x8xbf16>, vector<8x8xbf16>, vector<8x8xf32> -> vector<8x8xf32>
    %19 = vector.broadcast %3 : vector<1x8xf32> to vector<8x8xf32>
    %20 = arith.addf %18, %19 : vector<8x8xf32>
    %cst_11 = arith.constant dense<0xFF800000> : vector<8xf32>
    %21 = vector.multi_reduction <maximumf>, %20, %cst_11 [1] : vector<8x8xf32> to vector<8xf32>
    %22 = vector.shape_cast %21 : vector<8xf32> to vector<8x1xf32>
    %23 = vector.broadcast %22 : vector<8x1xf32> to vector<8x8xf32>
    %24 = arith.subf %20, %23 : vector<8x8xf32>
    %25 = math.exp %24 : vector<8x8xf32>
    %cst_12 = arith.constant dense<0.000000e+00> : vector<8xf32>
    %26 = vector.multi_reduction <add>, %25, %cst_12 [1] : vector<8x8xf32> to vector<8xf32>
    %27 = vector.shape_cast %26 : vector<8xf32> to vector<8x1xf32>
    %28 = tpu.reciprocal %27 {approx = true} : vector<8x1xf32> -> vector<8x1xf32>
    %29 = vector.broadcast %28 : vector<8x1xf32> to vector<8x8xf32>
    %30 = arith.mulf %25, %29 : vector<8x8xf32>
    %31 = arith.truncf %30 : vector<8x8xf32> to vector<8x8xbf16>
    %cst_13 = arith.constant dense<0.000000e+00> : vector<8x8xf32>
    %32 = tpu.matmul %31, %17, %cst_13 {dimension_numbers = #tpu.dot_dimension_numbers<[1], [0], [0], [1], [0, 0, 1, 1], [], []>} : vector<8x8xbf16>, vector<8x8xbf16>, vector<8x8xf32> -> vector<8x8xf32>
    %33 = vector.extract_strided_slice %9 {offsets = [0, 8], sizes = [8, 8], strides = [1, 1]} : vector<8x96xf32> to vector<8x8xf32>
    %cst_14 = arith.constant 0.353553385 : f32
    %34 = vector.broadcast %cst_14 : f32 to vector<8x8xf32>
    %35 = arith.mulf %33, %34 : vector<8x8xf32>
    %36 = arith.truncf %35 : vector<8x8xf32> to vector<8x8xbf16>
    %37 = vector.extract_strided_slice %9 {offsets = [0, 40], sizes = [8, 8], strides = [1, 1]} : vector<8x96xf32> to vector<8x8xf32>
    %38 = arith.truncf %37 : vector<8x8xf32> to vector<8x8xbf16>
    %39 = vector.extract_strided_slice %9 {offsets = [0, 72], sizes = [8, 8], strides = [1, 1]} : vector<8x96xf32> to vector<8x8xf32>
    %40 = arith.truncf %39 : vector<8x8xf32> to vector<8x8xbf16>
    %cst_15 = arith.constant dense<0.000000e+00> : vector<8x8xf32>
    %41 = tpu.matmul %36, %38, %cst_15 {dimension_numbers = #tpu.dot_dimension_numbers<[1], [1], [0], [0], [0, 0, 1, 0], [], []>} : vector<8x8xbf16>, vector<8x8xbf16>, vector<8x8xf32> -> vector<8x8xf32>
    %42 = vector.broadcast %3 : vector<1x8xf32> to vector<8x8xf32>
    %43 = arith.addf %41, %42 : vector<8x8xf32>
    %cst_16 = arith.constant dense<0xFF800000> : vector<8xf32>
    %44 = vector.multi_reduction <maximumf>, %43, %cst_16 [1] : vector<8x8xf32> to vector<8xf32>
    %45 = vector.shape_cast %44 : vector<8xf32> to vector<8x1xf32>
    %46 = vector.broadcast %45 : vector<8x1xf32> to vector<8x8xf32>
    %47 = arith.subf %43, %46 : vector<8x8xf32>
    %48 = math.exp %47 : vector<8x8xf32>
    %cst_17 = arith.constant dense<0.000000e+00> : vector<8xf32>
    %49 = vector.multi_reduction <add>, %48, %cst_17 [1] : vector<8x8xf32> to vector<8xf32>
    %50 = vector.shape_cast %49 : vector<8xf32> to vector<8x1xf32>
    %51 = tpu.reciprocal %50 {approx = true} : vector<8x1xf32> -> vector<8x1xf32>
    %52 = vector.broadcast %51 : vector<8x1xf32> to vector<8x8xf32>
    %53 = arith.mulf %48, %52 : vector<8x8xf32>
    %54 = arith.truncf %53 : vector<8x8xf32> to vector<8x8xbf16>
    %cst_18 = arith.constant dense<0.000000e+00> : vector<8x8xf32>
    %55 = tpu.matmul %54, %40, %cst_18 {dimension_numbers = #tpu.dot_dimension_numbers<[1], [0], [0], [1], [0, 0, 1, 1], [], []>} : vector<8x8xbf16>, vector<8x8xbf16>, vector<8x8xf32> -> vector<8x8xf32>
    %56 = vector.extract_strided_slice %9 {offsets = [0, 16], sizes = [8, 8], strides = [1, 1]} : vector<8x96xf32> to vector<8x8xf32>
    %cst_19 = arith.constant 0.353553385 : f32
    %57 = vector.broadcast %cst_19 : f32 to vector<8x8xf32>
    %58 = arith.mulf %56, %57 : vector<8x8xf32>
    %59 = arith.truncf %58 : vector<8x8xf32> to vector<8x8xbf16>
    %60 = vector.extract_strided_slice %9 {offsets = [0, 48], sizes = [8, 8], strides = [1, 1]} : vector<8x96xf32> to vector<8x8xf32>
    %61 = arith.truncf %60 : vector<8x8xf32> to vector<8x8xbf16>
    %62 = vector.extract_strided_slice %9 {offsets = [0, 80], sizes = [8, 8], strides = [1, 1]} : vector<8x96xf32> to vector<8x8xf32>
    %63 = arith.truncf %62 : vector<8x8xf32> to vector<8x8xbf16>
    %cst_20 = arith.constant dense<0.000000e+00> : vector<8x8xf32>
    %64 = tpu.matmul %59, %61, %cst_20 {dimension_numbers = #tpu.dot_dimension_numbers<[1], [1], [0], [0], [0, 0, 1, 0], [], []>} : vector<8x8xbf16>, vector<8x8xbf16>, vector<8x8xf32> -> vector<8x8xf32>
    %65 = vector.broadcast %3 : vector<1x8xf32> to vector<8x8xf32>
    %66 = arith.addf %64, %65 : vector<8x8xf32>
    %cst_21 = arith.constant dense<0xFF800000> : vector<8xf32>
    %67 = vector.multi_reduction <maximumf>, %66, %cst_21 [1] : vector<8x8xf32> to vector<8xf32>
    %68 = vector.shape_cast %67 : vector<8xf32> to vector<8x1xf32>
    %69 = vector.broadcast %68 : vector<8x1xf32> to vector<8x8xf32>
    %70 = arith.subf %66, %69 : vector<8x8xf32>
    %71 = math.exp %70 : vector<8x8xf32>
    %cst_22 = arith.constant dense<0.000000e+00> : vector<8xf32>
    %72 = vector.multi_reduction <add>, %71, %cst_22 [1] : vector<8x8xf32> to vector<8xf32>
    %73 = vector.shape_cast %72 : vector<8xf32> to vector<8x1xf32>
    %74 = tpu.reciprocal %73 {approx = true} : vector<8x1xf32> -> vector<8x1xf32>
    %75 = vector.broadcast %74 : vector<8x1xf32> to vector<8x8xf32>
    %76 = arith.mulf %71, %75 : vector<8x8xf32>
    %77 = arith.truncf %76 : vector<8x8xf32> to vector<8x8xbf16>
    %cst_23 = arith.constant dense<0.000000e+00> : vector<8x8xf32>
    %78 = tpu.matmul %77, %63, %cst_23 {dimension_numbers = #tpu.dot_dimension_numbers<[1], [0], [0], [1], [0, 0, 1, 1], [], []>} : vector<8x8xbf16>, vector<8x8xbf16>, vector<8x8xf32> -> vector<8x8xf32>
    %79 = vector.extract_strided_slice %9 {offsets = [0, 24], sizes = [8, 8], strides = [1, 1]} : vector<8x96xf32> to vector<8x8xf32>
    %cst_24 = arith.constant 0.353553385 : f32
    %80 = vector.broadcast %cst_24 : f32 to vector<8x8xf32>
    %81 = arith.mulf %79, %80 : vector<8x8xf32>
    %82 = arith.truncf %81 : vector<8x8xf32> to vector<8x8xbf16>
    %83 = vector.extract_strided_slice %9 {offsets = [0, 56], sizes = [8, 8], strides = [1, 1]} : vector<8x96xf32> to vector<8x8xf32>
    %84 = arith.truncf %83 : vector<8x8xf32> to vector<8x8xbf16>
    %85 = vector.extract_strided_slice %9 {offsets = [0, 88], sizes = [8, 8], strides = [1, 1]} : vector<8x96xf32> to vector<8x8xf32>
    %86 = arith.truncf %85 : vector<8x8xf32> to vector<8x8xbf16>
    %cst_25 = arith.constant dense<0.000000e+00> : vector<8x8xf32>
    %87 = tpu.matmul %82, %84, %cst_25 {dimension_numbers = #tpu.dot_dimension_numbers<[1], [1], [0], [0], [0, 0, 1, 0], [], []>} : vector<8x8xbf16>, vector<8x8xbf16>, vector<8x8xf32> -> vector<8x8xf32>
    %88 = vector.broadcast %3 : vector<1x8xf32> to vector<8x8xf32>
    %89 = arith.addf %87, %88 : vector<8x8xf32>
    %cst_26 = arith.constant dense<0xFF800000> : vector<8xf32>
    %90 = vector.multi_reduction <maximumf>, %89, %cst_26 [1] : vector<8x8xf32> to vector<8xf32>
    %91 = vector.shape_cast %90 : vector<8xf32> to vector<8x1xf32>
    %92 = vector.broadcast %91 : vector<8x1xf32> to vector<8x8xf32>
    %93 = arith.subf %89, %92 : vector<8x8xf32>
    %94 = math.exp %93 : vector<8x8xf32>
    %cst_27 = arith.constant dense<0.000000e+00> : vector<8xf32>
    %95 = vector.multi_reduction <add>, %94, %cst_27 [1] : vector<8x8xf32> to vector<8xf32>
    %96 = vector.shape_cast %95 : vector<8xf32> to vector<8x1xf32>
    %97 = tpu.reciprocal %96 {approx = true} : vector<8x1xf32> -> vector<8x1xf32>
    %98 = vector.broadcast %97 : vector<8x1xf32> to vector<8x8xf32>
    %99 = arith.mulf %94, %98 : vector<8x8xf32>
    %100 = arith.truncf %99 : vector<8x8xf32> to vector<8x8xbf16>
    %cst_28 = arith.constant dense<0.000000e+00> : vector<8x8xf32>
    %101 = tpu.matmul %100, %86, %cst_28 {dimension_numbers = #tpu.dot_dimension_numbers<[1], [0], [0], [1], [0, 0, 1, 1], [], []>} : vector<8x8xbf16>, vector<8x8xbf16>, vector<8x8xf32> -> vector<8x8xf32>
    %102 = tpu.concatenate %32, %55, %78, %101 in 1 : vector<8x8xf32>, vector<8x8xf32>, vector<8x8xf32>, vector<8x8xf32> -> vector<8x32xf32>
    %c0_29 = arith.constant 0 : index
    %c0_30 = arith.constant 0 : index
    %103 = vector.load %arg4[%c0_29, %c0_30] : memref<32x32xbf16, #tpu.memory_space<vmem>>, vector<32x32xbf16>
    %104 = arith.truncf %102 : vector<8x32xf32> to vector<8x32xbf16>
    %cst_31 = arith.constant dense<0.000000e+00> : vector<8x32xf32>
    %105 = tpu.matmul %104, %103, %cst_31 {dimension_numbers = #tpu.dot_dimension_numbers<[1], [0], [0], [1], [0, 0, 1, 1], [], []>} : vector<8x32xbf16>, vector<32x32xbf16>, vector<8x32xf32> -> vector<8x32xf32>
    %c0_32 = arith.constant 0 : index
    %c0_33 = arith.constant 0 : index
    %106 = vector.load %arg5[%c0_32, %c0_33] : memref<1x32xf32, #tpu.memory_space<vmem>>, vector<1x32xf32>
    %107 = vector.broadcast %106 : vector<1x32xf32> to vector<8x32xf32>
    %108 = arith.addf %105, %107 : vector<8x32xf32>
    %109 = arith.addf %108, %1 : vector<8x32xf32>
    %c0_34 = arith.constant 0 : index
    %c0_35 = arith.constant 0 : index
    %110 = vector.load %arg6[%c0_34, %c0_35] : memref<1x32xf32, #tpu.memory_space<vmem>>, vector<1x32xf32>
    %c0_36 = arith.constant 0 : index
    %c0_37 = arith.constant 0 : index
    %111 = vector.load %arg7[%c0_36, %c0_37] : memref<1x32xf32, #tpu.memory_space<vmem>>, vector<1x32xf32>
    %cst_38 = arith.constant dense<0.000000e+00> : vector<8xf32>
    %112 = vector.multi_reduction <add>, %109, %cst_38 [1] : vector<8x32xf32> to vector<8xf32>
    %113 = vector.shape_cast %112 : vector<8xf32> to vector<8x1xf32>
    %cst_39 = arith.constant 3.200000e+01 : f32
    %114 = vector.broadcast %cst_39 : f32 to vector<8x1xf32>
    %115 = arith.divf %113, %114 : vector<8x1xf32>
    %116 = vector.broadcast %115 : vector<8x1xf32> to vector<8x32xf32>
    %117 = arith.subf %109, %116 : vector<8x32xf32>
    %118 = arith.mulf %117, %117 : vector<8x32xf32>
    %cst_40 = arith.constant dense<0.000000e+00> : vector<8xf32>
    %119 = vector.multi_reduction <add>, %118, %cst_40 [1] : vector<8x32xf32> to vector<8xf32>
    %120 = vector.shape_cast %119 : vector<8xf32> to vector<8x1xf32>
    %cst_41 = arith.constant 3.200000e+01 : f32
    %121 = vector.broadcast %cst_41 : f32 to vector<8x1xf32>
    %122 = arith.divf %120, %121 : vector<8x1xf32>
    %123 = vector.broadcast %115 : vector<8x1xf32> to vector<8x32xf32>
    %124 = arith.subf %109, %123 : vector<8x32xf32>
    %cst_42 = arith.constant 9.99999996E-13 : f32
    %125 = vector.broadcast %cst_42 : f32 to vector<8x1xf32>
    %126 = arith.addf %122, %125 : vector<8x1xf32>
    %127 = math.rsqrt %126 : vector<8x1xf32>
    %128 = vector.broadcast %127 : vector<8x1xf32> to vector<8x32xf32>
    %129 = arith.mulf %124, %128 : vector<8x32xf32>
    %130 = vector.broadcast %110 : vector<1x32xf32> to vector<8x32xf32>
    %131 = arith.mulf %130, %129 : vector<8x32xf32>
    %132 = vector.broadcast %111 : vector<1x32xf32> to vector<8x32xf32>
    %133 = arith.addf %131, %132 : vector<8x32xf32>
    %c0_43 = arith.constant 0 : index
    %c0_44 = arith.constant 0 : index
    %c0_45 = arith.constant 0 : index
    %134 = vector.load %arg9[%c0_43, %c0_44, %c0_45] : memref<1x8x32xf32, #tpu.memory_space<vmem>>, vector<1x8x32xf32>
    %135 = vector.shape_cast %134 : vector<1x8x32xf32> to vector<8x32xf32>
    %136 = vector.shape_cast %133 : vector<8x32xf32> to vector<1x8x32xf32>
    tpu.vector_store %arg9[%c0_43, %c0_44, %c0_45], %136 {strides = array<i32>} : memref<1x8x32xf32, #tpu.memory_space<vmem>>, vector<1x8x32xf32>,
    return
  }
  func.func @transform_0(%arg0: i32) -> (i32, i32, i32) {
    %c0_i32 = arith.constant 0 : i32
    %c0_i32_0 = arith.constant 0 : i32
    %c0_i32_1 = arith.constant 0 : i32
    return %arg0, %c0_i32, %c0_i32_0 : i32, i32, i32
  }
  func.func @transform_1(%arg0: i32) -> (i32, i32) {
    %c0_i32 = arith.constant 0 : i32
    %c0_i32_0 = arith.constant 0 : i32
    %c0_i32_1 = arith.constant 0 : i32
    return %c0_i32, %c0_i32_0 : i32, i32
  }
  func.func @transform_2(%arg0: i32) -> (i32, i32) {
    %c0_i32 = arith.constant 0 : i32
    %c0_i32_0 = arith.constant 0 : i32
    %c0_i32_1 = arith.constant 0 : i32
    return %c0_i32, %c0_i32_0 : i32, i32
  }
  func.func @transform_3(%arg0: i32) -> (i32, i32) {
    %c0_i32 = arith.constant 0 : i32
    %c0_i32_0 = arith.constant 0 : i32
    %c0_i32_1 = arith.constant 0 : i32
    return %c0_i32, %c0_i32_0 : i32, i32
  }
  func.func @transform_4(%arg0: i32) -> (i32, i32) {
    %c0_i32 = arith.constant 0 : i32
    %c0_i32_0 = arith.constant 0 : i32
    %c0_i32_1 = arith.constant 0 : i32
    return %c0_i32, %c0_i32_0 : i32, i32
  }
  func.func @transform_5(%arg0: i32) -> (i32, i32) {
    %c0_i32 = arith.constant 0 : i32
    %c0_i32_0 = arith.constant 0 : i32
    %c0_i32_1 = arith.constant 0 : i32
    return %c0_i32, %c0_i32_0 : i32, i32
  }
  func.func @transform_6(%arg0: i32) -> (i32, i32) {
    %c0_i32 = arith.constant 0 : i32
    %c0_i32_0 = arith.constant 0 : i32
    %c0_i32_1 = arith.constant 0 : i32
    return %c0_i32, %c0_i32_0 : i32, i32
  }
  func.func @transform_7(%arg0: i32) -> (i32, i32, i32) {
    %c0_i32 = arith.constant 0 : i32
    %c0_i32_0 = arith.constant 0 : i32
    %c0_i32_1 = arith.constant 0 : i32
    return %arg0, %c0_i32, %c0_i32_0 : i32, i32, i32
  }
  func.func @transform_8(%arg0: i32) -> (i32, i32, i32) {
    %c0_i32 = arith.constant 0 : i32
    %c0_i32_0 = arith.constant 0 : i32
    %c0_i32_1 = arith.constant 0 : i32
    return %arg0, %c0_i32, %c0_i32_0 : i32, i32, i32
  }
}

module attributes {stable_mosaic.version = 11 : i64} {
  func.func @_lm_head_kernel(%arg0: i32, %arg1: i32, %arg2: memref<16x32xf32, #tpu.memory_space<vmem>>, %arg3: memref<32x128xbf16, #tpu.memory_space<vmem>>, %arg4: memref<1x128xf32, #tpu.memory_space<vmem>>, %arg5: memref<16x1xi32, #tpu.memory_space<vmem>>, %arg6: memref<16x1xi32, #tpu.memory_space<vmem>>, %arg7: memref<16x1xf32, #tpu.memory_space<vmem>>, %arg8: memref<16x1xf32, #tpu.memory_space<vmem>>, %arg9: memref<16x1xf32, #tpu.memory_space<vmem>>, %arg10: memref<16x1xf32, #tpu.memory_space<vmem>>, %arg11: memref<16x1xf32, #tpu.memory_space<vmem>>) attributes {dimension_semantics = [#tpu.dimension_semantics<parallel>, #tpu.dimension_semantics<arbitrary>], iteration_bounds = array<i64: 1, 1>, scalar_prefetch = 0 : i64, scratch_operands = 4 : i64, tpu.core_type = #tpu.core_type<tc>, window_params = [{transform_indices = @transform_0, window_bounds = array<i64: 16, 32>}, {transform_indices = @transform_1, window_bounds = array<i64: 32, 128>}, {transform_indices = @transform_2, window_bounds = array<i64: 1, 128>}, {transform_indices = @transform_3, window_bounds = array<i64: 16, 1>}, {transform_indices = @transform_4, window_bounds = array<i64: 16, 1>}, {transform_indices = @transform_5, window_bounds = array<i64: 16, 1>}]} {
    %c0_i32 = arith.constant 0 : i32
    %0 = arith.cmpi eq, %arg1, %c0_i32 : i32
    %1 = arith.extui %0 : i1 to i32
    %c0_i32_0 = arith.constant 0 : i32
    %2 = arith.cmpi ne, %1, %c0_i32_0 : i32
    scf.if %2 {
      %cst_32 = arith.constant 0xFF800000 : f32
      %54 = vector.broadcast %cst_32 : f32 to vector<16x1xf32>
      %c0_33 = arith.constant 0 : index
      %c0_34 = arith.constant 0 : index
      %55 = vector.load %arg8[%c0_33, %c0_34] : memref<16x1xf32, #tpu.memory_space<vmem>>, vector<16x1xf32>
      tpu.vector_store %arg8[%c0_33, %c0_34], %54 {strides = array<i32>} : memref<16x1xf32, #tpu.memory_space<vmem>>, vector<16x1xf32>,
      %cst_35 = arith.constant 0.000000e+00 : f32
      %56 = vector.broadcast %cst_35 : f32 to vector<16x1xf32>
      %c0_36 = arith.constant 0 : index
      %c0_37 = arith.constant 0 : index
      %57 = vector.load %arg9[%c0_36, %c0_37] : memref<16x1xf32, #tpu.memory_space<vmem>>, vector<16x1xf32>
      tpu.vector_store %arg9[%c0_36, %c0_37], %56 {strides = array<i32>} : memref<16x1xf32, #tpu.memory_space<vmem>>, vector<16x1xf32>,
      %cst_38 = arith.constant 0.000000e+00 : f32
      %58 = vector.broadcast %cst_38 : f32 to vector<16x1xf32>
      %c0_39 = arith.constant 0 : index
      %c0_40 = arith.constant 0 : index
      %59 = vector.load %arg10[%c0_39, %c0_40] : memref<16x1xf32, #tpu.memory_space<vmem>>, vector<16x1xf32>
      tpu.vector_store %arg10[%c0_39, %c0_40], %58 {strides = array<i32>} : memref<16x1xf32, #tpu.memory_space<vmem>>, vector<16x1xf32>,
      %cst_41 = arith.constant 0.000000e+00 : f32
      %60 = vector.broadcast %cst_41 : f32 to vector<16x1xf32>
      %c0_42 = arith.constant 0 : index
      %c0_43 = arith.constant 0 : index
      %61 = vector.load %arg11[%c0_42, %c0_43] : memref<16x1xf32, #tpu.memory_space<vmem>>, vector<16x1xf32>
      tpu.vector_store %arg11[%c0_42, %c0_43], %60 {strides = array<i32>} : memref<16x1xf32, #tpu.memory_space<vmem>>, vector<16x1xf32>,
    } else {
    }
    %c0 = arith.constant 0 : index
    %c0_1 = arith.constant 0 : index
    %3 = vector.load %arg2[%c0, %c0_1] : memref<16x32xf32, #tpu.memory_space<vmem>>, vector<16x32xf32>
    %c0_2 = arith.constant 0 : index
    %c0_3 = arith.constant 0 : index
    %4 = vector.load %arg3[%c0_2, %c0_3] : memref<32x128xbf16, #tpu.memory_space<vmem>>, vector<32x128xbf16>
    %5 = arith.truncf %3 : vector<16x32xf32> to vector<16x32xbf16>
    %cst = arith.constant dense<0.000000e+00> : vector<16x128xf32>
    %6 = tpu.matmul %5, %4, %cst {dimension_numbers = #tpu.dot_dimension_numbers<[1], [0], [0], [1], [0, 0, 1, 1], [], []>} : vector<16x32xbf16>, vector<32x128xbf16>, vector<16x128xf32> -> vector<16x128xf32>
    %c0_4 = arith.constant 0 : index
    %c0_5 = arith.constant 0 : index
    %7 = vector.load %arg4[%c0_4, %c0_5] : memref<1x128xf32, #tpu.memory_space<vmem>>, vector<1x128xf32>
    %8 = vector.broadcast %7 : vector<1x128xf32> to vector<16x128xf32>
    %9 = arith.addf %6, %8 : vector<16x128xf32>
    %10 = tpu.iota {dimensions = array<i32: 1>} : vector<16x128xi32>
    %c128_i32 = arith.constant 128 : i32
    %11 = arith.muli %arg1, %c128_i32 : i32
    %12 = vector.broadcast %11 : i32 to vector<16x128xi32>
    %13 = arith.addi %10, %12 : vector<16x128xi32>
    %14 = arith.sitofp %13 : vector<16x128xi32> to vector<16x128xf32>
    %c0_6 = arith.constant 0 : index
    %c0_7 = arith.constant 0 : index
    %15 = vector.load %arg5[%c0_6, %c0_7] : memref<16x1xi32, #tpu.memory_space<vmem>>, vector<16x1xi32>
    %16 = vector.broadcast %15 : vector<16x1xi32> to vector<16x128xi32>
    %17 = arith.cmpi eq, %13, %16 : vector<16x128xi32>
    %c0_8 = arith.constant 0 : index
    %c0_9 = arith.constant 0 : index
    %18 = vector.load %arg11[%c0_8, %c0_9] : memref<16x1xf32, #tpu.memory_space<vmem>>, vector<16x1xf32>
    %cst_10 = arith.constant 0.000000e+00 : f32
    %19 = vector.broadcast %cst_10 : f32 to vector<16x128xf32>
    %20 = arith.select %17, %9, %19 : vector<16x128xi1>, vector<16x128xf32>
    %cst_11 = arith.constant dense<0.000000e+00> : vector<16xf32>
    %21 = vector.multi_reduction <add>, %20, %cst_11 [1] : vector<16x128xf32> to vector<16xf32>
    %22 = vector.shape_cast %21 : vector<16xf32> to vector<16x1xf32>
    %23 = arith.addf %18, %22 : vector<16x1xf32>
    %c0_12 = arith.constant 0 : index
    %c0_13 = arith.constant 0 : index
    %24 = vector.load %arg11[%c0_12, %c0_13] : memref<16x1xf32, #tpu.memory_space<vmem>>, vector<16x1xf32>
    tpu.vector_store %arg11[%c0_12, %c0_13], %23 {strides = array<i32>} : memref<16x1xf32, #tpu.memory_space<vmem>>, vector<16x1xf32>,
    %cst_14 = arith.constant dense<0xFF800000> : vector<16xf32>
    %25 = vector.multi_reduction <maximumf>, %9, %cst_14 [1] : vector<16x128xf32> to vector<16xf32>
    %26 = vector.shape_cast %25 : vector<16xf32> to vector<16x1xf32>
    %27 = vector.broadcast %26 : vector<16x1xf32> to vector<16x128xf32>
    %28 = arith.cmpf oge, %9, %27 : vector<16x128xf32>
    %cst_15 = arith.constant 1.000000e+09 : f32
    %29 = vector.broadcast %cst_15 : f32 to vector<16x128xf32>
    %30 = arith.select %28, %14, %29 : vector<16x128xi1>, vector<16x128xf32>
    %cst_16 = arith.constant dense<0x7F800000> : vector<16xf32>
    %31 = vector.multi_reduction <minimumf>, %30, %cst_16 [1] : vector<16x128xf32> to vector<16xf32>
    %32 = vector.shape_cast %31 : vector<16xf32> to vector<16x1xf32>
    %c0_17 = arith.constant 0 : index
    %c0_18 = arith.constant 0 : index
    %33 = vector.load %arg8[%c0_17, %c0_18] : memref<16x1xf32, #tpu.memory_space<vmem>>, vector<16x1xf32>
    %34 = arith.cmpf ogt, %26, %33 : vector<16x1xf32>
    %c0_19 = arith.constant 0 : index
    %c0_20 = arith.constant 0 : index
    %35 = vector.load %arg10[%c0_19, %c0_20] : memref<16x1xf32, #tpu.memory_space<vmem>>, vector<16x1xf32>
    %36 = arith.select %34, %32, %35 : vector<16x1xi1>, vector<16x1xf32>
    %c0_21 = arith.constant 0 : index
    %c0_22 = arith.constant 0 : index
    %37 = vector.load %arg10[%c0_21, %c0_22] : memref<16x1xf32, #tpu.memory_space<vmem>>, vector<16x1xf32>
    tpu.vector_store %arg10[%c0_21, %c0_22], %36 {strides = array<i32>} : memref<16x1xf32, #tpu.memory_space<vmem>>, vector<16x1xf32>,
    %38 = arith.maximumf %33, %26 : vector<16x1xf32>
    %c0_23 = arith.constant 0 : index
    %c0_24 = arith.constant 0 : index
    %39 = vector.load %arg9[%c0_23, %c0_24] : memref<16x1xf32, #tpu.memory_space<vmem>>, vector<16x1xf32>
    %40 = arith.subf %33, %38 : vector<16x1xf32>
    %41 = math.exp %40 : vector<16x1xf32>
    %42 = arith.mulf %39, %41 : vector<16x1xf32>
    %43 = vector.broadcast %38 : vector<16x1xf32> to vector<16x128xf32>
    %44 = arith.subf %9, %43 : vector<16x128xf32>
    %45 = math.exp %44 : vector<16x128xf32>
    %cst_25 = arith.constant dense<0.000000e+00> : vector<16xf32>
    %46 = vector.multi_reduction <add>, %45, %cst_25 [1] : vector<16x128xf32> to vector<16xf32>
    %47 = vector.shape_cast %46 : vector<16xf32> to vector<16x1xf32>
    %48 = arith.addf %42, %47 : vector<16x1xf32>
    %c0_26 = arith.constant 0 : index
    %c0_27 = arith.constant 0 : index
    %49 = vector.load %arg9[%c0_26, %c0_27] : memref<16x1xf32, #tpu.memory_space<vmem>>, vector<16x1xf32>
    tpu.vector_store %arg9[%c0_26, %c0_27], %48 {strides = array<i32>} : memref<16x1xf32, #tpu.memory_space<vmem>>, vector<16x1xf32>,
    %c0_28 = arith.constant 0 : index
    %c0_29 = arith.constant 0 : index
    %50 = vector.load %arg8[%c0_28, %c0_29] : memref<16x1xf32, #tpu.memory_space<vmem>>, vector<16x1xf32>
    tpu.vector_store %arg8[%c0_28, %c0_29], %38 {strides = array<i32>} : memref<16x1xf32, #tpu.memory_space<vmem>>, vector<16x1xf32>,
    %c0_i32_30 = arith.constant 0 : i32
    %51 = arith.cmpi eq, %arg1, %c0_i32_30 : i32
    %52 = arith.extui %51 : i1 to i32
    %c0_i32_31 = arith.constant 0 : i32
    %53 = arith.cmpi ne, %52, %c0_i32_31 : i32
    scf.if %53 {
      %c0_32 = arith.constant 0 : index
      %c0_33 = arith.constant 0 : index
      %54 = vector.load %arg9[%c0_32, %c0_33] : memref<16x1xf32, #tpu.memory_space<vmem>>, vector<16x1xf32>
      %55 = math.log %54 : vector<16x1xf32>
      %c0_34 = arith.constant 0 : index
      %c0_35 = arith.constant 0 : index
      %56 = vector.load %arg8[%c0_34, %c0_35] : memref<16x1xf32, #tpu.memory_space<vmem>>, vector<16x1xf32>
      %57 = arith.addf %55, %56 : vector<16x1xf32>
      %c0_36 = arith.constant 0 : index
      %c0_37 = arith.constant 0 : index
      %58 = vector.load %arg10[%c0_36, %c0_37] : memref<16x1xf32, #tpu.memory_space<vmem>>, vector<16x1xf32>
      %59 = arith.fptosi %58 : vector<16x1xf32> to vector<16x1xi32>
      %c0_38 = arith.constant 0 : index
      %c0_39 = arith.constant 0 : index
      %60 = vector.load %arg6[%c0_38, %c0_39] : memref<16x1xi32, #tpu.memory_space<vmem>>, vector<16x1xi32>
      tpu.vector_store %arg6[%c0_38, %c0_39], %59 {strides = array<i32>} : memref<16x1xi32, #tpu.memory_space<vmem>>, vector<16x1xi32>,
      %c0_40 = arith.constant 0 : index
      %c0_41 = arith.constant 0 : index
      %61 = vector.load %arg11[%c0_40, %c0_41] : memref<16x1xf32, #tpu.memory_space<vmem>>, vector<16x1xf32>
      %62 = arith.subf %61, %57 : vector<16x1xf32>
      %c0_42 = arith.constant 0 : index
      %c0_43 = arith.constant 0 : index
      %63 = vector.load %arg7[%c0_42, %c0_43] : memref<16x1xf32, #tpu.memory_space<vmem>>, vector<16x1xf32>
      tpu.vector_store %arg7[%c0_42, %c0_43], %62 {strides = array<i32>} : memref<16x1xf32, #tpu.memory_space<vmem>>, vector<16x1xf32>,
    } else {
    }
    return
  }
  func.func @transform_0(%arg0: i32, %arg1: i32) -> (i32, i32) {
    %c0_i32 = arith.constant 0 : i32
    %c0_i32_0 = arith.constant 0 : i32
    return %arg0, %c0_i32 : i32, i32
  }
  func.func @transform_1(%arg0: i32, %arg1: i32) -> (i32, i32) {
    %c0_i32 = arith.constant 0 : i32
    %c0_i32_0 = arith.constant 0 : i32
    return %c0_i32, %arg1 : i32, i32
  }
  func.func @transform_2(%arg0: i32, %arg1: i32) -> (i32, i32) {
    %c0_i32 = arith.constant 0 : i32
    %c0_i32_0 = arith.constant 0 : i32
    return %c0_i32, %arg1 : i32, i32
  }
  func.func @transform_3(%arg0: i32, %arg1: i32) -> (i32, i32) {
    %c0_i32 = arith.constant 0 : i32
    %c0_i32_0 = arith.constant 0 : i32
    return %arg0, %c0_i32 : i32, i32
  }
  func.func @transform_4(%arg0: i32, %arg1: i32) -> (i32, i32) {
    %c0_i32 = arith.constant 0 : i32
    %c0_i32_0 = arith.constant 0 : i32
    return %arg0, %c0_i32 : i32, i32
  }
  func.func @transform_5(%arg0: i32, %arg1: i32) -> (i32, i32) {
    %c0_i32 = arith.constant 0 : i32
    %c0_i32_0 = arith.constant 0 : i32
    return %arg0, %c0_i32 : i32, i32
  }
}

module attributes {stable_mosaic.version = 11 : i64} {
  func.func @_linear_kernel(%arg0: i32, %arg1: memref<8x32xf32, #tpu.memory_space<vmem>>, %arg2: memref<32x1xbf16, #tpu.memory_space<vmem>>, %arg3: memref<1x1xf32, #tpu.memory_space<vmem>>, %arg4: memref<8x1xf32, #tpu.memory_space<vmem>>) attributes {dimension_semantics = [#tpu.dimension_semantics<parallel>], iteration_bounds = array<i64: 1>, scalar_prefetch = 0 : i64, scratch_operands = 0 : i64, tpu.core_type = #tpu.core_type<tc>, window_params = [{transform_indices = @transform_0, window_bounds = array<i64: 8, 32>}, {pipeline_mode = #tpu.pipeline_mode<synchronous>, transform_indices = @transform_1, window_bounds = array<i64: 32, 1>}, {pipeline_mode = #tpu.pipeline_mode<synchronous>, transform_indices = @transform_2, window_bounds = array<i64: 1, 1>}, {transform_indices = @transform_3, window_bounds = array<i64: 8, 1>}]} {
    %c0 = arith.constant 0 : index
    %c0_0 = arith.constant 0 : index
    %0 = vector.load %arg1[%c0, %c0_0] : memref<8x32xf32, #tpu.memory_space<vmem>>, vector<8x32xf32>
    %c0_1 = arith.constant 0 : index
    %c0_2 = arith.constant 0 : index
    %1 = vector.load %arg2[%c0_1, %c0_2] : memref<32x1xbf16, #tpu.memory_space<vmem>>, vector<32x1xbf16>
    %2 = arith.truncf %0 : vector<8x32xf32> to vector<8x32xbf16>
    %cst = arith.constant dense<0.000000e+00> : vector<8x1xf32>
    %3 = tpu.matmul %2, %1, %cst {dimension_numbers = #tpu.dot_dimension_numbers<[1], [0], [0], [1], [0, 0, 1, 1], [], []>} : vector<8x32xbf16>, vector<32x1xbf16>, vector<8x1xf32> -> vector<8x1xf32>
    %c0_3 = arith.constant 0 : index
    %c0_4 = arith.constant 0 : index
    %4 = vector.load %arg3[%c0_3, %c0_4] : memref<1x1xf32, #tpu.memory_space<vmem>>, vector<1x1xf32>
    %5 = vector.broadcast %4 : vector<1x1xf32> to vector<8x1xf32>
    %6 = arith.addf %3, %5 : vector<8x1xf32>
    %c0_5 = arith.constant 0 : index
    %c0_6 = arith.constant 0 : index
    %7 = vector.load %arg4[%c0_5, %c0_6] : memref<8x1xf32, #tpu.memory_space<vmem>>, vector<8x1xf32>
    tpu.vector_store %arg4[%c0_5, %c0_6], %6 {strides = array<i32>} : memref<8x1xf32, #tpu.memory_space<vmem>>, vector<8x1xf32>,
    return
  }
  func.func @transform_0(%arg0: i32) -> (i32, i32) {
    %c0_i32 = arith.constant 0 : i32
    %c0_i32_0 = arith.constant 0 : i32
    return %arg0, %c0_i32 : i32, i32
  }
  func.func @transform_1(%arg0: i32) -> (i32, i32) {
    %c0_i32 = arith.constant 0 : i32
    %c0_i32_0 = arith.constant 0 : i32
    %c0_i32_1 = arith.constant 0 : i32
    return %c0_i32, %c0_i32_0 : i32, i32
  }
  func.func @transform_2(%arg0: i32) -> (i32, i32) {
    %c0_i32 = arith.constant 0 : i32
    %c0_i32_0 = arith.constant 0 : i32
    %c0_i32_1 = arith.constant 0 : i32
    return %c0_i32, %c0_i32_0 : i32, i32
  }
  func.func @transform_3(%arg0: i32) -> (i32, i32) {
    %c0_i32 = arith.constant 0 : i32
    %c0_i32_0 = arith.constant 0 : i32
    return %arg0, %c0_i32 : i32, i32
  }
}

module attributes {stable_mosaic.version = 11 : i64} {
  func.func @_linear_kernel(%arg0: i32, %arg1: memref<8x32xf32, #tpu.memory_space<vmem>>, %arg2: memref<32x32xbf16, #tpu.memory_space<vmem>>, %arg3: memref<1x32xf32, #tpu.memory_space<vmem>>, %arg4: memref<8x32xf32, #tpu.memory_space<vmem>>) attributes {dimension_semantics = [#tpu.dimension_semantics<parallel>], iteration_bounds = array<i64: 1>, scalar_prefetch = 0 : i64, scratch_operands = 0 : i64, tpu.core_type = #tpu.core_type<tc>, window_params = [{transform_indices = @transform_0, window_bounds = array<i64: 8, 32>}, {pipeline_mode = #tpu.pipeline_mode<synchronous>, transform_indices = @transform_1, window_bounds = array<i64: 32, 32>}, {pipeline_mode = #tpu.pipeline_mode<synchronous>, transform_indices = @transform_2, window_bounds = array<i64: 1, 32>}, {transform_indices = @transform_3, window_bounds = array<i64: 8, 32>}]} {
    %c0 = arith.constant 0 : index
    %c0_0 = arith.constant 0 : index
    %0 = vector.load %arg1[%c0, %c0_0] : memref<8x32xf32, #tpu.memory_space<vmem>>, vector<8x32xf32>
    %c0_1 = arith.constant 0 : index
    %c0_2 = arith.constant 0 : index
    %1 = vector.load %arg2[%c0_1, %c0_2] : memref<32x32xbf16, #tpu.memory_space<vmem>>, vector<32x32xbf16>
    %2 = arith.truncf %0 : vector<8x32xf32> to vector<8x32xbf16>
    %cst = arith.constant dense<0.000000e+00> : vector<8x32xf32>
    %3 = tpu.matmul %2, %1, %cst {dimension_numbers = #tpu.dot_dimension_numbers<[1], [0], [0], [1], [0, 0, 1, 1], [], []>} : vector<8x32xbf16>, vector<32x32xbf16>, vector<8x32xf32> -> vector<8x32xf32>
    %c0_3 = arith.constant 0 : index
    %c0_4 = arith.constant 0 : index
    %4 = vector.load %arg3[%c0_3, %c0_4] : memref<1x32xf32, #tpu.memory_space<vmem>>, vector<1x32xf32>
    %5 = vector.broadcast %4 : vector<1x32xf32> to vector<8x32xf32>
    %6 = arith.addf %3, %5 : vector<8x32xf32>
    %7 = math.tanh %6 : vector<8x32xf32>
    %c0_5 = arith.constant 0 : index
    %c0_6 = arith.constant 0 : index
    %8 = vector.load %arg4[%c0_5, %c0_6] : memref<8x32xf32, #tpu.memory_space<vmem>>, vector<8x32xf32>
    tpu.vector_store %arg4[%c0_5, %c0_6], %7 {strides = array<i32>} : memref<8x32xf32, #tpu.memory_space<vmem>>, vector<8x32xf32>,
    return
  }
  func.func @transform_0(%arg0: i32) -> (i32, i32) {
    %c0_i32 = arith.constant 0 : i32
    %c0_i32_0 = arith.constant 0 : i32
    return %arg0, %c0_i32 : i32, i32
  }
  func.func @transform_1(%arg0: i32) -> (i32, i32) {
    %c0_i32 = arith.constant 0 : i32
    %c0_i32_0 = arith.constant 0 : i32
    %c0_i32_1 = arith.constant 0 : i32
    return %c0_i32, %c0_i32_0 : i32, i32
  }
  func.func @transform_2(%arg0: i32) -> (i32, i32) {
    %c0_i32 = arith.constant 0 : i32
    %c0_i32_0 = arith.constant 0 : i32
    %c0_i32_1 = arith.constant 0 : i32
    return %c0_i32, %c0_i32_0 : i32, i32
  }
  func.func @transform_3(%arg0: i32) -> (i32, i32) {
    %c0_i32 = arith.constant 0 : i32
    %c0_i32_0 = arith.constant 0 : i32
    return %arg0, %c0_i32 : i32, i32
  }
}

</mosaic_0001>

<llo_original>
// kernel: bertlm_forward.14
$region0: #{bertlm_forward.14}
  #allocation0 [shape = 'u32[]', space=smem, size = 0x4, offset = 0x4, fixed_abs, tag = 'smem constant byte address 0x4 - core index']
  #allocation1 [shape = 'u32[144,128]{1,0:T(1,128)}', space=vmem, size = 0x12000, scoped, tag = 'internal scratch']
  %s0 = inlined_call_operand.vmem [shape: f32[16,32], index: 0, kind: input, shape index: {}]
  %s1 = inlined_call_operand.vmem [shape: bf16[32,32], index: 1, kind: input, shape index: {}]
  %s2 = inlined_call_operand.vmem [shape: f32[1,32], index: 2, kind: input, shape index: {}]
  %s3 = inlined_call_operand.vmem [shape: f32[1,32], index: 3, kind: input, shape index: {}]
  %s4 = inlined_call_operand.vmem [shape: f32[1,32], index: 4, kind: input, shape index: {}]
  %s5 = inlined_call_operand.vmem [shape: f32[16,32], index: 5, kind: output, shape index: {}]
  %s6 = sld [smem:[#allocation0]]
  $region30: #{bertlm_forward.14} parent=0
    _
  %s8 = ssub.s32 1, %s6
  %s9 = scalar_select 0, %s8, %s6
  // Predicated region
  $region2: #{bertlm_forward.14} parent=0 // pred_check
    _
  $region3: #{bertlm_forward.14} parent=0 // pred_check_branch
    %11 = sbr.rel (0) target = $region5
  $region4: #{bertlm_forward.14} parent=0 // pred_region
    _
  $region5: #{bertlm_forward.14} parent=0 // pred_fallthru
    _
  // Predicated region
  $region6: #{bertlm_forward.14} parent=0 // pred_check
    _
  $region7: #{bertlm_forward.14} parent=0 // pred_check_branch
    %13 = sbr.rel (0) target = $region9
  $region8: #{bertlm_forward.14} parent=0 // pred_region
    _
  $region9: #{bertlm_forward.14} parent=0 // pred_fallthru
    _
  // Predicated region
  $region10: #{bertlm_forward.14} parent=0 // pred_check
    _
  $region11: #{bertlm_forward.14} parent=0 // pred_check_branch
    %15 = sbr.rel (0) target = $region13
  $region12: #{bertlm_forward.14} parent=0 // pred_region
    _
  $region13: #{bertlm_forward.14} parent=0 // pred_fallthru
    _
  // Predicated region
  $region14: #{bertlm_forward.14} parent=0 // pred_check
    _
  $region15: #{bertlm_forward.14} parent=0 // pred_check_branch
    %17 = sbr.rel (0) target = $region17
  $region16: #{bertlm_forward.14} parent=0 // pred_region
    _
  $region17: #{bertlm_forward.14} parent=0 // pred_fallthru
    _
  // Predicated region
  $region18: #{bertlm_forward.14} parent=0 // pred_check
    _
  $region19: #{bertlm_forward.14} parent=0 // pred_check_branch
    %19 = sbr.rel (0) target = $region21
  $region20: #{bertlm_forward.14} parent=0 // pred_region
    _
  $region21: #{bertlm_forward.14} parent=0 // pred_fallthru
    _
  %v21 = vld [vmem:[%s0] sm:$0xff]
  %v22 = vld [vmem:[%s0 + $0x8] sm:$0xff]
  %v23 = vld [vmem:[%s1] sm:$0xf]
  %v24 = vld [vmem:[%s1 + $0x4] sm:$0xf]
  %v25 = vld [vmem:[%s1 + $0x8] sm:$0xf]
  %v26 = vld [vmem:[%s1 + $0xc] sm:$0xf]
  %v27 = vpack.c.bf16 %v22, %v21
  %v28 = vld [vmem:[%s2] sm:$0x1]
  %v30 = vlaneseq
  %v31 = vshrl.u32 %v30, 7
  %v32 = vsub.s32 0, %v31
  %v33 = vrot.slane %v28, %v32
  %v39 = vunpack.c.l.b16 %v23
  %v40 = vunpack.c.l.b16 %v24
  %v41 = vunpack.c.l.b16 %v25
  %v42 = vunpack.c.l.b16 %v26
  %v43 = vpack.c.b16 %v40, %v39
  %v44 = vpack.c.b16 %v42, %v41
  %vm47 = vcmask 261120
  %v49 = vsel %vm47, %v27, 0
  %51 = vmatprep.subr.bf16.mxu0 0
  %52 = vmatpush1.bf16.msra.mxu0 0
  %53 = vmatprep.subr.bf16.mxu0 0
  %54 = vmatpush1.bf16.msra.mxu0 0
  %55 = vmatprep.subr.bf16.mxu0 0
  %56 = vmatpush1.bf16.msra.mxu0 0
  %57 = vmatprep.subr.bf16.mxu0 0
  %58 = vmatpush1.bf16.msra.mxu0 0
  %59 = vmatprep.subr.bf16.mxu0 0
  %60 = vmatpush1.bf16.msra.mxu0 0
  %61 = vmatprep.subr.bf16.mxu0 0
  %62 = vmatpush1.bf16.msra.mxu0 0
  %63 = vmatprep.subr.bf16.mxu0 0
  %64 = vmatpush1.bf16.msra.mxu0 %v44
  %65 = vmatprep.subr.bf16.mxu0 0
  %66 = vmatpush1.bf16.msra.mxu0 %v43
  %67 = vmatprep.subr.bf16.mxu0 0
  %68 = vmatpush2.bf16.msra.mxu0 0
  %69 = vmatprep.subr.bf16.mxu0 0
  %70 = vmatpush2.bf16.msra.mxu0 0
  %71 = vmatprep.subr.bf16.mxu0 0
  %72 = vmatpush2.bf16.msra.mxu0 0
  %73 = vmatprep.subr.bf16.mxu0 0
  %74 = vmatpush2.bf16.msra.mxu0 0
  %75 = vmatprep.subr.bf16.mxu0 0
  %76 = vmatpush2.bf16.msra.mxu0 0
  %77 = vmatprep.subr.bf16.mxu0 0
  %78 = vmatpush2.bf16.msra.mxu0 0
  %79 = vmatprep.subr.bf16.mxu0 0
  %80 = vmatpush2.bf16.msra.mxu0 0
  %81 = vmatprep.subr.bf16.mxu0 0
  %82 = vmatpush2.bf16.msra.mxu0 0
  %83 = vmatprep.mubr.bf16.mxu0 0
  %84 = vmatmul.mubr.bf16.gmra.mxu0 %v49
  %v85 = vpop.f32.mrf.mxu0
  %v86 = vadd.f32 %v33, %v85
  %v87 = vpop.f32.mrf.mxu0
  %v88 = vpop.f32.mrf.mxu0
  %v89 = vadd.f32 %v33, %v88
  %v90 = vpop.f32.mrf.mxu0
  %91 = vdwg.mxu0
  %v92 = vmul.f32 %v86, 0.5
  %v93 = vmul.f32 %v89, 0.5
  %v94 = vmul.f32 %v86, 0.044715
  %v95 = vmul.f32 %v89, 0.044715
  %v96 = vmul.f32 %v94, %v86
  %v97 = vmul.f32 %v95, %v89
  %v98 = vmul.f32 %v96, %v86
  %v99 = vmul.f32 %v97, %v89
  %v100 = vadd.f32 %v86, %v98
  %v101 = vadd.f32 %v89, %v99
  %v102 = vmul.f32 %v100, 0.7978846
  %v103 = vmul.f32 %v101, 0.7978846
  %v104 = vtanh.pop %v102
  %v105 = vtanh.pop %v103
  %v106 = vadd.f32 %v104, 1.0
  %v107 = vadd.f32 %v105, 1.0
  %v108 = vmul.f32 %v92, %v106
  %v109 = vmul.f32 %v93, %v107
  %v110 = vld [vmem:[%s3] sm:$0x1]
  %v111 = vld [vmem:[%s4] sm:$0x1]
  %v112 = vsel %vm47, %v108, 0.0
  %113 = vadd.xlane.f32.xlu0 %v112
  %v114 = vpop.xlane.xlu0 %113
  %v115 = vsel %vm47, %v109, 0.0
  %116 = vadd.xlane.f32.xlu0 %v115
  %v117 = vpop.xlane.xlu0 %116
  %v118 = vrcp.pop 32.0
  %v119 = vmul.f32 %v114, %v118
  %v120 = vmul.f32 %v117, %v118
  %v121 = vsub.f32 %v108, %v119
  %v122 = vsub.f32 %v109, %v120
  %v123 = vmul.f32 %v121, %v121
  %v124 = vmul.f32 %v122, %v122
  %v125 = vsel %vm47, %v123, 0.0
  %126 = vadd.xlane.f32.xlu0 %v125
  %v127 = vpop.xlane.xlu0 %126
  %v128 = vsel %vm47, %v124, 0.0
  %129 = vadd.xlane.f32.xlu0 %v128
  %v130 = vpop.xlane.xlu0 %129
  %v131 = vmul.f32 %v127, %v118
  %v132 = vmul.f32 %v130, %v118
  %v133 = vadd.f32 %v131, 1e-12
  %v134 = vadd.f32 %v132, 1e-12
  %v135 = vrsqrt.pop %v133
  %v136 = vrsqrt.pop %v134
  %v137 = vmul.f32 %v121, %v135
  %v138 = vmul.f32 %v122, %v136
  %v140 = vlaneseq
  %v141 = vshrl.u32 %v140, 7
  %v142 = vsub.s32 0, %v141
  %v143 = vrot.slane %v110, %v142
  %v145 = vmul.f32 %v143, %v137
  %v146 = vmul.f32 %v143, %v138
  %v148 = vlaneseq
  %v149 = vshrl.u32 %v148, 7
  %v150 = vsub.s32 0, %v149
  %v151 = vrot.slane %v111, %v150
  %v153 = vadd.f32 %v145, %v151
  %v154 = vadd.f32 %v146, %v151
  %155 = vst.msk [vmem:[%s5] sm:$0xff] %vm47, %v153
  %156 = vst.msk [vmem:[%s5 + $0x8] sm:$0xff] %vm47, %v154
  // Predicated region
  $region22: #{bertlm_forward.14} parent=0 // pred_check
    _
  $region23: #{bertlm_forward.14} parent=0 // pred_check_branch
    %158 = sbr.rel (0) target = $region25
  $region24: #{bertlm_forward.14} parent=0 // pred_region
    _
  $region25: #{bertlm_forward.14} parent=0 // pred_fallthru
    _
  // Predicated region
  $region26: #{bertlm_forward.14} parent=0 // pred_check
    _
  $region27: #{bertlm_forward.14} parent=0 // pred_check_branch
    %160 = sbr.rel (0) target = $region29
  $region28: #{bertlm_forward.14} parent=0 // pred_region
    _
  $region29: #{bertlm_forward.14} parent=0 // pred_fallthru
    _

// kernel: bertlm_forward.9
$region0: #{bertlm_forward.9}
  #allocation0 [shape = 'u32[]', space=smem, size = 0x4, offset = 0x4, fixed_abs, tag = 'smem constant byte address 0x4 - core index']
  #allocation1 [shape = 'u32[144,128]{1,0:T(1,128)}', space=vmem, size = 0x12000, scoped, tag = 'internal scratch']
  %s0 = inlined_call_operand.vmem [shape: f32[16,32], index: 0, kind: input, shape index: {}]
  %s1 = inlined_call_operand.vmem [shape: f32[16,32], index: 1, kind: input, shape index: {}]
  %s2 = inlined_call_operand.vmem [shape: f32[16,32], index: 2, kind: input, shape index: {}]
  %s3 = inlined_call_operand.vmem [shape: f32[1,32], index: 3, kind: input, shape index: {}]
  %s4 = inlined_call_operand.vmem [shape: f32[1,32], index: 4, kind: input, shape index: {}]
  %s5 = inlined_call_operand.vmem [shape: f32[16,32], index: 5, kind: output, shape index: {}]
  %s6 = sld [smem:[#allocation0]]
  $region30: #{bertlm_forward.9} parent=0
    _
  %s8 = ssub.s32 1, %s6
  %s9 = scalar_select 0, %s8, %s6
  // Predicated region
  $region2: #{bertlm_forward.9} parent=0 // pred_check
    _
  $region3: #{bertlm_forward.9} parent=0 // pred_check_branch
    %11 = sbr.rel (0) target = $region5
  $region4: #{bertlm_forward.9} parent=0 // pred_region
    _
  $region5: #{bertlm_forward.9} parent=0 // pred_fallthru
    _
  // Predicated region
  $region6: #{bertlm_forward.9} parent=0 // pred_check
    _
  $region7: #{bertlm_forward.9} parent=0 // pred_check_branch
    %13 = sbr.rel (0) target = $region9
  $region8: #{bertlm_forward.9} parent=0 // pred_region
    _
  $region9: #{bertlm_forward.9} parent=0 // pred_fallthru
    _
  // Predicated region
  $region10: #{bertlm_forward.9} parent=0 // pred_check
    _
  $region11: #{bertlm_forward.9} parent=0 // pred_check_branch
    %15 = sbr.rel (0) target = $region13
  $region12: #{bertlm_forward.9} parent=0 // pred_region
    _
  $region13: #{bertlm_forward.9} parent=0 // pred_fallthru
    _
  // Predicated region
  $region14: #{bertlm_forward.9} parent=0 // pred_check
    _
  $region15: #{bertlm_forward.9} parent=0 // pred_check_branch
    %17 = sbr.rel (0) target = $region17
  $region16: #{bertlm_forward.9} parent=0 // pred_region
    _
  $region17: #{bertlm_forward.9} parent=0 // pred_fallthru
    _
  // Predicated region
  $region18: #{bertlm_forward.9} parent=0 // pred_check
    _
  $region19: #{bertlm_forward.9} parent=0 // pred_check_branch
    %19 = sbr.rel (0) target = $region21
  $region20: #{bertlm_forward.9} parent=0 // pred_region
    _
  $region21: #{bertlm_forward.9} parent=0 // pred_fallthru
    _
  %v20 = vld [vmem:[%s0] sm:$0xff]
  %v21 = vld [vmem:[%s0 + $0x8] sm:$0xff]
  %v22 = vld [vmem:[%s1] sm:$0xff]
  %v23 = vld [vmem:[%s1 + $0x8] sm:$0xff]
  %v24 = vadd.f32 %v20, %v22
  %v25 = vadd.f32 %v21, %v23
  %v26 = vld [vmem:[%s2] sm:$0xff]
  %v27 = vld [vmem:[%s2 + $0x8] sm:$0xff]
  %v28 = vadd.f32 %v24, %v26
  %v29 = vadd.f32 %v25, %v27
  %v30 = vld [vmem:[%s3] sm:$0x1]
  %v31 = vld [vmem:[%s4] sm:$0x1]
  %vm32 = vcmask 261120
  %v33 = vsel %vm32, %v28, 0.0
  %34 = vadd.xlane.f32.xlu0 %v33
  %v35 = vpop.xlane.xlu0 %34
  %v36 = vsel %vm32, %v29, 0.0
  %37 = vadd.xlane.f32.xlu0 %v36
  %v38 = vpop.xlane.xlu0 %37
  %v39 = vrcp.pop 32.0
  %v40 = vmul.f32 %v35, %v39
  %v41 = vmul.f32 %v38, %v39
  %v42 = vsub.f32 %v28, %v40
  %v43 = vsub.f32 %v29, %v41
  %v44 = vmul.f32 %v42, %v42
  %v45 = vmul.f32 %v43, %v43
  %v46 = vsel %vm32, %v44, 0.0
  %47 = vadd.xlane.f32.xlu0 %v46
  %v48 = vpop.xlane.xlu0 %47
  %v49 = vsel %vm32, %v45, 0.0
  %50 = vadd.xlane.f32.xlu0 %v49
  %v51 = vpop.xlane.xlu0 %50
  %v52 = vmul.f32 %v48, %v39
  %v53 = vmul.f32 %v51, %v39
  %v54 = vadd.f32 %v52, 1e-12
  %v55 = vadd.f32 %v53, 1e-12
  %v56 = vrsqrt.pop %v54
  %v57 = vrsqrt.pop %v55
  %v58 = vmul.f32 %v42, %v56
  %v59 = vmul.f32 %v43, %v57
  %v61 = vlaneseq
  %v62 = vshrl.u32 %v61, 7
  %v63 = vsub.s32 0, %v62
  %v64 = vrot.slane %v30, %v63
  %v66 = vmul.f32 %v64, %v58
  %v67 = vmul.f32 %v64, %v59
  %v69 = vlaneseq
  %v70 = vshrl.u32 %v69, 7
  %v71 = vsub.s32 0, %v70
  %v72 = vrot.slane %v31, %v71
  %v74 = vadd.f32 %v66, %v72
  %v75 = vadd.f32 %v67, %v72
  %76 = vst.msk [vmem:[%s5] sm:$0xff] %vm32, %v74
  %77 = vst.msk [vmem:[%s5 + $0x8] sm:$0xff] %vm32, %v75
  // Predicated region
  $region22: #{bertlm_forward.9} parent=0 // pred_check
    _
  $region23: #{bertlm_forward.9} parent=0 // pred_check_branch
    %79 = sbr.rel (0) target = $region25
  $region24: #{bertlm_forward.9} parent=0 // pred_region
    _
  $region25: #{bertlm_forward.9} parent=0 // pred_fallthru
    _
  // Predicated region
  $region26: #{bertlm_forward.9} parent=0 // pred_check
    _
  $region27: #{bertlm_forward.9} parent=0 // pred_check_branch
    %81 = sbr.rel (0) target = $region29
  $region28: #{bertlm_forward.9} parent=0 // pred_region
    _
  $region29: #{bertlm_forward.9} parent=0 // pred_fallthru
    _

// kernel: bertlm_forward.11
$region0: #{bertlm_forward.11}
  #allocation0 [shape = 'u32[]', space=smem, size = 0x4, offset = 0x4, fixed_abs, tag = 'smem constant byte address 0x4 - core index']
  #allocation1 [shape = 'u32[144,128]{1,0:T(1,128)}', space=vmem, size = 0x12000, scoped, tag = 'internal scratch']
  %s0 = inlined_call_operand.vmem [shape: f32[16,32], index: 0, kind: input, shape index: {}]
  %s1 = inlined_call_operand.vmem [shape: bf16[32,64], index: 1, kind: input, shape index: {}]
  %s2 = inlined_call_operand.vmem [shape: f32[1,64], index: 2, kind: input, shape index: {}]
  %s3 = inlined_call_operand.vmem [shape: bf16[64,32], index: 3, kind: input, shape index: {}]
  %s4 = inlined_call_operand.vmem [shape: f32[1,32], index: 4, kind: input, shape index: {}]
  %s5 = inlined_call_operand.vmem [shape: f32[1,32], index: 5, kind: input, shape index: {}]
  %s6 = inlined_call_operand.vmem [shape: f32[1,32], index: 6, kind: input, shape index: {}]
  %s7 = inlined_call_operand.vmem [shape: f32[16,32], index: 7, kind: output, shape index: {}]
  %s8 = sld [smem:[#allocation0]]
  $region38: #{bertlm_forward.11} parent=0
    _
  %s10 = ssub.s32 1, %s8
  %s11 = scalar_select 0, %s10, %s8
  // Predicated region
  $region2: #{bertlm_forward.11} parent=0 // pred_check
    _
  $region3: #{bertlm_forward.11} parent=0 // pred_check_branch
    %13 = sbr.rel (0) target = $region5
  $region4: #{bertlm_forward.11} parent=0 // pred_region
    _
  $region5: #{bertlm_forward.11} parent=0 // pred_fallthru
    _
  // Predicated region
  $region6: #{bertlm_forward.11} parent=0 // pred_check
    _
  $region7: #{bertlm_forward.11} parent=0 // pred_check_branch
    %15 = sbr.rel (0) target = $region9
  $region8: #{bertlm_forward.11} parent=0 // pred_region
    _
  $region9: #{bertlm_forward.11} parent=0 // pred_fallthru
    _
  // Predicated region
  $region10: #{bertlm_forward.11} parent=0 // pred_check
    _
  $region11: #{bertlm_forward.11} parent=0 // pred_check_branch
    %17 = sbr.rel (0) target = $region13
  $region12: #{bertlm_forward.11} parent=0 // pred_region
    _
  $region13: #{bertlm_forward.11} parent=0 // pred_fallthru
    _
  // Predicated region
  $region14: #{bertlm_forward.11} parent=0 // pred_check
    _
  $region15: #{bertlm_forward.11} parent=0 // pred_check_branch
    %19 = sbr.rel (0) target = $region17
  $region16: #{bertlm_forward.11} parent=0 // pred_region
    _
  $region17: #{bertlm_forward.11} parent=0 // pred_fallthru
    _
  // Predicated region
  $region18: #{bertlm_forward.11} parent=0 // pred_check
    _
  $region19: #{bertlm_forward.11} parent=0 // pred_check_branch
    %21 = sbr.rel (0) target = $region21
  $region20: #{bertlm_forward.11} parent=0 // pred_region
    _
  $region21: #{bertlm_forward.11} parent=0 // pred_fallthru
    _
  // Predicated region
  $region22: #{bertlm_forward.11} parent=0 // pred_check
    _
  $region23: #{bertlm_forward.11} parent=0 // pred_check_branch
    %23 = sbr.rel (0) target = $region25
  $region24: #{bertlm_forward.11} parent=0 // pred_region
    _
  $region25: #{bertlm_forward.11} parent=0 // pred_fallthru
    _
  // Predicated region
  $region26: #{bertlm_forward.11} parent=0 // pred_check
    _
  $region27: #{bertlm_forward.11} parent=0 // pred_check_branch
    %25 = sbr.rel (0) target = $region29
  $region28: #{bertlm_forward.11} parent=0 // pred_region
    _
  $region29: #{bertlm_forward.11} parent=0 // pred_fallthru
    _
  %v27 = vld [vmem:[%s0] sm:$0xff]
  %v28 = vld [vmem:[%s0 + $0x8] sm:$0xff]
  %v29 = vld [vmem:[%s1] sm:$0xf]
  %v30 = vld [vmem:[%s1 + $0x4] sm:$0xf]
  %v31 = vld [vmem:[%s1 + $0x8] sm:$0xf]
  %v32 = vld [vmem:[%s1 + $0xc] sm:$0xf]
  %v33 = vpack.c.bf16 %v28, %v27
  %v34 = vld [vmem:[%s2] sm:$0x1]
  %v36 = vlaneseq
  %v37 = vshrl.u32 %v36, 7
  %v38 = vsub.s32 0, %v37
  %v39 = vrot.slane %v34, %v38
  %v45 = vunpack.c.l.b16 %v29
  %v46 = vunpack.c.l.b16 %v30
  %v47 = vunpack.c.l.b16 %v31
  %v48 = vunpack.c.l.b16 %v32
  %v49 = vpack.c.b16 %v46, %v45
  %v50 = vpack.c.b16 %v48, %v47
  %vm53 = vcmask 261120
  %v55 = vsel %vm53, %v33, 0
  %57 = vmatprep.subr.bf16.mxu0 0
  %58 = vmatpush1.bf16.msra.mxu0 0
  %59 = vmatprep.subr.bf16.mxu0 0
  %60 = vmatpush1.bf16.msra.mxu0 0
  %61 = vmatprep.subr.bf16.mxu0 0
  %62 = vmatpush1.bf16.msra.mxu0 0
  %63 = vmatprep.subr.bf16.mxu0 0
  %64 = vmatpush1.bf16.msra.mxu0 0
  %65 = vmatprep.subr.bf16.mxu0 0
  %66 = vmatpush1.bf16.msra.mxu0 0
  %67 = vmatprep.subr.bf16.mxu0 0
  %68 = vmatpush1.bf16.msra.mxu0 0
  %69 = vmatprep.subr.bf16.mxu0 0
  %70 = vmatpush1.bf16.msra.mxu0 %v50
  %71 = vmatprep.subr.bf16.mxu0 0
  %72 = vmatpush1.bf16.msra.mxu0 %v49
  %73 = vmatprep.subr.bf16.mxu0 0
  %74 = vmatpush2.bf16.msra.mxu0 0
  %75 = vmatprep.subr.bf16.mxu0 0
  %76 = vmatpush2.bf16.msra.mxu0 0
  %77 = vmatprep.subr.bf16.mxu0 0
  %78 = vmatpush2.bf16.msra.mxu0 0
  %79 = vmatprep.subr.bf16.mxu0 0
  %80 = vmatpush2.bf16.msra.mxu0 0
  %81 = vmatprep.subr.bf16.mxu0 0
  %82 = vmatpush2.bf16.msra.mxu0 0
  %83 = vmatprep.subr.bf16.mxu0 0
  %84 = vmatpush2.bf16.msra.mxu0 0
  %85 = vmatprep.subr.bf16.mxu0 0
  %86 = vmatpush2.bf16.msra.mxu0 0
  %87 = vmatprep.subr.bf16.mxu0 0
  %88 = vmatpush2.bf16.msra.mxu0 0
  %89 = vmatprep.mubr.bf16.mxu0 0
  %90 = vmatmul.mubr.bf16.gmra.mxu0 %v55
  %v91 = vpop.f32.mrf.mxu0
  %v92 = vadd.f32 %v39, %v91
  %v93 = vpop.f32.mrf.mxu0
  %v94 = vpop.f32.mrf.mxu0
  %v95 = vadd.f32 %v39, %v94
  %v96 = vpop.f32.mrf.mxu0
  %97 = vdwg.mxu0
  %v98 = vmul.f32 %v92, 0.5
  %v99 = vmul.f32 %v95, 0.5
  %v100 = vmul.f32 %v92, 0.044715
  %v101 = vmul.f32 %v95, 0.044715
  %v102 = vmul.f32 %v100, %v92
  %v103 = vmul.f32 %v101, %v95
  %v104 = vmul.f32 %v102, %v92
  %v105 = vmul.f32 %v103, %v95
  %v106 = vadd.f32 %v92, %v104
  %v107 = vadd.f32 %v95, %v105
  %v108 = vmul.f32 %v106, 0.7978846
  %v109 = vmul.f32 %v107, 0.7978846
  %v110 = vtanh.pop %v108
  %v111 = vtanh.pop %v109
  %v112 = vadd.f32 %v110, 1.0
  %v113 = vadd.f32 %v111, 1.0
  %v114 = vmul.f32 %v98, %v112
  %v115 = vmul.f32 %v99, %v113
  %v116 = vld [vmem:[%s3] sm:$0xf]
  %v117 = vld [vmem:[%s3 + $0x4] sm:$0xf]
  %v118 = vld [vmem:[%s3 + $0x8] sm:$0xf]
  %v119 = vld [vmem:[%s3 + $0xc] sm:$0xf]
  %v120 = vld [vmem:[%s3 + $0x10] sm:$0xf]
  %v121 = vld [vmem:[%s3 + $0x14] sm:$0xf]
  %v122 = vld [vmem:[%s3 + $0x18] sm:$0xf]
  %v123 = vld [vmem:[%s3 + $0x1c] sm:$0xf]
  %v124 = vpack.c.bf16 %v115, %v114
  %v125 = vld [vmem:[%s4] sm:$0x1]
  %v127 = vlaneseq
  %v128 = vshrl.u32 %v127, 7
  %v129 = vsub.s32 0, %v128
  %v130 = vrot.slane %v125, %v129
  %v140 = vunpack.c.l.b16 %v116
  %v141 = vunpack.c.l.b16 %v117
  %v142 = vunpack.c.l.b16 %v118
  %v143 = vunpack.c.l.b16 %v119
  %v144 = vunpack.c.l.b16 %v120
  %v145 = vunpack.c.l.b16 %v121
  %v146 = vunpack.c.l.b16 %v122
  %v147 = vunpack.c.l.b16 %v123
  %v148 = vpack.c.b16 %v141, %v140
  %v149 = vpack.c.b16 %v143, %v142
  %v150 = vpack.c.b16 %v145, %v144
  %v151 = vpack.c.b16 %v147, %v146
  %vm156 = vcmask 523264
  %v158 = vsel %vm156, %v124, 0
  %160 = vmatprep.subr.bf16.mxu0 0
  %161 = vmatpush1.bf16.msra.mxu0 0
  %162 = vmatprep.subr.bf16.mxu0 0
  %163 = vmatpush1.bf16.msra.mxu0 0
  %164 = vmatprep.subr.bf16.mxu0 0
  %165 = vmatpush1.bf16.msra.mxu0 0
  %166 = vmatprep.subr.bf16.mxu0 0
  %167 = vmatpush1.bf16.msra.mxu0 0
  %168 = vmatprep.subr.bf16.mxu0 0
  %169 = vmatpush1.bf16.msra.mxu0 %v151
  %170 = vmatprep.subr.bf16.mxu0 0
  %171 = vmatpush1.bf16.msra.mxu0 %v150
  %172 = vmatprep.subr.bf16.mxu0 0
  %173 = vmatpush1.bf16.msra.mxu0 %v149
  %174 = vmatprep.subr.bf16.mxu0 0
  %175 = vmatpush1.bf16.msra.mxu0 %v148
  %176 = vmatprep.subr.bf16.mxu0 0
  %177 = vmatpush2.bf16.msra.mxu0 0
  %178 = vmatprep.subr.bf16.mxu0 0
  %179 = vmatpush2.bf16.msra.mxu0 0
  %180 = vmatprep.subr.bf16.mxu0 0
  %181 = vmatpush2.bf16.msra.mxu0 0
  %182 = vmatprep.subr.bf16.mxu0 0
  %183 = vmatpush2.bf16.msra.mxu0 0
  %184 = vmatprep.subr.bf16.mxu0 0
  %185 = vmatpush2.bf16.msra.mxu0 0
  %186 = vmatprep.subr.bf16.mxu0 0
  %187 = vmatpush2.bf16.msra.mxu0 0
  %188 = vmatprep.subr.bf16.mxu0 0
  %189 = vmatpush2.bf16.msra.mxu0 0
  %190 = vmatprep.subr.bf16.mxu0 0
  %191 = vmatpush2.bf16.msra.mxu0 0
  %192 = vmatprep.mubr.bf16.mxu0 0
  %193 = vmatmul.mubr.bf16.gmra.mxu0 %v158
  %v194 = vpop.f32.mrf.mxu0
  %v195 = vadd.f32 %v130, %v194
  %v196 = vpop.f32.mrf.mxu0
  %v197 = vpop.f32.mrf.mxu0
  %v198 = vadd.f32 %v130, %v197
  %v199 = vpop.f32.mrf.mxu0
  %200 = vdwg.mxu0
  %v201 = vadd.f32 %v195, %v27
  %v202 = vadd.f32 %v198, %v28
  %v203 = vld [vmem:[%s5] sm:$0x1]
  %v204 = vld [vmem:[%s6] sm:$0x1]
  %v205 = vsel %vm53, %v201, 0.0
  %206 = vadd.xlane.f32.xlu0 %v205
  %v207 = vpop.xlane.xlu0 %206
  %v208 = vsel %vm53, %v202, 0.0
  %209 = vadd.xlane.f32.xlu0 %v208
  %v210 = vpop.xlane.xlu0 %209
  %v211 = vrcp.pop 32.0
  %v212 = vmul.f32 %v207, %v211
  %v213 = vmul.f32 %v210, %v211
  %v214 = vsub.f32 %v201, %v212
  %v215 = vsub.f32 %v202, %v213
  %v216 = vmul.f32 %v214, %v214
  %v217 = vmul.f32 %v215, %v215
  %v218 = vsel %vm53, %v216, 0.0
  %219 = vadd.xlane.f32.xlu0 %v218
  %v220 = vpop.xlane.xlu0 %219
  %v221 = vsel %vm53, %v217, 0.0
  %222 = vadd.xlane.f32.xlu0 %v221
  %v223 = vpop.xlane.xlu0 %222
  %v224 = vmul.f32 %v220, %v211
  %v225 = vmul.f32 %v223, %v211
  %v226 = vadd.f32 %v224, 1e-12
  %v227 = vadd.f32 %v225, 1e-12
  %v228 = vrsqrt.pop %v226
  %v229 = vrsqrt.pop %v227
  %v230 = vmul.f32 %v214, %v228
  %v231 = vmul.f32 %v215, %v229
  %v233 = vlaneseq
  %v234 = vshrl.u32 %v233, 7
  %v235 = vsub.s32 0, %v234
  %v236 = vrot.slane %v203, %v235
  %v238 = vmul.f32 %v236, %v230
  %v239 = vmul.f32 %v236, %v231
  %v241 = vlaneseq
  %v242 = vshrl.u32 %v241, 7
  %v243 = vsub.s32 0, %v242
  %v244 = vrot.slane %v204, %v243
  %v246 = vadd.f32 %v238, %v244
  %v247 = vadd.f32 %v239, %v244
  %248 = vst.msk [vmem:[%s7] sm:$0xff] %vm53, %v246
  %249 = vst.msk [vmem:[%s7 + $0x8] sm:$0xff] %vm53, %v247
  // Predicated region
  $region30: #{bertlm_forward.11} parent=0 // pred_check
    _
  $region31: #{bertlm_forward.11} parent=0 // pred_check_branch
    %251 = sbr.rel (0) target = $region33
  $region32: #{bertlm_forward.11} parent=0 // pred_region
    _
  $region33: #{bertlm_forward.11} parent=0 // pred_fallthru
    _
  // Predicated region
  $region34: #{bertlm_forward.11} parent=0 // pred_check
    _
  $region35: #{bertlm_forward.11} parent=0 // pred_check_branch
    %253 = sbr.rel (0) target = $region37
  $region36: #{bertlm_forward.11} parent=0 // pred_region
    _
  $region37: #{bertlm_forward.11} parent=0 // pred_fallthru
    _

// kernel: bertlm_forward.10
$region0: #{bertlm_forward.10}
  #allocation0 [shape = 'u32[]', space=smem, size = 0x4, offset = 0x4, fixed_abs, tag = 'smem constant byte address 0x4 - core index']
  #allocation1 [shape = 'u32[144,128]{1,0:T(1,128)}', space=vmem, size = 0x12000, scoped, tag = 'internal scratch']
  %s0 = inlined_call_operand.vmem [shape: f32[2,8,32], index: 0, kind: input, shape index: {}]
  %s1 = inlined_call_operand.vmem [shape: bf16[32,96], index: 1, kind: input, shape index: {}]
  %s2 = inlined_call_operand.vmem [shape: f32[1,96], index: 2, kind: input, shape index: {}]
  %s3 = inlined_call_operand.vmem [shape: bf16[32,32], index: 3, kind: input, shape index: {}]
  %s4 = inlined_call_operand.vmem [shape: f32[1,32], index: 4, kind: input, shape index: {}]
  %s5 = inlined_call_operand.vmem [shape: f32[1,32], index: 5, kind: input, shape index: {}]
  %s6 = inlined_call_operand.vmem [shape: f32[1,32], index: 6, kind: input, shape index: {}]
  %s7 = inlined_call_operand.vmem [shape: f32[2,1,8], index: 7, kind: input, shape index: {}]
  %s8 = inlined_call_operand.vmem [shape: f32[2,8,32], index: 8, kind: output, shape index: {}]
  %s9 = sld [smem:[#allocation0]]
  $region65: #{bertlm_forward.10} parent=0
    _
  %s11 = ssub.s32 1, %s9
  %s12 = scalar_select 0, %s11, %s9
  loop: start=0, step=1, limit=4
  $region2: #{bertlm_forward.10} parent=0 // loop_pre_header
    _
  $region3: #{bertlm_forward.10} parent=0 // loop_header
    %s14 = sphi 0, %s18
    %p15 = scmp.ge.s32.totalorder %s14, 4
    %s24 = sphi 0, %s26
    %s27 = sphi 0, %s24
    %s28 = sphi 0, %s27
    %s44 = sphi 0, %s28
    %s48 = sphi 0, %s48
    %s50 = sphi 0, %s48
    %s51 = sphi 0, %s50
    %s65 = sphi 0, %s51
    %s69 = sphi 0, %s69
    %s71 = sphi 0, %s69
    %s72 = sphi 0, %s71
    %s86 = sphi 0, %s72
    %s90 = sphi 0, %s90
    %s92 = sphi 0, %s90
    %s93 = sphi 0, %s92
    %s107 = sphi 0, %s93
    %s111 = sphi 0, %s111
    %s113 = sphi 0, %s111
    %s114 = sphi 0, %s113
    %s128 = sphi 0, %s114
    %s132 = sphi 0, %s132
    %s134 = sphi 0, %s132
    %s135 = sphi 0, %s134
    %s149 = sphi 0, %s135
    %s153 = sphi 0, %s153
    %s155 = sphi 0, %s153
    %s156 = sphi 0, %s155
    %s170 = sphi 0, %s156
    %s176 = sphi 0, %s178
    %s179 = sphi 0, %s176
    %s180 = sphi 0, %s179
    %s196 = sphi 0, %s180
    %s202 = sphi 0, %s204
    %s205 = sphi 0, %s202
    %s206 = sphi 0, %s205
    %s222 = sphi 0, %s206
  $region4: #{bertlm_forward.10} parent=0 // loop_header_branch
    %17 = sbr.rel (%p15) target = $region8
  $region5: #{bertlm_forward.10} parent=0 // loop_body
    %s19 = ssub.s32 %s14, 1
    %s20 = ssub.s32 %s14, 2
    %s21 = sadd.s32 %s14, 1
    %s22 = ssub.s32 %s14, %s21
    %p23 = scmp.eq.s32.totalorder %s22, 0
    %s25 = sadd.s32 %s24, 1
    %s26 = scalar_select %p23, %s24, %s25
    %p29 = pneg %p23
    %p30 = scmp.eq.s32.totalorder %s14, 1
    %p31 = por %p29, %p30
    %p32 = scmp.ne.s32.totalorder %s24, %s27
    %p33 = scmp.eq.s32.totalorder %s14, 0
    %p34 = por %p32, %p33
    %p35 = scmp.ne.s32.totalorder %s24, %s27
    %p36 = scmp.eq.s32.totalorder %s19, 1
    %p37 = por %p35, %p36
    %p38 = scmp.ne.s32.totalorder %s27, %s28
    %p39 = scmp.eq.s32.totalorder %s19, 0
    %p40 = por %p38, %p39
    %p41 = scmp.ne.s32.totalorder %s27, %s28
    %p42 = scmp.eq.s32.totalorder %s20, 1
    %p43 = por %p41, %p42
    %p45 = scmp.ne.s32.totalorder %s28, %s44
    %p46 = scmp.eq.s32.totalorder %s20, 0
    %p47 = por %p45, %p46
    %s49 = sadd.s32 %s48, 1
    %p52 = scmp.eq.s32.totalorder %s14, 1
    %p53 = scmp.ne.s32.totalorder %s48, %s50
    %p54 = scmp.eq.s32.totalorder %s14, 0
    %p55 = por %p53, %p54
    %p56 = scmp.ne.s32.totalorder %s48, %s50
    %p57 = scmp.eq.s32.totalorder %s19, 1
    %p58 = por %p56, %p57
    %p59 = scmp.ne.s32.totalorder %s50, %s51
    %p60 = scmp.eq.s32.totalorder %s19, 0
    %p61 = por %p59, %p60
    %p62 = scmp.ne.s32.totalorder %s50, %s51
    %p63 = scmp.eq.s32.totalorder %s20, 1
    %p64 = por %p62, %p63
    %p66 = scmp.ne.s32.totalorder %s51, %s65
    %p67 = scmp.eq.s32.totalorder %s20, 0
    %p68 = por %p66, %p67
    %s70 = sadd.s32 %s69, 1
    %p73 = scmp.eq.s32.totalorder %s14, 1
    %p74 = scmp.ne.s32.totalorder %s69, %s71
    %p75 = scmp.eq.s32.totalorder %s14, 0
    %p76 = por %p74, %p75
    %p77 = scmp.ne.s32.totalorder %s69, %s71
    %p78 = scmp.eq.s32.totalorder %s19, 1
    %p79 = por %p77, %p78
    %p80 = scmp.ne.s32.totalorder %s71, %s72
    %p81 = scmp.eq.s32.totalorder %s19, 0
    %p82 = por %p80, %p81
    %p83 = scmp.ne.s32.totalorder %s71, %s72
    %p84 = scmp.eq.s32.totalorder %s20, 1
    %p85 = por %p83, %p84
    %p87 = scmp.ne.s32.totalorder %s72, %s86
    %p88 = scmp.eq.s32.totalorder %s20, 0
    %p89 = por %p87, %p88
    %s91 = sadd.s32 %s90, 1
    %p94 = scmp.eq.s32.totalorder %s14, 1
    %p95 = scmp.ne.s32.totalorder %s90, %s92
    %p96 = scmp.eq.s32.totalorder %s14, 0
    %p97 = por %p95, %p96
    %p98 = scmp.ne.s32.totalorder %s90, %s92
    %p99 = scmp.eq.s32.totalorder %s19, 1
    %p100 = por %p98, %p99
    %p101 = scmp.ne.s32.totalorder %s92, %s93
    %p102 = scmp.eq.s32.totalorder %s19, 0
    %p103 = por %p101, %p102
    %p104 = scmp.ne.s32.totalorder %s92, %s93
    %p105 = scmp.eq.s32.totalorder %s20, 1
    %p106 = por %p104, %p105
    %p108 = scmp.ne.s32.totalorder %s93, %s107
    %p109 = scmp.eq.s32.totalorder %s20, 0
    %p110 = por %p108, %p109
    %s112 = sadd.s32 %s111, 1
    %p115 = scmp.eq.s32.totalorder %s14, 1
    %p116 = scmp.ne.s32.totalorder %s111, %s113
    %p117 = scmp.eq.s32.totalorder %s14, 0
    %p118 = por %p116, %p117
    %p119 = scmp.ne.s32.totalorder %s111, %s113
    %p120 = scmp.eq.s32.totalorder %s19, 1
    %p121 = por %p119, %p120
    %p122 = scmp.ne.s32.totalorder %s113, %s114
    %p123 = scmp.eq.s32.totalorder %s19, 0
    %p124 = por %p122, %p123
    %p125 = scmp.ne.s32.totalorder %s113, %s114
    %p126 = scmp.eq.s32.totalorder %s20, 1
    %p127 = por %p125, %p126
    %p129 = scmp.ne.s32.totalorder %s114, %s128
    %p130 = scmp.eq.s32.totalorder %s20, 0
    %p131 = por %p129, %p130
    %s133 = sadd.s32 %s132, 1
    %p136 = scmp.eq.s32.totalorder %s14, 1
    %p137 = scmp.ne.s32.totalorder %s132, %s134
    %p138 = scmp.eq.s32.totalorder %s14, 0
    %p139 = por %p137, %p138
    %p140 = scmp.ne.s32.totalorder %s132, %s134
    %p141 = scmp.eq.s32.totalorder %s19, 1
    %p142 = por %p140, %p141
    %p143 = scmp.ne.s32.totalorder %s134, %s135
    %p144 = scmp.eq.s32.totalorder %s19, 0
    %p145 = por %p143, %p144
    %p146 = scmp.ne.s32.totalorder %s134, %s135
    %p147 = scmp.eq.s32.totalorder %s20, 1
    %p148 = por %p146, %p147
    %p150 = scmp.ne.s32.totalorder %s135, %s149
    %p151 = scmp.eq.s32.totalorder %s20, 0
    %p152 = por %p150, %p151
    %s154 = sadd.s32 %s153, 1
    %p157 = scmp.eq.s32.totalorder %s14, 1
    %p158 = scmp.ne.s32.totalorder %s153, %s155
    %p159 = scmp.eq.s32.totalorder %s14, 0
    %p160 = por %p158, %p159
    %p161 = scmp.ne.s32.totalorder %s153, %s155
    %p162 = scmp.eq.s32.totalorder %s19, 1
    %p163 = por %p161, %p162
    %p164 = scmp.ne.s32.totalorder %s155, %s156
    %p165 = scmp.eq.s32.totalorder %s19, 0
    %p166 = por %p164, %p165
    %p167 = scmp.ne.s32.totalorder %s155, %s156
    %p168 = scmp.eq.s32.totalorder %s20, 1
    %p169 = por %p167, %p168
    %p171 = scmp.ne.s32.totalorder %s156, %s170
    %p172 = scmp.eq.s32.totalorder %s20, 0
    %p173 = por %p171, %p172
    %s174 = ssub.s32 %s14, %s21
    %p175 = scmp.eq.s32.totalorder %s174, 0
    %s177 = sadd.s32 %s176, 1
    %s178 = scalar_select %p175, %s176, %s177
    %p181 = pneg %p175
    %p182 = scmp.eq.s32.totalorder %s14, 1
    %p183 = por %p181, %p182
    %p184 = scmp.ne.s32.totalorder %s176, %s179
    %p185 = scmp.eq.s32.totalorder %s14, 0
    %p186 = por %p184, %p185
    %p187 = scmp.ne.s32.totalorder %s176, %s179
    %p188 = scmp.eq.s32.totalorder %s19, 1
    %p189 = por %p187, %p188
    %p190 = scmp.ne.s32.totalorder %s179, %s180
    %p191 = scmp.eq.s32.totalorder %s19, 0
    %p192 = por %p190, %p191
    %p193 = scmp.ne.s32.totalorder %s179, %s180
    %p194 = scmp.eq.s32.totalorder %s20, 1
    %p195 = por %p193, %p194
    %p197 = scmp.ne.s32.totalorder %s180, %s196
    %p198 = scmp.eq.s32.totalorder %s20, 0
    %p199 = por %p197, %p198
    %s200 = ssub.s32 %s14, %s21
    %p201 = scmp.eq.s32.totalorder %s200, 0
    %s203 = sadd.s32 %s202, 1
    %s204 = scalar_select %p201, %s202, %s203
    %p207 = pneg %p201
    %p208 = scmp.eq.s32.totalorder %s14, 1
    %p209 = por %p207, %p208
    %p210 = scmp.ne.s32.totalorder %s202, %s205
    %p211 = scmp.eq.s32.totalorder %s14, 0
    %p212 = por %p210, %p211
    %p213 = scmp.ne.s32.totalorder %s202, %s205
    %p214 = scmp.eq.s32.totalorder %s19, 1
    %p215 = por %p213, %p214
    %p216 = scmp.ne.s32.totalorder %s205, %s206
    %p217 = scmp.eq.s32.totalorder %s19, 0
    %p218 = por %p216, %p217
    %p219 = scmp.ne.s32.totalorder %s205, %s206
    %p220 = scmp.eq.s32.totalorder %s20, 1
    %p221 = por %p219, %p220
    %p223 = scmp.ne.s32.totalorder %s206, %s222
    %p224 = scmp.eq.s32.totalorder %s20, 0
    %p225 = por %p223, %p224
    %p226 = scmp.le.s32.totalorder 1, %s14
    %p227 = scmp.lt.s32.totalorder %s14, 3
    %p228 = pnand %p226, %p227
    %p229 = pneg %p228
    // Predicated region
    $region9: #{bertlm_forward.10} parent=5 // pred_check
      _
    $region10: #{bertlm_forward.10} parent=5 // pred_check_branch
      %231 = sbr.rel (%p228) target = $region12
    $region11: #{bertlm_forward.10} parent=5 // pred_region
      %s232 = ssub.s32 %s14, 1
      // Predicated region
      $region13: #{bertlm_forward.10} parent=11 // pred_check
        %p233 = pneg %p61
      $region14: #{bertlm_forward.10} parent=11 // pred_check_branch
        %235 = sbr.rel (%p233) target = $region16
      $region15: #{bertlm_forward.10} parent=11 // pred_region
        _
      $region16: #{bertlm_forward.10} parent=11 // pred_fallthru
        _
      // Predicated region
      $region17: #{bertlm_forward.10} parent=11 // pred_check
        %p236 = pneg %p82
      $region18: #{bertlm_forward.10} parent=11 // pred_check_branch
        %238 = sbr.rel (%p236) target = $region20
      $region19: #{bertlm_forward.10} parent=11 // pred_region
        _
      $region20: #{bertlm_forward.10} parent=11 // pred_fallthru
        _
      // Predicated region
      $region21: #{bertlm_forward.10} parent=11 // pred_check
        %p239 = pneg %p103
      $region22: #{bertlm_forward.10} parent=11 // pred_check_branch
        %241 = sbr.rel (%p239) target = $region24
      $region23: #{bertlm_forward.10} parent=11 // pred_region
        _
      $region24: #{bertlm_forward.10} parent=11 // pred_fallthru
        _
      // Predicated region
      $region25: #{bertlm_forward.10} parent=11 // pred_check
        %p242 = pneg %p124
      $region26: #{bertlm_forward.10} parent=11 // pred_check_branch
        %244 = sbr.rel (%p242) target = $region28
      $region27: #{bertlm_forward.10} parent=11 // pred_region
        _
      $region28: #{bertlm_forward.10} parent=11 // pred_fallthru
        _
      // Predicated region
      $region29: #{bertlm_forward.10} parent=11 // pred_check
        %p245 = pneg %p145
      $region30: #{bertlm_forward.10} parent=11 // pred_check_branch
        %247 = sbr.rel (%p245) target = $region32
      $region31: #{bertlm_forward.10} parent=11 // pred_region
        _
      $region32: #{bertlm_forward.10} parent=11 // pred_fallthru
        _
      // Predicated region
      $region33: #{bertlm_forward.10} parent=11 // pred_check
        %p248 = pneg %p166
      $region34: #{bertlm_forward.10} parent=11 // pred_check_branch
        %250 = sbr.rel (%p248) target = $region36
      $region35: #{bertlm_forward.10} parent=11 // pred_region
        _
      $region36: #{bertlm_forward.10} parent=11 // pred_fallthru
        _
    $region12: #{bertlm_forward.10} parent=5 // pred_fallthru
      _
    %p251 = scmp.lt.s32.totalorder %s14, 2
    // Predicated region
    $region37: #{bertlm_forward.10} parent=5 // pred_check
      %p252 = pneg %p251
    $region38: #{bertlm_forward.10} parent=5 // pred_check_branch
      %254 = sbr.rel (%p252) target = $region40
    $region39: #{bertlm_forward.10} parent=5 // pred_region
      // Predicated region
      $region41: #{bertlm_forward.10} parent=39 // pred_check
        %p255 = pneg %p34
      $region42: #{bertlm_forward.10} parent=39 // pred_check_branch
        %257 = sbr.rel (%p255) target = $region44
      $region43: #{bertlm_forward.10} parent=39 // pred_region
        %p258 = scmp.lt.s32.totalorder %s14, 1
        %s259 = scalar_select %p258, %s14, 1
        %s260 = smul.addr %s259, 8
        %s261 = scalar_lea.vmem %s0, %s260
      $region44: #{bertlm_forward.10} parent=39 // pred_fallthru
        _
      // Predicated region
      $region45: #{bertlm_forward.10} parent=39 // pred_check
        %p262 = pneg %p186
      $region46: #{bertlm_forward.10} parent=39 // pred_check_branch
        %264 = sbr.rel (%p262) target = $region48
      $region47: #{bertlm_forward.10} parent=39 // pred_region
        %p265 = scmp.lt.s32.totalorder %s14, 1
        %s266 = scalar_select %p265, %s14, 1
        %s267 = scalar_lea.vmem %s7, %s266
      $region48: #{bertlm_forward.10} parent=39 // pred_fallthru
        _
    $region40: #{bertlm_forward.10} parent=5 // pred_fallthru
      _
    %p268 = scmp.le.s32.totalorder 1, %s14
    %p269 = scmp.lt.s32.totalorder %s14, 3
    %p270 = pnand %p268, %p269
    %p271 = pneg %p270
    // Predicated region
    $region49: #{bertlm_forward.10} parent=5 // pred_check
      _
    $region50: #{bertlm_forward.10} parent=5 // pred_check_branch
      %273 = sbr.rel (%p270) target = $region52
    $region51: #{bertlm_forward.10} parent=5 // pred_region
      %s274 = ssub.s32 %s14, 1
      %p275 = scmp.lt.s32.totalorder %s19, 1
      %s276 = scalar_select %p275, %s19, 1
      %s277 = smul.addr %s276, 8
      %s278 = scalar_lea.vmem %s0, %s277
      %p279 = pneg %p40
      %p280 = pneg %p37
      %p281 = pneg %p61
      %p282 = pneg %p58
      %p283 = pneg %p82
      %p284 = pneg %p79
      %p285 = pneg %p103
      %p286 = pneg %p100
      %p287 = pneg %p124
      %p288 = pneg %p121
      %p289 = pneg %p145
      %p290 = pneg %p142
      %p291 = pneg %p166
      %p292 = pneg %p163
      %p293 = scmp.lt.s32.totalorder %s19, 1
      %s294 = scalar_select %p293, %s19, 1
      %s295 = scalar_lea.vmem %s7, %s294
      %p296 = pneg %p192
      %p297 = pneg %p189
      %p298 = pneg %p218
      %p299 = pneg %p215
      %p300 = scmp.lt.s32.totalorder %s19, 1
      %s301 = scalar_select %p300, %s19, 1
      %s302 = smul.addr %s301, 8
      %s303 = scalar_lea.vmem %s8, %s302
      %p304 = scmp.lt.s32.totalorder %s19, 1
      %s305 = scalar_select %p304, %s19, 1
      %s306 = smul.addr %s305, 8
      %s307 = scalar_lea.vmem %s0, %s306
      %p308 = scmp.lt.s32.totalorder %s19, 1
      %s309 = scalar_select %p308, %s19, 1
      %s310 = scalar_lea.vmem %s7, %s309
      %p311 = scmp.lt.s32.totalorder %s19, 1
      %s312 = scalar_select %p311, %s19, 1
      %s313 = smul.addr %s312, 8
      %s314 = scalar_lea.vmem %s8, %s313
      %v316 = vld [vmem:[%s307] sm:$0xff]
      %v317 = vld [vmem:[%s310] sm:$0x1]
      %v318 = vld [vmem:[%s1] sm:$0xf]
      %v319 = vld [vmem:[%s1 + $0x4] sm:$0xf]
      %v320 = vld [vmem:[%s1 + $0x8] sm:$0xf]
      %v321 = vld [vmem:[%s1 + $0xc] sm:$0xf]
      %v322 = vpack.c.bf16 %v316, %v316
      %v323 = vld [vmem:[%s2] sm:$0x1]
      %v325 = vlaneseq
      %v326 = vshrl.u32 %v325, 7
      %v327 = vsub.s32 0, %v326
      %v328 = vrot.slane %v323, %v327
      %v334 = vunpack.c.l.b16 %v318
      %v335 = vunpack.c.l.b16 %v319
      %v336 = vunpack.c.l.b16 %v320
      %v337 = vunpack.c.l.b16 %v321
      %v338 = vpack.c.b16 %v335, %v334
      %v339 = vpack.c.b16 %v337, %v336
      %vm342 = vcmask 261120
      %v344 = vsel %vm342, %v322, 0
      %346 = vmatprep.subr.bf16.mxu0 0
      %347 = vmatpush1.bf16.msra.mxu0 0
      %348 = vmatprep.subr.bf16.mxu0 0
      %349 = vmatpush1.bf16.msra.mxu0 0
      %350 = vmatprep.subr.bf16.mxu0 0
      %351 = vmatpush1.bf16.msra.mxu0 0
      %352 = vmatprep.subr.bf16.mxu0 0
      %353 = vmatpush1.bf16.msra.mxu0 0
      %354 = vmatprep.subr.bf16.mxu0 0
      %355 = vmatpush1.bf16.msra.mxu0 0
      %356 = vmatprep.subr.bf16.mxu0 0
      %357 = vmatpush1.bf16.msra.mxu0 0
      %358 = vmatprep.subr.bf16.mxu0 0
      %359 = vmatpush1.bf16.msra.mxu0 %v339
      %360 = vmatprep.subr.bf16.mxu0 0
      %361 = vmatpush1.bf16.msra.mxu0 %v338
      %362 = vmatprep.subr.bf16.mxu0 0
      %363 = vmatpush2.bf16.msra.mxu0 0
      %364 = vmatprep.subr.bf16.mxu0 0
      %365 = vmatpush2.bf16.msra.mxu0 0
      %366 = vmatprep.subr.bf16.mxu0 0
      %367 = vmatpush2.bf16.msra.mxu0 0
      %368 = vmatprep.subr.bf16.mxu0 0
      %369 = vmatpush2.bf16.msra.mxu0 0
      %370 = vmatprep.subr.bf16.mxu0 0
      %371 = vmatpush2.bf16.msra.mxu0 0
      %372 = vmatprep.subr.bf16.mxu0 0
      %373 = vmatpush2.bf16.msra.mxu0 0
      %374 = vmatprep.subr.bf16.mxu0 0
      %375 = vmatpush2.bf16.msra.mxu0 0
      %376 = vmatprep.subr.bf16.mxu0 0
      %377 = vmatpush2.bf16.msra.mxu0 0
      %378 = vmatprep.mubr.bf16.mxu0 0
      %379 = vmatmul.mubr.bf16.gmra.mxu0 %v344
      %v380 = vpop.f32.mrf.mxu0
      %v381 = vadd.f32 %v328, %v380
      %v382 = vpop.f32.mrf.mxu0
      %v383 = vpop.f32.mrf.mxu0
      %v384 = vpop.f32.mrf.mxu0
      %385 = vdwg.mxu0
      %v386 = vmul.f32 %v381, 0.35355338
      %v387 = vpack.c.bf16 %v386, %v386
      %v388 = vpack.c.bf16 %v381, %v381
      %v390 = vlaneseq
      %v391 = vshrl.u32 %v390, 7
      %v392 = vsub.s32 0, %v391
      %v393 = vrot.slane %v317, %v392
      %396 = vrot.lane.b32.xlu0 %v388, 96
      %v397 = vpop.permute.xlu0 %396
      %vm398 = vcmask 64512
      %v400 = vsel %vm398, %v387, 0
      %v403 = vsel %vm398, %v397, 0
      %405 = vmatprep.subr.bf16.mxu0 0
      %406 = vmatpush1.bf16.xpose.msra.mxu0 0
      %407 = vmatprep.subr.bf16.mxu0 0
      %408 = vmatpush1.bf16.xpose.msra.mxu0 0
      %409 = vmatprep.subr.bf16.mxu0 0
      %410 = vmatpush1.bf16.xpose.msra.mxu0 0
      %411 = vmatprep.subr.bf16.mxu0 0
      %412 = vmatpush1.bf16.xpose.msra.mxu0 0
      %413 = vmatprep.subr.bf16.mxu0 0
      %414 = vmatpush1.bf16.xpose.msra.mxu0 0
      %415 = vmatprep.subr.bf16.mxu0 0
      %416 = vmatpush1.bf16.xpose.msra.mxu0 0
      %417 = vmatprep.subr.bf16.mxu0 0
      %418 = vmatpush1.bf16.xpose.msra.mxu0 0
      %419 = vmatprep.subr.bf16.mxu0 0
      %420 = vmatpush1.bf16.xpose.msra.mxu0 %v403
      %421 = vmatprep.subr.bf16.mxu0 0
      %422 = vmatpush2.bf16.xpose.msra.mxu0 0
      %423 = vmatprep.subr.bf16.mxu0 0
      %424 = vmatpush2.bf16.xpose.msra.mxu0 0
      %425 = vmatprep.subr.bf16.mxu0 0
      %426 = vmatpush2.bf16.xpose.msra.mxu0 0
      %427 = vmatprep.subr.bf16.mxu0 0
      %428 = vmatpush2.bf16.xpose.msra.mxu0 0
      %429 = vmatprep.subr.bf16.mxu0 0
      %430 = vmatpush2.bf16.xpose.msra.mxu0 0
      %431 = vmatprep.subr.bf16.mxu0 0
      %432 = vmatpush2.bf16.xpose.msra.mxu0 0
      %433 = vmatprep.subr.bf16.mxu0 0
      %434 = vmatpush2.bf16.xpose.msra.mxu0 0
      %435 = vmatprep.subr.bf16.mxu0 0
      %436 = vmatpush2.bf16.xpose.msra.mxu0 0
      %437 = vmatprep.mubr.bf16.mxu0 0
      %438 = vmatmul.mubr.bf16.gmra.mxu0 %v400
      %v439 = vpop.f32.mrf.mxu0
      %v440 = vadd.f32 %v393, %v439
      %v441 = vpop.f32.mrf.mxu0
      %v442 = vpop.f32.mrf.mxu0
      %v443 = vpop.f32.mrf.mxu0
      %444 = vdwg.mxu0
      %v445 = vsel %vm398, %v440, -inf
      %446 = vmax.xlane.f32.xlu0 %v445
      %v447 = vpop.xlane.xlu0 %446
      %v448 = vsub.f32 %v440, %v447
      %v449 = vmul.f32 %v448, 1.442695
      %v450 = vpow.pop %v449
      %v451 = vsel %vm398, %v450, 0.0
      %452 = vadd.xlane.f32.xlu0 %v451
      %v453 = vpop.xlane.xlu0 %452
      %v454 = vrcp.pop %v453
      %v455 = vmul.f32 %v450, %v454
      %v456 = vpack.c.bf16 %v455, %v455
      %457 = vrot.lane.b32.xlu0 %v388, 64
      %v458 = vpop.permute.xlu0 %457
      %v460 = vsel %vm398, %v456, 0
      %vm462 = vcmask 1043456
      %v464 = vsel %vm462, %v458, 0
      %466 = vmatprep.subr.bf16.mxu0 0
      %467 = vmatpush1.bf16.msra.mxu0 0
      %468 = vmatprep.subr.bf16.mxu0 0
      %469 = vmatpush1.bf16.msra.mxu0 0
      %470 = vmatprep.subr.bf16.mxu0 0
      %471 = vmatpush1.bf16.msra.mxu0 0
      %472 = vmatprep.subr.bf16.mxu0 0
      %473 = vmatpush1.bf16.msra.mxu0 0
      %474 = vmatprep.subr.bf16.mxu0 0
      %475 = vmatpush1.bf16.msra.mxu0 0
      %476 = vmatprep.subr.bf16.mxu0 0
      %477 = vmatpush1.bf16.msra.mxu0 0
      %478 = vmatprep.subr.bf16.mxu0 0
      %479 = vmatpush1.bf16.msra.mxu0 0
      %480 = vmatprep.subr.bf16.mxu0 0
      %481 = vmatpush1.bf16.msra.mxu0 %v464
      %482 = vmatprep.subr.bf16.mxu0 0
      %483 = vmatpush2.bf16.msra.mxu0 0
      %484 = vmatprep.subr.bf16.mxu0 0
      %485 = vmatpush2.bf16.msra.mxu0 0
      %486 = vmatprep.subr.bf16.mxu0 0
      %487 = vmatpush2.bf16.msra.mxu0 0
      %488 = vmatprep.subr.bf16.mxu0 0
      %489 = vmatpush2.bf16.msra.mxu0 0
      %490 = vmatprep.subr.bf16.mxu0 0
      %491 = vmatpush2.bf16.msra.mxu0 0
      %492 = vmatprep.subr.bf16.mxu0 0
      %493 = vmatpush2.bf16.msra.mxu0 0
      %494 = vmatprep.subr.bf16.mxu0 0
      %495 = vmatpush2.bf16.msra.mxu0 0
      %496 = vmatprep.subr.bf16.mxu0 0
      %497 = vmatpush2.bf16.msra.mxu0 0
      %498 = vmatprep.mubr.bf16.mxu0 0
      %499 = vmatmul.mubr.bf16.gmra.mxu0 %v460
      %v500 = vpop.f32.mrf.mxu0
      %v501 = vadd.f32 0.0, %v500
      %v502 = vpop.f32.mrf.mxu0
      %v503 = vpop.f32.mrf.mxu0
      %v504 = vpop.f32.mrf.mxu0
      %505 = vdwg.mxu0
      %507 = vrot.lane.b32.xlu0 %v387, 120
      %v508 = vpop.permute.xlu0 %507
      %509 = vrot.lane.b32.xlu0 %v388, 88
      %v510 = vpop.permute.xlu0 %509
      %v512 = vsel %vm398, %v508, 0
      %v515 = vsel %vm398, %v510, 0
      %517 = vmatprep.subr.bf16.mxu0 0
      %518 = vmatpush1.bf16.xpose.msra.mxu0 0
      %519 = vmatprep.subr.bf16.mxu0 0
      %520 = vmatpush1.bf16.xpose.msra.mxu0 0
      %521 = vmatprep.subr.bf16.mxu0 0
      %522 = vmatpush1.bf16.xpose.msra.mxu0 0
      %523 = vmatprep.subr.bf16.mxu0 0
      %524 = vmatpush1.bf16.xpose.msra.mxu0 0
      %525 = vmatprep.subr.bf16.mxu0 0
      %526 = vmatpush1.bf16.xpose.msra.mxu0 0
      %527 = vmatprep.subr.bf16.mxu0 0
      %528 = vmatpush1.bf16.xpose.msra.mxu0 0
      %529 = vmatprep.subr.bf16.mxu0 0
      %530 = vmatpush1.bf16.xpose.msra.mxu0 0
      %531 = vmatprep.subr.bf16.mxu0 0
      %532 = vmatpush1.bf16.xpose.msra.mxu0 %v515
      %533 = vmatprep.subr.bf16.mxu0 0
      %534 = vmatpush2.bf16.xpose.msra.mxu0 0
      %535 = vmatprep.subr.bf16.mxu0 0
      %536 = vmatpush2.bf16.xpose.msra.mxu0 0
      %537 = vmatprep.subr.bf16.mxu0 0
      %538 = vmatpush2.bf16.xpose.msra.mxu0 0
      %539 = vmatprep.subr.bf16.mxu0 0
      %540 = vmatpush2.bf16.xpose.msra.mxu0 0
      %541 = vmatprep.subr.bf16.mxu0 0
      %542 = vmatpush2.bf16.xpose.msra.mxu0 0
      %543 = vmatprep.subr.bf16.mxu0 0
      %544 = vmatpush2.bf16.xpose.msra.mxu0 0
      %545 = vmatprep.subr.bf16.mxu0 0
      %546 = vmatpush2.bf16.xpose.msra.mxu0 0
      %547 = vmatprep.subr.bf16.mxu0 0
      %548 = vmatpush2.bf16.xpose.msra.mxu0 0
      %549 = vmatprep.mubr.bf16.mxu0 0
      %550 = vmatmul.mubr.bf16.gmra.mxu0 %v512
      %v551 = vpop.f32.mrf.mxu0
      %v552 = vadd.f32 %v393, %v551
      %v553 = vpop.f32.mrf.mxu0
      %v554 = vpop.f32.mrf.mxu0
      %v555 = vpop.f32.mrf.mxu0
      %556 = vdwg.mxu0
      %v557 = vsel %vm398, %v552, -inf
      %558 = vmax.xlane.f32.xlu0 %v557
      %v559 = vpop.xlane.xlu0 %558
      %v560 = vsub.f32 %v552, %v559
      %v561 = vmul.f32 %v560, 1.442695
      %v562 = vpow.pop %v561
      %v563 = vsel %vm398, %v562, 0.0
      %564 = vadd.xlane.f32.xlu0 %v563
      %v565 = vpop.xlane.xlu0 %564
      %v566 = vrcp.pop %v565
      %v567 = vmul.f32 %v562, %v566
      %v568 = vpack.c.bf16 %v567, %v567
      %569 = vrot.lane.b32.xlu0 %v388, 56
      %v570 = vpop.permute.xlu0 %569
      %v572 = vsel %vm398, %v568, 0
      %v575 = vsel %vm462, %v570, 0
      %577 = vmatprep.subr.bf16.mxu0 0
      %578 = vmatpush1.bf16.msra.mxu0 0
      %579 = vmatprep.subr.bf16.mxu0 0
      %580 = vmatpush1.bf16.msra.mxu0 0
      %581 = vmatprep.subr.bf16.mxu0 0
      %582 = vmatpush1.bf16.msra.mxu0 0
      %583 = vmatprep.subr.bf16.mxu0 0
      %584 = vmatpush1.bf16.msra.mxu0 0
      %585 = vmatprep.subr.bf16.mxu0 0
      %586 = vmatpush1.bf16.msra.mxu0 0
      %587 = vmatprep.subr.bf16.mxu0 0
      %588 = vmatpush1.bf16.msra.mxu0 0
      %589 = vmatprep.subr.bf16.mxu0 0
      %590 = vmatpush1.bf16.msra.mxu0 0
      %591 = vmatprep.subr.bf16.mxu0 0
      %592 = vmatpush1.bf16.msra.mxu0 %v575
      %593 = vmatprep.subr.bf16.mxu0 0
      %594 = vmatpush2.bf16.msra.mxu0 0
      %595 = vmatprep.subr.bf16.mxu0 0
      %596 = vmatpush2.bf16.msra.mxu0 0
      %597 = vmatprep.subr.bf16.mxu0 0
      %598 = vmatpush2.bf16.msra.mxu0 0
      %599 = vmatprep.subr.bf16.mxu0 0
      %600 = vmatpush2.bf16.msra.mxu0 0
      %601 = vmatprep.subr.bf16.mxu0 0
      %602 = vmatpush2.bf16.msra.mxu0 0
      %603 = vmatprep.subr.bf16.mxu0 0
      %604 = vmatpush2.bf16.msra.mxu0 0
      %605 = vmatprep.subr.bf16.mxu0 0
      %606 = vmatpush2.bf16.msra.mxu0 0
      %607 = vmatprep.subr.bf16.mxu0 0
      %608 = vmatpush2.bf16.msra.mxu0 0
      %609 = vmatprep.mubr.bf16.mxu0 0
      %610 = vmatmul.mubr.bf16.gmra.mxu0 %v572
      %v611 = vpop.f32.mrf.mxu0
      %v612 = vadd.f32 0.0, %v611
      %v613 = vpop.f32.mrf.mxu0
      %v614 = vpop.f32.mrf.mxu0
      %v615 = vpop.f32.mrf.mxu0
      %616 = vdwg.mxu0
      %617 = vrot.lane.b32.xlu0 %v387, 112
      %v618 = vpop.permute.xlu0 %617
      %619 = vrot.lane.b32.xlu0 %v388, 80
      %v620 = vpop.permute.xlu0 %619
      %v622 = vsel %vm398, %v618, 0
      %v625 = vsel %vm398, %v620, 0
      %627 = vmatprep.subr.bf16.mxu0 0
      %628 = vmatpush1.bf16.xpose.msra.mxu0 0
      %629 = vmatprep.subr.bf16.mxu0 0
      %630 = vmatpush1.bf16.xpose.msra.mxu0 0
      %631 = vmatprep.subr.bf16.mxu0 0
      %632 = vmatpush1.bf16.xpose.msra.mxu0 0
      %633 = vmatprep.subr.bf16.mxu0 0
      %634 = vmatpush1.bf16.xpose.msra.mxu0 0
      %635 = vmatprep.subr.bf16.mxu0 0
      %636 = vmatpush1.bf16.xpose.msra.mxu0 0
      %637 = vmatprep.subr.bf16.mxu0 0
      %638 = vmatpush1.bf16.xpose.msra.mxu0 0
      %639 = vmatprep.subr.bf16.mxu0 0
      %640 = vmatpush1.bf16.xpose.msra.mxu0 0
      %641 = vmatprep.subr.bf16.mxu0 0
      %642 = vmatpush1.bf16.xpose.msra.mxu0 %v625
      %643 = vmatprep.subr.bf16.mxu0 0
      %644 = vmatpush2.bf16.xpose.msra.mxu0 0
      %645 = vmatprep.subr.bf16.mxu0 0
      %646 = vmatpush2.bf16.xpose.msra.mxu0 0
      %647 = vmatprep.subr.bf16.mxu0 0
      %648 = vmatpush2.bf16.xpose.msra.mxu0 0
      %649 = vmatprep.subr.bf16.mxu0 0
      %650 = vmatpush2.bf16.xpose.msra.mxu0 0
      %651 = vmatprep.subr.bf16.mxu0 0
      %652 = vmatpush2.bf16.xpose.msra.mxu0 0
      %653 = vmatprep.subr.bf16.mxu0 0
      %654 = vmatpush2.bf16.xpose.msra.mxu0 0
      %655 = vmatprep.subr.bf16.mxu0 0
      %656 = vmatpush2.bf16.xpose.msra.mxu0 0
      %657 = vmatprep.subr.bf16.mxu0 0
      %658 = vmatpush2.bf16.xpose.msra.mxu0 0
      %659 = vmatprep.mubr.bf16.mxu0 0
      %660 = vmatmul.mubr.bf16.gmra.mxu0 %v622
      %v661 = vpop.f32.mrf.mxu0
      %v662 = vadd.f32 %v393, %v661
      %v663 = vpop.f32.mrf.mxu0
      %v664 = vpop.f32.mrf.mxu0
      %v665 = vpop.f32.mrf.mxu0
      %666 = vdwg.mxu0
      %v667 = vsel %vm398, %v662, -inf
      %668 = vmax.xlane.f32.xlu0 %v667
      %v669 = vpop.xlane.xlu0 %668
      %v670 = vsub.f32 %v662, %v669
      %v671 = vmul.f32 %v670, 1.442695
      %v672 = vpow.pop %v671
      %v673 = vsel %vm398, %v672, 0.0
      %674 = vadd.xlane.f32.xlu0 %v673
      %v675 = vpop.xlane.xlu0 %674
      %v676 = vrcp.pop %v675
      %v677 = vmul.f32 %v672, %v676
      %v678 = vpack.c.bf16 %v677, %v677
      %679 = vrot.lane.b32.xlu0 %v388, 48
      %v680 = vpop.permute.xlu0 %679
      %v682 = vsel %vm398, %v678, 0
      %v685 = vsel %vm462, %v680, 0
      %687 = vmatprep.subr.bf16.mxu0 0
      %688 = vmatpush1.bf16.msra.mxu0 0
      %689 = vmatprep.subr.bf16.mxu0 0
      %690 = vmatpush1.bf16.msra.mxu0 0
      %691 = vmatprep.subr.bf16.mxu0 0
      %692 = vmatpush1.bf16.msra.mxu0 0
      %693 = vmatprep.subr.bf16.mxu0 0
      %694 = vmatpush1.bf16.msra.mxu0 0
      %695 = vmatprep.subr.bf16.mxu0 0
      %696 = vmatpush1.bf16.msra.mxu0 0
      %697 = vmatprep.subr.bf16.mxu0 0
      %698 = vmatpush1.bf16.msra.mxu0 0
      %699 = vmatprep.subr.bf16.mxu0 0
      %700 = vmatpush1.bf16.msra.mxu0 0
      %701 = vmatprep.subr.bf16.mxu0 0
      %702 = vmatpush1.bf16.msra.mxu0 %v685
      %703 = vmatprep.subr.bf16.mxu0 0
      %704 = vmatpush2.bf16.msra.mxu0 0
      %705 = vmatprep.subr.bf16.mxu0 0
      %706 = vmatpush2.bf16.msra.mxu0 0
      %707 = vmatprep.subr.bf16.mxu0 0
      %708 = vmatpush2.bf16.msra.mxu0 0
      %709 = vmatprep.subr.bf16.mxu0 0
      %710 = vmatpush2.bf16.msra.mxu0 0
      %711 = vmatprep.subr.bf16.mxu0 0
      %712 = vmatpush2.bf16.msra.mxu0 0
      %713 = vmatprep.subr.bf16.mxu0 0
      %714 = vmatpush2.bf16.msra.mxu0 0
      %715 = vmatprep.subr.bf16.mxu0 0
      %716 = vmatpush2.bf16.msra.mxu0 0
      %717 = vmatprep.subr.bf16.mxu0 0
      %718 = vmatpush2.bf16.msra.mxu0 0
      %719 = vmatprep.mubr.bf16.mxu0 0
      %720 = vmatmul.mubr.bf16.gmra.mxu0 %v682
      %v721 = vpop.f32.mrf.mxu0
      %v722 = vadd.f32 0.0, %v721
      %v723 = vpop.f32.mrf.mxu0
      %v724 = vpop.f32.mrf.mxu0
      %v725 = vpop.f32.mrf.mxu0
      %726 = vdwg.mxu0
      %727 = vrot.lane.b32.xlu0 %v387, 104
      %v728 = vpop.permute.xlu0 %727
      %729 = vrot.lane.b32.xlu0 %v388, 72
      %v730 = vpop.permute.xlu0 %729
      %v732 = vsel %vm398, %v728, 0
      %v735 = vsel %vm398, %v730, 0
      %737 = vmatprep.subr.bf16.mxu0 0
      %738 = vmatpush1.bf16.xpose.msra.mxu0 0
      %739 = vmatprep.subr.bf16.mxu0 0
      %740 = vmatpush1.bf16.xpose.msra.mxu0 0
      %741 = vmatprep.subr.bf16.mxu0 0
      %742 = vmatpush1.bf16.xpose.msra.mxu0 0
      %743 = vmatprep.subr.bf16.mxu0 0
      %744 = vmatpush1.bf16.xpose.msra.mxu0 0
      %745 = vmatprep.subr.bf16.mxu0 0
      %746 = vmatpush1.bf16.xpose.msra.mxu0 0
      %747 = vmatprep.subr.bf16.mxu0 0
      %748 = vmatpush1.bf16.xpose.msra.mxu0 0
      %749 = vmatprep.subr.bf16.mxu0 0
      %750 = vmatpush1.bf16.xpose.msra.mxu0 0
      %751 = vmatprep.subr.bf16.mxu0 0
      %752 = vmatpush1.bf16.xpose.msra.mxu0 %v735
      %753 = vmatprep.subr.bf16.mxu0 0
      %754 = vmatpush2.bf16.xpose.msra.mxu0 0
      %755 = vmatprep.subr.bf16.mxu0 0
      %756 = vmatpush2.bf16.xpose.msra.mxu0 0
      %757 = vmatprep.subr.bf16.mxu0 0
      %758 = vmatpush2.bf16.xpose.msra.mxu0 0
      %759 = vmatprep.subr.bf16.mxu0 0
      %760 = vmatpush2.bf16.xpose.msra.mxu0 0
      %761 = vmatprep.subr.bf16.mxu0 0
      %762 = vmatpush2.bf16.xpose.msra.mxu0 0
      %763 = vmatprep.subr.bf16.mxu0 0
      %764 = vmatpush2.bf16.xpose.msra.mxu0 0
      %765 = vmatprep.subr.bf16.mxu0 0
      %766 = vmatpush2.bf16.xpose.msra.mxu0 0
      %767 = vmatprep.subr.bf16.mxu0 0
      %768 = vmatpush2.bf16.xpose.msra.mxu0 0
      %769 = vmatprep.mubr.bf16.mxu0 0
      %770 = vmatmul.mubr.bf16.gmra.mxu0 %v732
      %v771 = vpop.f32.mrf.mxu0
      %v772 = vadd.f32 %v393, %v771
      %v773 = vpop.f32.mrf.mxu0
      %v774 = vpop.f32.mrf.mxu0
      %v775 = vpop.f32.mrf.mxu0
      %776 = vdwg.mxu0
      %v777 = vsel %vm398, %v772, -inf
      %778 = vmax.xlane.f32.xlu0 %v777
      %v779 = vpop.xlane.xlu0 %778
      %v780 = vsub.f32 %v772, %v779
      %v781 = vmul.f32 %v780, 1.442695
      %v782 = vpow.pop %v781
      %v783 = vsel %vm398, %v782, 0.0
      %784 = vadd.xlane.f32.xlu0 %v783
      %v785 = vpop.xlane.xlu0 %784
      %v786 = vrcp.pop %v785
      %v787 = vmul.f32 %v782, %v786
      %v788 = vpack.c.bf16 %v787, %v787
      %789 = vrot.lane.b32.xlu0 %v388, 40
      %v790 = vpop.permute.xlu0 %789
      %v792 = vsel %vm398, %v788, 0
      %v795 = vsel %vm462, %v790, 0
      %797 = vmatprep.subr.bf16.mxu0 0
      %798 = vmatpush1.bf16.msra.mxu0 0
      %799 = vmatprep.subr.bf16.mxu0 0
      %800 = vmatpush1.bf16.msra.mxu0 0
      %801 = vmatprep.subr.bf16.mxu0 0
      %802 = vmatpush1.bf16.msra.mxu0 0
      %803 = vmatprep.subr.bf16.mxu0 0
      %804 = vmatpush1.bf16.msra.mxu0 0
      %805 = vmatprep.subr.bf16.mxu0 0
      %806 = vmatpush1.bf16.msra.mxu0 0
      %807 = vmatprep.subr.bf16.mxu0 0
      %808 = vmatpush1.bf16.msra.mxu0 0
      %809 = vmatprep.subr.bf16.mxu0 0
      %810 = vmatpush1.bf16.msra.mxu0 0
      %811 = vmatprep.subr.bf16.mxu0 0
      %812 = vmatpush1.bf16.msra.mxu0 %v795
      %813 = vmatprep.subr.bf16.mxu0 0
      %814 = vmatpush2.bf16.msra.mxu0 0
      %815 = vmatprep.subr.bf16.mxu0 0
      %816 = vmatpush2.bf16.msra.mxu0 0
      %817 = vmatprep.subr.bf16.mxu0 0
      %818 = vmatpush2.bf16.msra.mxu0 0
      %819 = vmatprep.subr.bf16.mxu0 0
      %820 = vmatpush2.bf16.msra.mxu0 0
      %821 = vmatprep.subr.bf16.mxu0 0
      %822 = vmatpush2.bf16.msra.mxu0 0
      %823 = vmatprep.subr.bf16.mxu0 0
      %824 = vmatpush2.bf16.msra.mxu0 0
      %825 = vmatprep.subr.bf16.mxu0 0
      %826 = vmatpush2.bf16.msra.mxu0 0
      %827 = vmatprep.subr.bf16.mxu0 0
      %828 = vmatpush2.bf16.msra.mxu0 0
      %829 = vmatprep.mubr.bf16.mxu0 0
      %830 = vmatmul.mubr.bf16.gmra.mxu0 %v792
      %v831 = vpop.f32.mrf.mxu0
      %v832 = vadd.f32 0.0, %v831
      %v833 = vpop.f32.mrf.mxu0
      %v834 = vpop.f32.mrf.mxu0
      %v835 = vpop.f32.mrf.mxu0
      %836 = vdwg.mxu0
      %838 = vrot.lane.b32.xlu0 %v612, 8
      %v839 = vpop.permute.xlu0 %838
      %842 = vrot.lane.b32.xlu0 %v722, 16
      %v843 = vpop.permute.xlu0 %842
      %846 = vrot.lane.b32.xlu0 %v832, 24
      %v847 = vpop.permute.xlu0 %846
      %v849 = vsel %vm398, %v501, %v839
      %vm850 = vcmask 130048
      %v851 = vsel %vm850, %v849, %v843
      %vm852 = vcmask 195584
      %v853 = vsel %vm852, %v851, %v847
      %v854 = vld [vmem:[%s3] sm:$0xf]
      %v855 = vld [vmem:[%s3 + $0x4] sm:$0xf]
      %v856 = vld [vmem:[%s3 + $0x8] sm:$0xf]
      %v857 = vld [vmem:[%s3 + $0xc] sm:$0xf]
      %v858 = vpack.c.bf16 %v853, %v853
      %v859 = vld [vmem:[%s4] sm:$0x1]
      %v861 = vlaneseq
      %v862 = vshrl.u32 %v861, 7
      %v863 = vsub.s32 0, %v862
      %v864 = vrot.slane %v859, %v863
      %v870 = vunpack.c.l.b16 %v854
      %v871 = vunpack.c.l.b16 %v855
      %v872 = vunpack.c.l.b16 %v856
      %v873 = vunpack.c.l.b16 %v857
      %v874 = vpack.c.b16 %v871, %v870
      %v875 = vpack.c.b16 %v873, %v872
      %v879 = vsel %vm342, %v858, 0
      %881 = vmatprep.subr.bf16.mxu0 0
      %882 = vmatpush1.bf16.msra.mxu0 0
      %883 = vmatprep.subr.bf16.mxu0 0
      %884 = vmatpush1.bf16.msra.mxu0 0
      %885 = vmatprep.subr.bf16.mxu0 0
      %886 = vmatpush1.bf16.msra.mxu0 0
      %887 = vmatprep.subr.bf16.mxu0 0
      %888 = vmatpush1.bf16.msra.mxu0 0
      %889 = vmatprep.subr.bf16.mxu0 0
      %890 = vmatpush1.bf16.msra.mxu0 0
      %891 = vmatprep.subr.bf16.mxu0 0
      %892 = vmatpush1.bf16.msra.mxu0 0
      %893 = vmatprep.subr.bf16.mxu0 0
      %894 = vmatpush1.bf16.msra.mxu0 %v875
      %895 = vmatprep.subr.bf16.mxu0 0
      %896 = vmatpush1.bf16.msra.mxu0 %v874
      %897 = vmatprep.subr.bf16.mxu0 0
      %898 = vmatpush2.bf16.msra.mxu0 0
      %899 = vmatprep.subr.bf16.mxu0 0
      %900 = vmatpush2.bf16.msra.mxu0 0
      %901 = vmatprep.subr.bf16.mxu0 0
      %902 = vmatpush2.bf16.msra.mxu0 0
      %903 = vmatprep.subr.bf16.mxu0 0
      %904 = vmatpush2.bf16.msra.mxu0 0
      %905 = vmatprep.subr.bf16.mxu0 0
      %906 = vmatpush2.bf16.msra.mxu0 0
      %907 = vmatprep.subr.bf16.mxu0 0
      %908 = vmatpush2.bf16.msra.mxu0 0
      %909 = vmatprep.subr.bf16.mxu0 0
      %910 = vmatpush2.bf16.msra.mxu0 0
      %911 = vmatprep.subr.bf16.mxu0 0
      %912 = vmatpush2.bf16.msra.mxu0 0
      %913 = vmatprep.mubr.bf16.mxu0 0
      %914 = vmatmul.mubr.bf16.gmra.mxu0 %v879
      %v915 = vpop.f32.mrf.mxu0
      %v916 = vadd.f32 %v864, %v915
      %v917 = vpop.f32.mrf.mxu0
      %v918 = vpop.f32.mrf.mxu0
      %v919 = vpop.f32.mrf.mxu0
      %920 = vdwg.mxu0
      %v921 = vadd.f32 %v916, %v316
      %v922 = vld [vmem:[%s5] sm:$0x1]
      %v923 = vld [vmem:[%s6] sm:$0x1]
      %v924 = vsel %vm342, %v921, 0.0
      %925 = vadd.xlane.f32.xlu0 %v924
      %v926 = vpop.xlane.xlu0 %925
      %v927 = vrcp.pop 32.0
      %v928 = vmul.f32 %v926, %v927
      %v929 = vsub.f32 %v921, %v928
      %v930 = vmul.f32 %v929, %v929
      %v931 = vsel %vm342, %v930, 0.0
      %932 = vadd.xlane.f32.xlu0 %v931
      %v933 = vpop.xlane.xlu0 %932
      %v934 = vmul.f32 %v933, %v927
      %v935 = vadd.f32 %v934, 1e-12
      %v936 = vrsqrt.pop %v935
      %v937 = vmul.f32 %v929, %v936
      %v939 = vlaneseq
      %v940 = vshrl.u32 %v939, 7
      %v941 = vsub.s32 0, %v940
      %v942 = vrot.slane %v922, %v941
      %v944 = vmul.f32 %v942, %v937
      %v946 = vlaneseq
      %v947 = vshrl.u32 %v946, 7
      %v948 = vsub.s32 0, %v947
      %v949 = vrot.slane %v923, %v948
      %v951 = vadd.f32 %v944, %v949
      %952 = vst.msk [vmem:[%s314] sm:$0xff] %vm342, %v951
      %p953 = scmp.lt.s32.totalorder %s19, 1
      %s954 = scalar_select %p953, %s19, 1
      %s955 = smul.addr %s954, 8
      %s956 = scalar_lea.vmem %s8, %s955
      // Predicated region
      $region53: #{bertlm_forward.10} parent=51 // pred_check
        %p957 = pneg %p215
      $region54: #{bertlm_forward.10} parent=51 // pred_check_branch
        %959 = sbr.rel (%p957) target = $region56
      $region55: #{bertlm_forward.10} parent=51 // pred_region
        _
      $region56: #{bertlm_forward.10} parent=51 // pred_fallthru
        _
    $region52: #{bertlm_forward.10} parent=5 // pred_fallthru
      _
    %p960 = scmp.le.s32.totalorder 2, %s14
    // Predicated region
    $region57: #{bertlm_forward.10} parent=5 // pred_check
      %p961 = pneg %p960
    $region58: #{bertlm_forward.10} parent=5 // pred_check_branch
      %963 = sbr.rel (%p961) target = $region60
    $region59: #{bertlm_forward.10} parent=5 // pred_region
      %s964 = ssub.s32 %s14, 2
      // Predicated region
      $region61: #{bertlm_forward.10} parent=59 // pred_check
        %p965 = pneg %p221
      $region62: #{bertlm_forward.10} parent=59 // pred_check_branch
        %967 = sbr.rel (%p965) target = $region64
      $region63: #{bertlm_forward.10} parent=59 // pred_region
        %p968 = scmp.lt.s32.totalorder %s20, 1
        %s969 = scalar_select %p968, %s20, 1
        %s970 = smul.addr %s969, 8
        %s971 = scalar_lea.vmem %s8, %s970
      $region64: #{bertlm_forward.10} parent=59 // pred_fallthru
        _
    $region60: #{bertlm_forward.10} parent=5 // pred_fallthru
      _
  $region6: #{bertlm_forward.10} parent=0 // loop_footer
    %s18 = sadd.s32 1, %s14
  $region7: #{bertlm_forward.10} parent=0 // loop_footer_branch
    %13 = sbr.rel target = $region3
  $region8: #{bertlm_forward.10} parent=0 // loop_exit
    _

// kernel: bertlm_forward.15
$region0: #{bertlm_forward.15}
  #allocation0 [shape = 'u32[]', space=smem, size = 0x4, offset = 0x4, fixed_abs, tag = 'smem constant byte address 0x4 - core index']
  #allocation1 [shape = 'u32[144,128]{1,0:T(1,128)}', space=vmem, size = 0x12000, scoped, tag = 'internal scratch']
  #allocation2 [shape = 'f32[16,1]{1,0:T(8,128)}', space=vmem, size = 0x2000, scoped, tag = 'scratch operand']
  #allocation3 [shape = 'f32[16,1]{1,0:T(8,128)}', space=vmem, size = 0x2000, scoped, tag = 'scratch operand']
  #allocation4 [shape = 'f32[16,1]{1,0:T(8,128)}', space=vmem, size = 0x2000, scoped, tag = 'scratch operand']
  #allocation5 [shape = 'f32[16,1]{1,0:T(8,128)}', space=vmem, size = 0x2000, scoped, tag = 'scratch operand']
  %s0 = inlined_call_operand.vmem [shape: f32[16,32], index: 0, kind: input, shape index: {}]
  %s1 = inlined_call_operand.vmem [shape: bf16[32,128], index: 1, kind: input, shape index: {}]
  %s2 = inlined_call_operand.vmem [shape: f32[1,128], index: 2, kind: input, shape index: {}]
  %s3 = inlined_call_operand.vmem [shape: s32[16,1], index: 3, kind: input, shape index: {}]
  %s4 = inlined_call_operand.vmem [shape: s32[16,1], index: 4, kind: output, shape index: {0}]
  %s5 = inlined_call_operand.vmem [shape: f32[16,1], index: 5, kind: output, shape index: {1}]
  %6 = xla_tuple %s4, %s5
  %s7 = sld [smem:[#allocation0]]
  $region42: #{bertlm_forward.15} parent=0
    _
  %s9 = ssub.s32 1, %s7
  %s10 = scalar_select 0, %s9, %s7
  // Predicated region
  $region2: #{bertlm_forward.15} parent=0 // pred_check
    _
  $region3: #{bertlm_forward.15} parent=0 // pred_check_branch
    %12 = sbr.rel (0) target = $region5
  $region4: #{bertlm_forward.15} parent=0 // pred_region
    _
  $region5: #{bertlm_forward.15} parent=0 // pred_fallthru
    _
  // Predicated region
  $region6: #{bertlm_forward.15} parent=0 // pred_check
    _
  $region7: #{bertlm_forward.15} parent=0 // pred_check_branch
    %14 = sbr.rel (0) target = $region9
  $region8: #{bertlm_forward.15} parent=0 // pred_region
    _
  $region9: #{bertlm_forward.15} parent=0 // pred_fallthru
    _
  // Predicated region
  $region10: #{bertlm_forward.15} parent=0 // pred_check
    _
  $region11: #{bertlm_forward.15} parent=0 // pred_check_branch
    %16 = sbr.rel (0) target = $region13
  $region12: #{bertlm_forward.15} parent=0 // pred_region
    _
  $region13: #{bertlm_forward.15} parent=0 // pred_fallthru
    _
  // Predicated region
  $region14: #{bertlm_forward.15} parent=0 // pred_check
    _
  $region15: #{bertlm_forward.15} parent=0 // pred_check_branch
    %18 = sbr.rel (0) target = $region17
  $region16: #{bertlm_forward.15} parent=0 // pred_region
    _
  $region17: #{bertlm_forward.15} parent=0 // pred_fallthru
    _
  %p20 = scmp.eq.s32.totalorder 0, 0
  // Predicated region
  $region18: #{bertlm_forward.15} parent=0 // pred_check
    %p21 = pneg %p20
  $region19: #{bertlm_forward.15} parent=0 // pred_check_branch
    %23 = sbr.rel (%p21) target = $region21
  $region20: #{bertlm_forward.15} parent=0 // pred_region
    %vm24 = vcmask 7168
    %25 = vst.msk [vmem:[#allocation2] sm:$0xff] %vm24, -inf
    %26 = vst.msk [vmem:[#allocation2 + $0x8] sm:$0xff] %vm24, -inf
    %27 = vst.msk [vmem:[#allocation3] sm:$0xff] %vm24, 0.0
    %28 = vst.msk [vmem:[#allocation3 + $0x8] sm:$0xff] %vm24, 0.0
    %29 = vst.msk [vmem:[#allocation4] sm:$0xff] %vm24, 0.0
    %30 = vst.msk [vmem:[#allocation4 + $0x8] sm:$0xff] %vm24, 0.0
    %31 = vst.msk [vmem:[#allocation5] sm:$0xff] %vm24, 0.0
    %32 = vst.msk [vmem:[#allocation5 + $0x8] sm:$0xff] %vm24, 0.0
  $region21: #{bertlm_forward.15} parent=0 // pred_fallthru
    _
  %v33 = vld [vmem:[%s0] sm:$0xff]
  %v34 = vld [vmem:[%s0 + $0x8] sm:$0xff]
  %v35 = vld [vmem:[%s1] sm:$0xf]
  %v36 = vld [vmem:[%s1 + $0x4] sm:$0xf]
  %v37 = vld [vmem:[%s1 + $0x8] sm:$0xf]
  %v38 = vld [vmem:[%s1 + $0xc] sm:$0xf]
  %v39 = vpack.c.bf16 %v34, %v33
  %v40 = vld [vmem:[%s2] sm:$0x1]
  %v42 = vlaneseq
  %v43 = vshrl.u32 %v42, 7
  %v44 = vsub.s32 0, %v43
  %v45 = vrot.slane %v40, %v44
  %v51 = vunpack.c.l.b16 %v35
  %v52 = vunpack.c.l.b16 %v36
  %v53 = vunpack.c.l.b16 %v37
  %v54 = vunpack.c.l.b16 %v38
  %v55 = vpack.c.b16 %v52, %v51
  %v56 = vpack.c.b16 %v54, %v53
  %vm59 = vcmask 261120
  %v61 = vsel %vm59, %v39, 0
  %63 = vmatprep.subr.bf16.mxu0 0
  %64 = vmatpush1.bf16.msra.mxu0 0
  %65 = vmatprep.subr.bf16.mxu0 0
  %66 = vmatpush1.bf16.msra.mxu0 0
  %67 = vmatprep.subr.bf16.mxu0 0
  %68 = vmatpush1.bf16.msra.mxu0 0
  %69 = vmatprep.subr.bf16.mxu0 0
  %70 = vmatpush1.bf16.msra.mxu0 0
  %71 = vmatprep.subr.bf16.mxu0 0
  %72 = vmatpush1.bf16.msra.mxu0 0
  %73 = vmatprep.subr.bf16.mxu0 0
  %74 = vmatpush1.bf16.msra.mxu0 0
  %75 = vmatprep.subr.bf16.mxu0 0
  %76 = vmatpush1.bf16.msra.mxu0 %v56
  %77 = vmatprep.subr.bf16.mxu0 0
  %78 = vmatpush1.bf16.msra.mxu0 %v55
  %79 = vmatprep.subr.bf16.mxu0 0
  %80 = vmatpush2.bf16.msra.mxu0 0
  %81 = vmatprep.subr.bf16.mxu0 0
  %82 = vmatpush2.bf16.msra.mxu0 0
  %83 = vmatprep.subr.bf16.mxu0 0
  %84 = vmatpush2.bf16.msra.mxu0 0
  %85 = vmatprep.subr.bf16.mxu0 0
  %86 = vmatpush2.bf16.msra.mxu0 0
  %87 = vmatprep.subr.bf16.mxu0 0
  %88 = vmatpush2.bf16.msra.mxu0 0
  %89 = vmatprep.subr.bf16.mxu0 0
  %90 = vmatpush2.bf16.msra.mxu0 0
  %91 = vmatprep.subr.bf16.mxu0 0
  %92 = vmatpush2.bf16.msra.mxu0 0
  %93 = vmatprep.subr.bf16.mxu0 0
  %94 = vmatpush2.bf16.msra.mxu0 0
  %95 = vmatprep.mubr.bf16.mxu0 0
  %96 = vmatmul.mubr.bf16.gmra.mxu0 %v61
  %v97 = vpop.f32.mrf.mxu0
  %v98 = vadd.f32 %v45, %v97
  %v99 = vpop.f32.mrf.mxu0
  %v100 = vpop.f32.mrf.mxu0
  %v101 = vadd.f32 %v45, %v100
  %v102 = vpop.f32.mrf.mxu0
  %103 = vdwg.mxu0
  %v104 = vlaneseq
  %v105 = vand.u32 %v104, 127
  %s106 = smul.u32 0, 128
  %v107 = vstv %s106
  %v108 = vadd.s32 %v105, %v107
  %v109 = vcvt.s32.f32 %v108
  %v110 = vld [vmem:[%s3] sm:$0xff]
  %v111 = vld [vmem:[%s3 + $0x8] sm:$0xff]
  %112 = vset.pattern.permute.xlu0 0
  %113 = vperm.xlu0 %112, %v110
  %v114 = vpop.permute.xlu0 %113
  %115 = vset.pattern.permute.xlu0 0
  %116 = vperm.xlu0 %115, %v111
  %v117 = vpop.permute.xlu0 %116
  %vm118 = vcmp.eq.s32.totalorder %v108, %v114
  %vm119 = vcmp.eq.s32.totalorder %v108, %v117
  %v120 = vld [vmem:[#allocation5] sm:$0xff]
  %v121 = vld [vmem:[#allocation5 + $0x8] sm:$0xff]
  %v122 = vsel %vm118, %v98, 0.0
  %v123 = vsel %vm119, %v101, 0.0
  %124 = vadd.xlane.f32.xlu0 %v122
  %v125 = vpop.xlane.xlu0 %124
  %126 = vadd.xlane.f32.xlu0 %v123
  %v127 = vpop.xlane.xlu0 %126
  %v128 = vadd.f32 %v120, %v125
  %v129 = vadd.f32 %v121, %v127
  %vm130 = vcmask 7168
  %131 = vst.msk [vmem:[#allocation5] sm:$0xff] %vm130, %v128
  %132 = vst.msk [vmem:[#allocation5 + $0x8] sm:$0xff] %vm130, %v129
  %133 = vmax.xlane.f32.xlu0 %v98
  %v134 = vpop.xlane.xlu0 %133
  %135 = vmax.xlane.f32.xlu0 %v101
  %v136 = vpop.xlane.xlu0 %135
  %vm137 = vcmp.ge.f32.partialorder %v98, %v134
  %vm138 = vcmp.ge.f32.partialorder %v101, %v136
  %v139 = vsel %vm137, %v109, 1e+09
  %v140 = vsel %vm138, %v109, 1e+09
  %141 = vmin.xlane.f32.xlu0 %v139
  %v142 = vpop.xlane.xlu0 %141
  %143 = vmin.xlane.f32.xlu0 %v140
  %v144 = vpop.xlane.xlu0 %143
  %v145 = vld [vmem:[#allocation2] sm:$0xff]
  %v146 = vld [vmem:[#allocation2 + $0x8] sm:$0xff]
  %vm147 = vcmp.gt.f32.partialorder %v134, %v145
  %vm148 = vcmp.gt.f32.partialorder %v136, %v146
  %v149 = vld [vmem:[#allocation4] sm:$0xff]
  %v150 = vld [vmem:[#allocation4 + $0x8] sm:$0xff]
  %v151 = vsel %vm147, %v142, %v149
  %v152 = vsel %vm148, %v144, %v150
  %153 = vst.msk [vmem:[#allocation4] sm:$0xff] %vm130, %v151
  %154 = vst.msk [vmem:[#allocation4 + $0x8] sm:$0xff] %vm130, %v152
  %v155 = vmax.f32 %v145, %v134
  %v156 = vmax.f32 %v146, %v136
  %v157 = vld [vmem:[#allocation3] sm:$0xff]
  %v158 = vld [vmem:[#allocation3 + $0x8] sm:$0xff]
  %v159 = vsub.f32 %v145, %v155
  %v160 = vsub.f32 %v146, %v156
  %v161 = vmul.f32 %v159, 1.442695
  %v162 = vpow.pop %v161
  %v163 = vmul.f32 %v160, 1.442695
  %v164 = vpow.pop %v163
  %v165 = vmul.f32 %v157, %v162
  %v166 = vmul.f32 %v158, %v164
  %168 = vset.pattern.permute.xlu0 0
  %169 = vperm.xlu0 %168, %v155
  %v170 = vpop.permute.xlu0 %169
  %173 = vset.pattern.permute.xlu0 0
  %174 = vperm.xlu0 %173, %v156
  %v175 = vpop.permute.xlu0 %174
  %v177 = vsub.f32 %v98, %v170
  %v178 = vsub.f32 %v101, %v175
  %v179 = vmul.f32 %v177, 1.442695
  %v180 = vpow.pop %v179
  %v181 = vmul.f32 %v178, 1.442695
  %v182 = vpow.pop %v181
  %183 = vadd.xlane.f32.xlu0 %v180
  %v184 = vpop.xlane.xlu0 %183
  %185 = vadd.xlane.f32.xlu0 %v182
  %v186 = vpop.xlane.xlu0 %185
  %v187 = vadd.f32 %v165, %v184
  %v188 = vadd.f32 %v166, %v186
  %189 = vst.msk [vmem:[#allocation3] sm:$0xff] %vm130, %v187
  %190 = vst.msk [vmem:[#allocation3 + $0x8] sm:$0xff] %vm130, %v188
  %191 = vst.msk [vmem:[#allocation2] sm:$0xff] %vm130, %v155
  %192 = vst.msk [vmem:[#allocation2 + $0x8] sm:$0xff] %vm130, %v156
  // Predicated region
  $region22: #{bertlm_forward.15} parent=0 // pred_check
    %p193 = pneg %p20
  $region23: #{bertlm_forward.15} parent=0 // pred_check_branch
    %195 = sbr.rel (%p193) target = $region25
  $region24: #{bertlm_forward.15} parent=0 // pred_region
    %v196 = vld [vmem:[#allocation3] sm:$0xff]
    %v197 = vld [vmem:[#allocation3 + $0x8] sm:$0xff]
    %v198 = vlog2.pop %v196
    %v199 = vmul.f32 %v198, 0.6931472
    %v200 = vlog2.pop %v197
    %v201 = vmul.f32 %v200, 0.6931472
    %v202 = vld [vmem:[#allocation2] sm:$0xff]
    %v203 = vld [vmem:[#allocation2 + $0x8] sm:$0xff]
    %v204 = vadd.f32 %v199, %v202
    %v205 = vadd.f32 %v201, %v203
    %v206 = vld [vmem:[#allocation4] sm:$0xff]
    %v207 = vld [vmem:[#allocation4 + $0x8] sm:$0xff]
    %v208 = vcvt.f32.s32.to.zero.pseudo %v206
    %v209 = vcvt.f32.s32.to.zero.pseudo %v207
    %210 = vst.msk [vmem:[%s4] sm:$0xff] %vm130, %v208
    %211 = vst.msk [vmem:[%s4 + $0x8] sm:$0xff] %vm130, %v209
    %v212 = vld [vmem:[#allocation5] sm:$0xff]
    %v213 = vld [vmem:[#allocation5 + $0x8] sm:$0xff]
    %v214 = vsub.f32 %v212, %v204
    %v215 = vsub.f32 %v213, %v205
    %216 = vst.msk [vmem:[%s5] sm:$0xff] %vm130, %v214
    %217 = vst.msk [vmem:[%s5 + $0x8] sm:$0xff] %vm130, %v215
  $region25: #{bertlm_forward.15} parent=0 // pred_fallthru
    _
  // Predicated region
  $region26: #{bertlm_forward.15} parent=0 // pred_check
    _
  $region27: #{bertlm_forward.15} parent=0 // pred_check_branch
    %219 = sbr.rel (0) target = $region29
  $region28: #{bertlm_forward.15} parent=0 // pred_region
    _
  $region29: #{bertlm_forward.15} parent=0 // pred_fallthru
    _
  // Predicated region
  $region30: #{bertlm_forward.15} parent=0 // pred_check
    _
  $region31: #{bertlm_forward.15} parent=0 // pred_check_branch
    %221 = sbr.rel (0) target = $region33
  $region32: #{bertlm_forward.15} parent=0 // pred_region
    _
  $region33: #{bertlm_forward.15} parent=0 // pred_fallthru
    _
  // Predicated region
  $region34: #{bertlm_forward.15} parent=0 // pred_check
    _
  $region35: #{bertlm_forward.15} parent=0 // pred_check_branch
    %223 = sbr.rel (0) target = $region37
  $region36: #{bertlm_forward.15} parent=0 // pred_region
    _
  $region37: #{bertlm_forward.15} parent=0 // pred_fallthru
    _
  // Predicated region
  $region38: #{bertlm_forward.15} parent=0 // pred_check
    _
  $region39: #{bertlm_forward.15} parent=0 // pred_check_branch
    %225 = sbr.rel (0) target = $region41
  $region40: #{bertlm_forward.15} parent=0 // pred_region
    _
  $region41: #{bertlm_forward.15} parent=0 // pred_fallthru
    _

// kernel: bertlm_forward.17
$region0: #{bertlm_forward.17}
  #allocation0 [shape = 'u32[]', space=smem, size = 0x4, offset = 0x4, fixed_abs, tag = 'smem constant byte address 0x4 - core index']
  #allocation1 [shape = 'u32[144,128]{1,0:T(1,128)}', space=vmem, size = 0x12000, scoped, tag = 'internal scratch']
  #allocation2 [shape = 'f32[1,1]{1,0:T(1,128)S(1)}', space=vmem, size = 0x200, scoped, tag = 'scoped memory for bertlm_forward.17']
  %s0 = inlined_call_operand.vmem [shape: f32[8,32], index: 0, kind: input, shape index: {}]
  %s1 = inlined_call_operand.vmem [shape: bf16[32,1], index: 1, kind: input, shape index: {}]
  %s2 = inlined_call_operand.<no memory space> [shape: f32[1,1], index: 2, kind: input, shape index: {}]
  %s3 = inlined_call_operand.vmem [shape: f32[8,1], index: 3, kind: output, shape index: {}]
  %s4 = sld [smem:[#allocation0]]
  $region22: #{bertlm_forward.17} parent=0
    _
  %s6 = ssub.s32 1, %s4
  %s7 = scalar_select 0, %s6, %s4
  %v8 = vstv %s2
  %9 = vst [vmem:[#allocation2] sm:$0x1] %v8
  // Predicated region
  $region2: #{bertlm_forward.17} parent=0 // pred_check
    _
  $region3: #{bertlm_forward.17} parent=0 // pred_check_branch
    %11 = sbr.rel (0) target = $region5
  $region4: #{bertlm_forward.17} parent=0 // pred_region
    _
  $region5: #{bertlm_forward.17} parent=0 // pred_fallthru
    _
  // Predicated region
  $region6: #{bertlm_forward.17} parent=0 // pred_check
    _
  $region7: #{bertlm_forward.17} parent=0 // pred_check_branch
    %13 = sbr.rel (0) target = $region9
  $region8: #{bertlm_forward.17} parent=0 // pred_region
    _
  $region9: #{bertlm_forward.17} parent=0 // pred_fallthru
    _
  // Predicated region
  $region10: #{bertlm_forward.17} parent=0 // pred_check
    _
  $region11: #{bertlm_forward.17} parent=0 // pred_check_branch
    %15 = sbr.rel (0) target = $region13
  $region12: #{bertlm_forward.17} parent=0 // pred_region
    _
  $region13: #{bertlm_forward.17} parent=0 // pred_fallthru
    _
  %v17 = vld [vmem:[%s0] sm:$0xff]
  %v18 = vld [vmem:[%s1] sm:$0xf]
  %v19 = vld [vmem:[%s1 + $0x4] sm:$0xf]
  %v20 = vld [vmem:[%s1 + $0x8] sm:$0xf]
  %v21 = vld [vmem:[%s1 + $0xc] sm:$0xf]
  %v22 = vpack.c.bf16 %v17, %v17
  %v23 = vld [vmem:[#allocation2] sm:$0x1]
  %v25 = vlaneseq
  %v26 = vshrl.u32 %v25, 7
  %v27 = vsub.s32 0, %v26
  %v28 = vrot.slane %v23, %v27
  %v34 = vunpack.c.l.b16 %v18
  %v35 = vunpack.c.l.b16 %v19
  %v36 = vunpack.c.l.b16 %v20
  %v37 = vunpack.c.l.b16 %v21
  %v38 = vpack.c.b16 %v35, %v34
  %v39 = vpack.c.b16 %v37, %v36
  %vm42 = vcmask 261120
  %v44 = vsel %vm42, %v22, 0
  %46 = vmatprep.subr.bf16.mxu0 0
  %47 = vmatpush1.bf16.msra.mxu0 0
  %48 = vmatprep.subr.bf16.mxu0 0
  %49 = vmatpush1.bf16.msra.mxu0 0
  %50 = vmatprep.subr.bf16.mxu0 0
  %51 = vmatpush1.bf16.msra.mxu0 0
  %52 = vmatprep.subr.bf16.mxu0 0
  %53 = vmatpush1.bf16.msra.mxu0 0
  %54 = vmatprep.subr.bf16.mxu0 0
  %55 = vmatpush1.bf16.msra.mxu0 0
  %56 = vmatprep.subr.bf16.mxu0 0
  %57 = vmatpush1.bf16.msra.mxu0 0
  %58 = vmatprep.subr.bf16.mxu0 0
  %59 = vmatpush1.bf16.msra.mxu0 %v39
  %60 = vmatprep.subr.bf16.mxu0 0
  %61 = vmatpush1.bf16.msra.mxu0 %v38
  %62 = vmatprep.subr.bf16.mxu0 0
  %63 = vmatpush2.bf16.msra.mxu0 0
  %64 = vmatprep.subr.bf16.mxu0 0
  %65 = vmatpush2.bf16.msra.mxu0 0
  %66 = vmatprep.subr.bf16.mxu0 0
  %67 = vmatpush2.bf16.msra.mxu0 0
  %68 = vmatprep.subr.bf16.mxu0 0
  %69 = vmatpush2.bf16.msra.mxu0 0
  %70 = vmatprep.subr.bf16.mxu0 0
  %71 = vmatpush2.bf16.msra.mxu0 0
  %72 = vmatprep.subr.bf16.mxu0 0
  %73 = vmatpush2.bf16.msra.mxu0 0
  %74 = vmatprep.subr.bf16.mxu0 0
  %75 = vmatpush2.bf16.msra.mxu0 0
  %76 = vmatprep.subr.bf16.mxu0 0
  %77 = vmatpush2.bf16.msra.mxu0 0
  %78 = vmatprep.mubr.bf16.mxu0 0
  %79 = vmatmul.mubr.bf16.gmra.mxu0 %v44
  %v80 = vpop.f32.mrf.mxu0
  %v81 = vadd.f32 %v28, %v80
  %v82 = vpop.f32.mrf.mxu0
  %v83 = vpop.f32.mrf.mxu0
  %v84 = vpop.f32.mrf.mxu0
  %85 = vdwg.mxu0
  %vm86 = vcmask 7168
  %87 = vst.msk [vmem:[%s3] sm:$0xff] %vm86, %v81
  // Predicated region
  $region14: #{bertlm_forward.17} parent=0 // pred_check
    _
  $region15: #{bertlm_forward.17} parent=0 // pred_check_branch
    %89 = sbr.rel (0) target = $region17
  $region16: #{bertlm_forward.17} parent=0 // pred_region
    _
  $region17: #{bertlm_forward.17} parent=0 // pred_fallthru
    _
  // Predicated region
  $region18: #{bertlm_forward.17} parent=0 // pred_check
    _
  $region19: #{bertlm_forward.17} parent=0 // pred_check_branch
    %91 = sbr.rel (0) target = $region21
  $region20: #{bertlm_forward.17} parent=0 // pred_region
    _
  $region21: #{bertlm_forward.17} parent=0 // pred_fallthru
    _

// kernel: bertlm_forward.16
$region0: #{bertlm_forward.16}
  #allocation0 [shape = 'u32[]', space=smem, size = 0x4, offset = 0x4, fixed_abs, tag = 'smem constant byte address 0x4 - core index']
  #allocation1 [shape = 'u32[144,128]{1,0:T(1,128)}', space=vmem, size = 0x12000, scoped, tag = 'internal scratch']
  %s0 = inlined_call_operand.vmem [shape: f32[8,32], index: 0, kind: input, shape index: {}]
  %s1 = inlined_call_operand.vmem [shape: bf16[32,32], index: 1, kind: input, shape index: {}]
  %s2 = inlined_call_operand.vmem [shape: f32[1,32], index: 2, kind: input, shape index: {}]
  %s3 = inlined_call_operand.vmem [shape: f32[8,32], index: 3, kind: output, shape index: {}]
  %s4 = sld [smem:[#allocation0]]
  $region22: #{bertlm_forward.16} parent=0
    _
  %s6 = ssub.s32 1, %s4
  %s7 = scalar_select 0, %s6, %s4
  // Predicated region
  $region2: #{bertlm_forward.16} parent=0 // pred_check
    _
  $region3: #{bertlm_forward.16} parent=0 // pred_check_branch
    %9 = sbr.rel (0) target = $region5
  $region4: #{bertlm_forward.16} parent=0 // pred_region
    _
  $region5: #{bertlm_forward.16} parent=0 // pred_fallthru
    _
  // Predicated region
  $region6: #{bertlm_forward.16} parent=0 // pred_check
    _
  $region7: #{bertlm_forward.16} parent=0 // pred_check_branch
    %11 = sbr.rel (0) target = $region9
  $region8: #{bertlm_forward.16} parent=0 // pred_region
    _
  $region9: #{bertlm_forward.16} parent=0 // pred_fallthru
    _
  // Predicated region
  $region10: #{bertlm_forward.16} parent=0 // pred_check
    _
  $region11: #{bertlm_forward.16} parent=0 // pred_check_branch
    %13 = sbr.rel (0) target = $region13
  $region12: #{bertlm_forward.16} parent=0 // pred_region
    _
  $region13: #{bertlm_forward.16} parent=0 // pred_fallthru
    _
  %v15 = vld [vmem:[%s0] sm:$0xff]
  %v16 = vld [vmem:[%s1] sm:$0xf]
  %v17 = vld [vmem:[%s1 + $0x4] sm:$0xf]
  %v18 = vld [vmem:[%s1 + $0x8] sm:$0xf]
  %v19 = vld [vmem:[%s1 + $0xc] sm:$0xf]
  %v20 = vpack.c.bf16 %v15, %v15
  %v21 = vld [vmem:[%s2] sm:$0x1]
  %v23 = vlaneseq
  %v24 = vshrl.u32 %v23, 7
  %v25 = vsub.s32 0, %v24
  %v26 = vrot.slane %v21, %v25
  %v32 = vunpack.c.l.b16 %v16
  %v33 = vunpack.c.l.b16 %v17
  %v34 = vunpack.c.l.b16 %v18
  %v35 = vunpack.c.l.b16 %v19
  %v36 = vpack.c.b16 %v33, %v32
  %v37 = vpack.c.b16 %v35, %v34
  %vm40 = vcmask 261120
  %v42 = vsel %vm40, %v20, 0
  %44 = vmatprep.subr.bf16.mxu0 0
  %45 = vmatpush1.bf16.msra.mxu0 0
  %46 = vmatprep.subr.bf16.mxu0 0
  %47 = vmatpush1.bf16.msra.mxu0 0
  %48 = vmatprep.subr.bf16.mxu0 0
  %49 = vmatpush1.bf16.msra.mxu0 0
  %50 = vmatprep.subr.bf16.mxu0 0
  %51 = vmatpush1.bf16.msra.mxu0 0
  %52 = vmatprep.subr.bf16.mxu0 0
  %53 = vmatpush1.bf16.msra.mxu0 0
  %54 = vmatprep.subr.bf16.mxu0 0
  %55 = vmatpush1.bf16.msra.mxu0 0
  %56 = vmatprep.subr.bf16.mxu0 0
  %57 = vmatpush1.bf16.msra.mxu0 %v37
  %58 = vmatprep.subr.bf16.mxu0 0
  %59 = vmatpush1.bf16.msra.mxu0 %v36
  %60 = vmatprep.subr.bf16.mxu0 0
  %61 = vmatpush2.bf16.msra.mxu0 0
  %62 = vmatprep.subr.bf16.mxu0 0
  %63 = vmatpush2.bf16.msra.mxu0 0
  %64 = vmatprep.subr.bf16.mxu0 0
  %65 = vmatpush2.bf16.msra.mxu0 0
  %66 = vmatprep.subr.bf16.mxu0 0
  %67 = vmatpush2.bf16.msra.mxu0 0
  %68 = vmatprep.subr.bf16.mxu0 0
  %69 = vmatpush2.bf16.msra.mxu0 0
  %70 = vmatprep.subr.bf16.mxu0 0
  %71 = vmatpush2.bf16.msra.mxu0 0
  %72 = vmatprep.subr.bf16.mxu0 0
  %73 = vmatpush2.bf16.msra.mxu0 0
  %74 = vmatprep.subr.bf16.mxu0 0
  %75 = vmatpush2.bf16.msra.mxu0 0
  %76 = vmatprep.mubr.bf16.mxu0 0
  %77 = vmatmul.mubr.bf16.gmra.mxu0 %v42
  %v78 = vpop.f32.mrf.mxu0
  %v79 = vadd.f32 %v26, %v78
  %v80 = vpop.f32.mrf.mxu0
  %v81 = vpop.f32.mrf.mxu0
  %v82 = vpop.f32.mrf.mxu0
  %83 = vdwg.mxu0
  %v84 = vtanh.pop %v79
  %85 = vst.msk [vmem:[%s3] sm:$0xff] %vm40, %v84
  // Predicated region
  $region14: #{bertlm_forward.16} parent=0 // pred_check
    _
  $region15: #{bertlm_forward.16} parent=0 // pred_check_branch
    %87 = sbr.rel (0) target = $region17
  $region16: #{bertlm_forward.16} parent=0 // pred_region
    _
  $region17: #{bertlm_forward.16} parent=0 // pred_fallthru
    _
  // Predicated region
  $region18: #{bertlm_forward.16} parent=0 // pred_check
    _
  $region19: #{bertlm_forward.16} parent=0 // pred_check_branch
    %89 = sbr.rel (0) target = $region21
  $region20: #{bertlm_forward.16} parent=0 // pred_region
    _
  $region21: #{bertlm_forward.16} parent=0 // pred_fallthru
    _

</llo_original>
